<compile_context>
chip_gen: v7x
topology: tpu7x:2x2x1
jax: 0.10.0
libtpu: 0.0.40
codegen_flags: <defaults>
</compile_context>

<pallas_src>
import jax
import jax.numpy as jnp
from jax.experimental import pallas as pl
from jax.experimental.pallas import tpu as pltpu

_IMG_SIZE = 32
_C = 3
_D = _C * _IMG_SIZE * _IMG_SIZE          # 3072  (multiple of 128 -> lane friendly)
_HIDDEN = 128


def _num_tensorcores_per_chip():
    """Best-effort TC-per-chip query; defaults to 1 (v5e/v6e)."""
    try:
        return max(1, int(getattr(jax.devices()[0], "num_cores", 1)))
    except Exception:
        return 1


def _velocity_kernel(x_ref, t_ref, w1_ref, wt_ref, b1bt_ref, w2_ref, b2_ref, o_ref):
    """Per output tile j (one tile per TensorCore):
       v[:, j*TN:(j+1)*TN] of v = relu(x @ W1 + t*wt + (b1+bt)) @ W2 + b2."""
    t = t_ref[0, 0]                                          # f32 scalar from SMEM
    x_bf = x_ref[...].astype(jnp.bfloat16)                   # (B, D) cast for MXU
    # With <= 1 grid step per core this runs exactly once per core (no scratch needed,
    # so it is safe under megacore "parallel" sharding).
    h = jnp.dot(x_bf, w1_ref[...], preferred_element_type=jnp.float32)   # (B, H) f32
    h = jnp.maximum(h + t * wt_ref[...] + b1bt_ref[...], 0.0)            # f32 VPU work
    v = jnp.dot(h.astype(jnp.bfloat16), w2_ref[...],
                preferred_element_type=jnp.float32)                      # (B, TN) f32
    o_ref[...] = (v + b2_ref[...]).astype(o_ref.dtype)


def velocity_model(x_flat, t_scalar, params):
    """Pallas call for the synthetic inner model.

    The whole working set (~1.6 MB bf16 weights + (B,D) state/output) fits comfortably
    in VMEM, so the grid has exactly one step per TensorCore: grid=(1,) on single-TC
    chips (all index_maps constant, nothing streamed), grid=(num_TC,) with a "parallel"
    axis on multi-TC chips so each core takes half of W2 / the output.
    """
    B, D = x_flat.shape
    w1, wt, b1bt, w2, b2 = params
    H = w1.shape[1]

    n_tiles = _num_tensorcores_per_chip()
    if D % (n_tiles * 128) != 0:          # keep lane-aligned tiles; fall back to 1 step
        n_tiles = 1
    tn = D // n_tiles                     # 3072 (1 TC) or 1536 (2 TCs)

    grid_spec = pltpu.PrefetchScalarGridSpec(
        num_scalar_prefetch=0,
        grid=(n_tiles,),
        in_specs=[
            pl.BlockSpec((B, D), lambda j: (0, 0)),                      # x (resident)
            pl.BlockSpec(memory_space=pltpu.MemorySpace.SMEM),           # t scalar
            pl.BlockSpec((D, H), lambda j: (0, 0)),                      # W1 (resident, bf16)
            pl.BlockSpec((1, H), lambda j: (0, 0)),                      # wt (f32)
            pl.BlockSpec((1, H), lambda j: (0, 0)),                      # b1 + bt (f32)
            pl.BlockSpec((H, tn), lambda j: (0, j)),                     # W2 half/whole (bf16)
            pl.BlockSpec((1, tn), lambda j: (0, j)),                     # b2 half/whole (f32)
        ],
        out_specs=pl.BlockSpec((B, tn), lambda j: (0, j)),
    )

    # Advisory cost hint so XLA can overlap this micro-kernel with neighbouring
    # solver arithmetic: 2 matmuls of (B,D)x(D,H) and (B,H)x(H,D).
    bytes_accessed = (2 * B * D * 4              # x in + v out (f32)
                      + 2 * D * H * 2            # W1 + W2 (bf16)
                      + (3 * H + D) * 4)         # wt, b1bt, t-ish scalars, b2 (f32)
    cost = pl.CostEstimate(flops=4 * B * D * H, transcendentals=0,
                           bytes_accessed=bytes_accessed)

    return pl.pallas_call(
        _velocity_kernel,
        out_shape=jax.ShapeDtypeStruct((B, D), x_flat.dtype),
        grid_spec=grid_spec,
        compiler_params=pltpu.CompilerParams(
            dimension_semantics=("parallel",)),
        cost_estimate=cost,
    )(x_flat, t_scalar, w1, wt, b1bt, w2, b2)


def ode_wrapper_forward(params, t, x):
    """Exact semantics of ODEWrapper.forward(t, x)."""
    B = x.shape[0]
    x_img = x.reshape(B, _C, _IMG_SIZE, _IMG_SIZE)       # == torch .view(B, 3, 32, 32)
    t_scalar = jnp.full((1, 1), t, dtype=jnp.float32)    # scalar time, goes to SMEM
    x_flat = x_img.reshape(B, _D)                        # model flattens NCHW image
    v = velocity_model(x_flat, t_scalar, params)         # (B, D)
    return v.reshape(x.shape)                            # == v.view(x.shape)


def _init_params(key):
    k1, k2, k3, k4, k5 = jax.random.split(key, 5)
    w1 = (jax.random.normal(k1, (_D, _HIDDEN), jnp.float32)
          * (1.0 / jnp.sqrt(_D))).astype(jnp.bfloat16)
    wt = jax.random.normal(k2, (1, _HIDDEN), jnp.float32)
    b1 = 0.1 * jax.random.normal(k3, (1, _HIDDEN), jnp.float32)
    bt = 0.1 * jax.random.normal(k4, (1, _HIDDEN), jnp.float32)
    b1bt = b1 + bt                                       # folded constant bias
    w2 = (jax.random.normal(k5, (_HIDDEN, _D), jnp.float32)
          * (1.0 / jnp.sqrt(_HIDDEN))).astype(jnp.bfloat16)
    b2 = jnp.zeros((1, _D), jnp.float32)
    return (w1, wt, b1bt, w2, b2)


def _reference_forward(params, t, x):
    """Plain-JAX reference (same bf16 operands, f32 accumulation) for correctness."""
    w1, wt, b1bt, w2, b2 = params
    B = x.shape[0]
    x_flat = x.reshape(B, _D).astype(jnp.bfloat16)
    h = jnp.dot(x_flat, w1, preferred_element_type=jnp.float32)
    h = jnp.maximum(h + jnp.float32(t) * wt + b1bt, 0.0)
    v = jnp.dot(h.astype(jnp.bfloat16), w2, preferred_element_type=jnp.float32) + b2
    return v.reshape(x.shape)


if __name__ == "__main__":
    key = jax.random.PRNGKey(0)
    k_param, k_x = jax.random.split(key)
    params = _init_params(k_param)

    B = 8   # fills the 8 f32 sublanes; kernel is DMA/overhead bound so this is ~free
    # ODE state as the solver would hold it: flat (B, 3*32*32)
    x = jax.random.normal(k_x, (B, _D), jnp.float32)
    t = 0.5

    v = jax.jit(ode_wrapper_forward)(params, t, x)
    v = jax.block_until_ready(v)

    v_ref = _reference_forward(params, t, x)
    assert v.shape == x.shape
    assert jnp.allclose(v, v_ref, atol=2e-2, rtol=2e-2), float(jnp.max(jnp.abs(v - v_ref)))

    print("KERNEL_OK")
</pallas_src>

<mosaic_0001>
module attributes {stable_mosaic.version = 11 : i64} {
  func.func @_velocity_kernel(%arg0: i32, %arg1: memref<8x3072xf32, #tpu.memory_space<vmem>>, %arg2: memref<1x1xf32, #tpu.memory_space<smem>>, %arg3: memref<3072x128xbf16, #tpu.memory_space<vmem>>, %arg4: memref<1x128xf32, #tpu.memory_space<vmem>>, %arg5: memref<1x128xf32, #tpu.memory_space<vmem>>, %arg6: memref<128x3072xbf16, #tpu.memory_space<vmem>>, %arg7: memref<1x3072xf32, #tpu.memory_space<vmem>>, %arg8: memref<8x3072xf32, #tpu.memory_space<vmem>>) attributes {dimension_semantics = [#tpu.dimension_semantics<parallel>], iteration_bounds = array<i64: 1>, scalar_prefetch = 0 : i64, scratch_operands = 0 : i64, tpu.core_type = #tpu.core_type<tc>, window_params = [{pipeline_mode = #tpu.pipeline_mode<synchronous>, transform_indices = @transform_0, window_bounds = array<i64: 8, 3072>}, {transform_indices = @transform_1, window_bounds = array<i64: 1, 1>}, {pipeline_mode = #tpu.pipeline_mode<synchronous>, transform_indices = @transform_2, window_bounds = array<i64: 3072, 128>}, {pipeline_mode = #tpu.pipeline_mode<synchronous>, transform_indices = @transform_3, window_bounds = array<i64: 1, 128>}, {pipeline_mode = #tpu.pipeline_mode<synchronous>, transform_indices = @transform_4, window_bounds = array<i64: 1, 128>}, {transform_indices = @transform_5, window_bounds = array<i64: 128, 3072>}, {transform_indices = @transform_6, window_bounds = array<i64: 1, 3072>}, {transform_indices = @transform_7, window_bounds = array<i64: 8, 3072>}]} {
    %c0 = arith.constant 0 : index
    %c0_0 = arith.constant 0 : index
    %0 = memref.load %arg2[%c0, %c0_0] : memref<1x1xf32, #tpu.memory_space<smem>>
    %c0_1 = arith.constant 0 : index
    %c0_2 = arith.constant 0 : index
    %1 = vector.load %arg1[%c0_1, %c0_2] : memref<8x3072xf32, #tpu.memory_space<vmem>>, vector<8x3072xf32>
    %2 = arith.truncf %1 : vector<8x3072xf32> to vector<8x3072xbf16>
    %c0_3 = arith.constant 0 : index
    %c0_4 = arith.constant 0 : index
    %3 = vector.load %arg3[%c0_3, %c0_4] : memref<3072x128xbf16, #tpu.memory_space<vmem>>, vector<3072x128xbf16>
    %cst = arith.constant dense<0.000000e+00> : vector<8x128xf32>
    %4 = tpu.matmul %2, %3, %cst {dimension_numbers = #tpu.dot_dimension_numbers<[1], [0], [0], [1], [0, 0, 1, 1], [], []>} : vector<8x3072xbf16>, vector<3072x128xbf16>, vector<8x128xf32> -> vector<8x128xf32>
    %c0_5 = arith.constant 0 : index
    %c0_6 = arith.constant 0 : index
    %5 = vector.load %arg4[%c0_5, %c0_6] : memref<1x128xf32, #tpu.memory_space<vmem>>, vector<1x128xf32>
    %6 = vector.broadcast %0 : f32 to vector<1x128xf32>
    %7 = arith.mulf %6, %5 : vector<1x128xf32>
    %8 = vector.broadcast %7 : vector<1x128xf32> to vector<8x128xf32>
    %9 = arith.addf %4, %8 : vector<8x128xf32>
    %c0_7 = arith.constant 0 : index
    %c0_8 = arith.constant 0 : index
    %10 = vector.load %arg5[%c0_7, %c0_8] : memref<1x128xf32, #tpu.memory_space<vmem>>, vector<1x128xf32>
    %11 = vector.broadcast %10 : vector<1x128xf32> to vector<8x128xf32>
    %12 = arith.addf %9, %11 : vector<8x128xf32>
    %cst_9 = arith.constant 0.000000e+00 : f32
    %13 = vector.broadcast %cst_9 : f32 to vector<8x128xf32>
    %14 = arith.maximumf %12, %13 : vector<8x128xf32>
    %15 = arith.truncf %14 : vector<8x128xf32> to vector<8x128xbf16>
    %c0_10 = arith.constant 0 : index
    %c0_11 = arith.constant 0 : index
    %16 = vector.load %arg6[%c0_10, %c0_11] : memref<128x3072xbf16, #tpu.memory_space<vmem>>, vector<128x3072xbf16>
    %cst_12 = arith.constant dense<0.000000e+00> : vector<8x3072xf32>
    %17 = tpu.matmul %15, %16, %cst_12 {dimension_numbers = #tpu.dot_dimension_numbers<[1], [0], [0], [1], [0, 0, 1, 1], [], []>} : vector<8x128xbf16>, vector<128x3072xbf16>, vector<8x3072xf32> -> vector<8x3072xf32>
    %c0_13 = arith.constant 0 : index
    %c0_14 = arith.constant 0 : index
    %18 = vector.load %arg7[%c0_13, %c0_14] : memref<1x3072xf32, #tpu.memory_space<vmem>>, vector<1x3072xf32>
    %19 = vector.broadcast %18 : vector<1x3072xf32> to vector<8x3072xf32>
    %20 = arith.addf %17, %19 : vector<8x3072xf32>
    %c0_15 = arith.constant 0 : index
    %c0_16 = arith.constant 0 : index
    %21 = vector.load %arg8[%c0_15, %c0_16] : memref<8x3072xf32, #tpu.memory_space<vmem>>, vector<8x3072xf32>
    tpu.vector_store %arg8[%c0_15, %c0_16], %20 {strides = array<i32>} : memref<8x3072xf32, #tpu.memory_space<vmem>>, vector<8x3072xf32>,
    return
  }
  func.func @transform_0(%arg0: i32) -> (i32, i32) {
    %c0_i32 = arith.constant 0 : i32
    %c0_i32_0 = arith.constant 0 : i32
    %c0_i32_1 = arith.constant 0 : i32
    return %c0_i32, %c0_i32_0 : i32, i32
  }
  func.func @transform_1(%arg0: i32) -> (i32, i32) {
    %c0_i32 = arith.constant 0 : i32
    %c0_i32_0 = arith.constant 0 : i32
    %c0_i32_1 = arith.constant 0 : i32
    return %c0_i32, %c0_i32_0 : i32, i32
  }
  func.func @transform_2(%arg0: i32) -> (i32, i32) {
    %c0_i32 = arith.constant 0 : i32
    %c0_i32_0 = arith.constant 0 : i32
    %c0_i32_1 = arith.constant 0 : i32
    return %c0_i32, %c0_i32_0 : i32, i32
  }
  func.func @transform_3(%arg0: i32) -> (i32, i32) {
    %c0_i32 = arith.constant 0 : i32
    %c0_i32_0 = arith.constant 0 : i32
    %c0_i32_1 = arith.constant 0 : i32
    return %c0_i32, %c0_i32_0 : i32, i32
  }
  func.func @transform_4(%arg0: i32) -> (i32, i32) {
    %c0_i32 = arith.constant 0 : i32
    %c0_i32_0 = arith.constant 0 : i32
    %c0_i32_1 = arith.constant 0 : i32
    return %c0_i32, %c0_i32_0 : i32, i32
  }
  func.func @transform_5(%arg0: i32) -> (i32, i32) {
    %c0_i32 = arith.constant 0 : i32
    %c0_i32_0 = arith.constant 0 : i32
    return %c0_i32, %arg0 : i32, i32
  }
  func.func @transform_6(%arg0: i32) -> (i32, i32) {
    %c0_i32 = arith.constant 0 : i32
    %c0_i32_0 = arith.constant 0 : i32
    return %c0_i32, %arg0 : i32, i32
  }
  func.func @transform_7(%arg0: i32) -> (i32, i32) {
    %c0_i32 = arith.constant 0 : i32
    %c0_i32_0 = arith.constant 0 : i32
    return %c0_i32, %arg0 : i32, i32
  }
}

</mosaic_0001>

<llo_original>
// kernel: ode_wrapper_forward.1
$region0: #{ode_wrapper_forward.1}
  #allocation0 [shape = 'u32[]', space=smem, size = 0x4, offset = 0x4, fixed_abs, tag = 'smem constant byte address 0x4 - core index']
  #allocation1 [shape = 'u32[144,128]{1,0:T(1,128)}', space=vmem, size = 0x12000, scoped, tag = 'internal scratch']
  #allocation2 [shape = 'f32[1,1]{1,0:T(1,128)S(6)}', space=smem, size = 0x200, scoped, tag = 'scoped memory for ode_wrapper_forward.1']
  %s0 = inlined_call_operand.hbm [shape: f32[8,3072], index: 0, kind: input, shape index: {}]
  %s1 = inlined_call_operand.<no memory space> [shape: f32[1,1], index: 1, kind: input, shape index: {}]
  %s2 = inlined_call_operand.hbm [shape: bf16[3072,128], index: 2, kind: input, shape index: {}]
  %s3 = inlined_call_operand.vmem [shape: f32[1,128], index: 3, kind: input, shape index: {}]
  %s4 = inlined_call_operand.vmem [shape: f32[1,128], index: 4, kind: input, shape index: {}]
  %s5 = inlined_call_operand.hbm [shape: bf16[128,3072], index: 5, kind: input, shape index: {}]
  %s6 = inlined_call_operand.hbm [shape: f32[1,3072], index: 6, kind: input, shape index: {}]
  %s7 = inlined_call_operand.hbm [shape: f32[8,3072], index: 7, kind: output, shape index: {}]
  %s8 = sld [smem:[#allocation0]]
  $region54: #{ode_wrapper_forward.1} parent=0
    _
  %s10 = ssub.s32 1, %s8
  %s11 = scalar_select 0, %s10, %s8
  %12 = sst [smem:[#allocation2]] %s1
  $region1: #{ode_wrapper_forward.1} parent=0
    #allocation3 [shape = 'u8[98304]{0}', space=vmem, size = 0x18000, scoped, tag = 'input window, operand 0, single buffered']
    #allocation4 [shape = 's32[1]{0}', space=sflag, size = 0x4, scoped, tag = 'scoped memory for ode_wrapper_forward.1']
    #allocation5 [shape = 's32[1]{0}', space=sflag, size = 0x4, scoped, tag = 'scoped memory for ode_wrapper_forward.1']
    #allocation6 [shape = 'u8[786432]{0}', space=vmem, size = 0xc0000, scoped, tag = 'input window, operand 2, single buffered']
    #allocation7 [shape = 's32[1]{0}', space=sflag, size = 0x4, scoped, tag = 'scoped memory for ode_wrapper_forward.1']
    #allocation8 [shape = 'u8[786432]{0}', space=vmem, size = 0xc0000, scoped, tag = 'input window, operand 5, single buffered']
    #allocation9 [shape = 'u8[12288]{0}', space=vmem, size = 0x3000, scoped, tag = 'input window, operand 6, single buffered']
    #allocation10 [shape = 's32[1]{0}', space=sflag, size = 0x4, scoped, tag = 'scoped memory for ode_wrapper_forward.1']
    #allocation11 [shape = 'u8[98304]{0}', space=vmem, size = 0x18000, scoped, tag = 'output window, operand 0, single buffered']
    %13 = vsyncpa [#allocation4], 0
    %14 = vsyncpa [#allocation7], 0
    %15 = vsyncpa [#allocation10], 0
    %16 = vsyncpa [#allocation5], 0
    // Predicated region
    $region2: #{ode_wrapper_forward.1} parent=1 // pred_check
      _
    $region3: #{ode_wrapper_forward.1} parent=1 // pred_check_branch
      %18 = sbr.rel (0) target = $region5
    $region4: #{ode_wrapper_forward.1} parent=1 // pred_region
      %s20 = ssub.s32 3072, 3072
      %21 = vsyncadd [#allocation4], %s20
      %s23 = sshll.u32 [#allocation3], 4
      %s24 = int_to_ptr.vmem [resolvable:$true] %s23
      %26 = dma.hbm_to_vmem [thread:$0]  %s0, 3072, %s24, [#allocation4]
    $region5: #{ode_wrapper_forward.1} parent=1 // pred_fallthru
      _
    // Predicated region
    $region6: #{ode_wrapper_forward.1} parent=1 // pred_check
      _
    $region7: #{ode_wrapper_forward.1} parent=1 // pred_check_branch
      %28 = sbr.rel (0) target = $region9
    $region8: #{ode_wrapper_forward.1} parent=1 // pred_region
      _
    $region9: #{ode_wrapper_forward.1} parent=1 // pred_fallthru
      _
    // Predicated region
    $region10: #{ode_wrapper_forward.1} parent=1 // pred_check
      _
    $region11: #{ode_wrapper_forward.1} parent=1 // pred_check_branch
      %30 = sbr.rel (0) target = $region13
    $region12: #{ode_wrapper_forward.1} parent=1 // pred_region
      %s32 = ssub.s32 24576, 24576
      %33 = vsyncadd [#allocation7], %s32
      %s34 = sshll.u32 [#allocation6], 4
      %s35 = int_to_ptr.vmem [resolvable:$true] %s34
      %40 = dma.hbm_to_vmem [thread:$0]  %s2, 24576, %s35, [#allocation7], 64, 64, 4
    $region13: #{ode_wrapper_forward.1} parent=1 // pred_fallthru
      _
    // Predicated region
    $region14: #{ode_wrapper_forward.1} parent=1 // pred_check
      _
    $region15: #{ode_wrapper_forward.1} parent=1 // pred_check_branch
      %42 = sbr.rel (0) target = $region17
    $region16: #{ode_wrapper_forward.1} parent=1 // pred_region
      _
    $region17: #{ode_wrapper_forward.1} parent=1 // pred_fallthru
      _
    // Predicated region
    $region18: #{ode_wrapper_forward.1} parent=1 // pred_check
      _
    $region19: #{ode_wrapper_forward.1} parent=1 // pred_check_branch
      %44 = sbr.rel (0) target = $region21
    $region20: #{ode_wrapper_forward.1} parent=1 // pred_region
      _
    $region21: #{ode_wrapper_forward.1} parent=1 // pred_fallthru
      _
    // Predicated region
    $region22: #{ode_wrapper_forward.1} parent=1 // pred_check
      _
    $region23: #{ode_wrapper_forward.1} parent=1 // pred_check_branch
      %46 = sbr.rel (0) target = $region25
    $region24: #{ode_wrapper_forward.1} parent=1 // pred_region
      %s48 = ssub.s32 24576, 24576
      %49 = vsyncadd [#allocation7], %s48
      %s50 = sshll.u32 [#allocation8], 4
      %s51 = int_to_ptr.vmem [resolvable:$true] %s50
      %56 = dma.hbm_to_vmem [thread:$0]  %s5, 24576, %s51, [#allocation7], 1536, 1536, 96
    $region25: #{ode_wrapper_forward.1} parent=1 // pred_fallthru
      _
    // Predicated region
    $region26: #{ode_wrapper_forward.1} parent=1 // pred_check
      _
    $region27: #{ode_wrapper_forward.1} parent=1 // pred_check_branch
      %58 = sbr.rel (0) target = $region29
    $region28: #{ode_wrapper_forward.1} parent=1 // pred_region
      %s60 = ssub.s32 384, 384
      %61 = vsyncadd [#allocation10], %s60
      %s63 = sshll.u32 [#allocation9], 4
      %s64 = int_to_ptr.vmem [resolvable:$true] %s63
      %66 = dma.hbm_to_vmem [thread:$0]  %s6, 384, %s64, [#allocation10]
    $region29: #{ode_wrapper_forward.1} parent=1 // pred_fallthru
      _
    // Predicated region
    $region30: #{ode_wrapper_forward.1} parent=1 // pred_check
      _
    $region31: #{ode_wrapper_forward.1} parent=1 // pred_check_branch
      %68 = sbr.rel (0) target = $region33
    $region32: #{ode_wrapper_forward.1} parent=1 // pred_region
      %69 = dma.done [#allocation4], 3072
    $region33: #{ode_wrapper_forward.1} parent=1 // pred_fallthru
      _
    // Predicated region
    $region34: #{ode_wrapper_forward.1} parent=1 // pred_check
      _
    $region35: #{ode_wrapper_forward.1} parent=1 // pred_check_branch
      %71 = sbr.rel (0) target = $region37
    $region36: #{ode_wrapper_forward.1} parent=1 // pred_region
      %72 = dma.done [#allocation7], 24576
    $region37: #{ode_wrapper_forward.1} parent=1 // pred_fallthru
      _
    // Predicated region
    $region38: #{ode_wrapper_forward.1} parent=1 // pred_check
      _
    $region39: #{ode_wrapper_forward.1} parent=1 // pred_check_branch
      %74 = sbr.rel (0) target = $region41
    $region40: #{ode_wrapper_forward.1} parent=1 // pred_region
      %75 = dma.done [#allocation7], 24576
    $region41: #{ode_wrapper_forward.1} parent=1 // pred_fallthru
      _
    // Predicated region
    $region42: #{ode_wrapper_forward.1} parent=1 // pred_check
      _
    $region43: #{ode_wrapper_forward.1} parent=1 // pred_check_branch
      %77 = sbr.rel (0) target = $region45
    $region44: #{ode_wrapper_forward.1} parent=1 // pred_region
      %78 = dma.done [#allocation10], 384
    $region45: #{ode_wrapper_forward.1} parent=1 // pred_fallthru
      _
    %s80 = sld [smem:[#allocation2]]
    %v81 = vld [vmem:[#allocation3] sm:$0xff]
    %v82 = vld [vmem:[#allocation3 + $0x8] sm:$0xff]
    %v83 = vld [vmem:[#allocation3 + $0x10] sm:$0xff]
    %v84 = vld [vmem:[#allocation3 + $0x18] sm:$0xff]
    %v85 = vld [vmem:[#allocation3 + $0x20] sm:$0xff]
    %v86 = vld [vmem:[#allocation3 + $0x28] sm:$0xff]
    %v87 = vld [vmem:[#allocation3 + $0x30] sm:$0xff]
    %v88 = vld [vmem:[#allocation3 + $0x38] sm:$0xff]
    %v89 = vld [vmem:[#allocation3 + $0x40] sm:$0xff]
    %v90 = vld [vmem:[#allocation3 + $0x48] sm:$0xff]
    %v91 = vld [vmem:[#allocation3 + $0x50] sm:$0xff]
    %v92 = vld [vmem:[#allocation3 + $0x58] sm:$0xff]
    %v93 = vld [vmem:[#allocation3 + $0x60] sm:$0xff]
    %v94 = vld [vmem:[#allocation3 + $0x68] sm:$0xff]
    %v95 = vld [vmem:[#allocation3 + $0x70] sm:$0xff]
    %v96 = vld [vmem:[#allocation3 + $0x78] sm:$0xff]
    %v97 = vld [vmem:[#allocation3 + $0x80] sm:$0xff]
    %v98 = vld [vmem:[#allocation3 + $0x88] sm:$0xff]
    %v99 = vld [vmem:[#allocation3 + $0x90] sm:$0xff]
    %v100 = vld [vmem:[#allocation3 + $0x98] sm:$0xff]
    %v101 = vld [vmem:[#allocation3 + $0xa0] sm:$0xff]
    %v102 = vld [vmem:[#allocation3 + $0xa8] sm:$0xff]
    %v103 = vld [vmem:[#allocation3 + $0xb0] sm:$0xff]
    %v104 = vld [vmem:[#allocation3 + $0xb8] sm:$0xff]
    %v105 = vpack.c.bf16 %v81, %v81
    %v106 = vpack.c.bf16 %v82, %v82
    %v107 = vpack.c.bf16 %v83, %v83
    %v108 = vpack.c.bf16 %v84, %v84
    %v109 = vpack.c.bf16 %v85, %v85
    %v110 = vpack.c.bf16 %v86, %v86
    %v111 = vpack.c.bf16 %v87, %v87
    %v112 = vpack.c.bf16 %v88, %v88
    %v113 = vpack.c.bf16 %v89, %v89
    %v114 = vpack.c.bf16 %v90, %v90
    %v115 = vpack.c.bf16 %v91, %v91
    %v116 = vpack.c.bf16 %v92, %v92
    %v117 = vpack.c.bf16 %v93, %v93
    %v118 = vpack.c.bf16 %v94, %v94
    %v119 = vpack.c.bf16 %v95, %v95
    %v120 = vpack.c.bf16 %v96, %v96
    %v121 = vpack.c.bf16 %v97, %v97
    %v122 = vpack.c.bf16 %v98, %v98
    %v123 = vpack.c.bf16 %v99, %v99
    %v124 = vpack.c.bf16 %v100, %v100
    %v125 = vpack.c.bf16 %v101, %v101
    %v126 = vpack.c.bf16 %v102, %v102
    %v127 = vpack.c.bf16 %v103, %v103
    %v128 = vpack.c.bf16 %v104, %v104
    %v129 = vld [vmem:[#allocation6] sm:$0xf]
    %v130 = vld [vmem:[#allocation6 + $0x4] sm:$0xf]
    %v131 = vld [vmem:[#allocation6 + $0x8] sm:$0xf]
    %v132 = vld [vmem:[#allocation6 + $0xc] sm:$0xf]
    %v133 = vld [vmem:[#allocation6 + $0x10] sm:$0xf]
    %v134 = vld [vmem:[#allocation6 + $0x14] sm:$0xf]
    %v135 = vld [vmem:[#allocation6 + $0x18] sm:$0xf]
    %v136 = vld [vmem:[#allocation6 + $0x1c] sm:$0xf]
    %v137 = vld [vmem:[#allocation6 + $0x20] sm:$0xf]
    %v138 = vld [vmem:[#allocation6 + $0x24] sm:$0xf]
    %v139 = vld [vmem:[#allocation6 + $0x28] sm:$0xf]
    %v140 = vld [vmem:[#allocation6 + $0x2c] sm:$0xf]
    %v141 = vld [vmem:[#allocation6 + $0x30] sm:$0xf]
    %v142 = vld [vmem:[#allocation6 + $0x34] sm:$0xf]
    %v143 = vld [vmem:[#allocation6 + $0x38] sm:$0xf]
    %v144 = vld [vmem:[#allocation6 + $0x3c] sm:$0xf]
    %v145 = vld [vmem:[#allocation6 + $0x40] sm:$0xf]
    %v146 = vld [vmem:[#allocation6 + $0x44] sm:$0xf]
    %v147 = vld [vmem:[#allocation6 + $0x48] sm:$0xf]
    %v148 = vld [vmem:[#allocation6 + $0x4c] sm:$0xf]
    %v149 = vld [vmem:[#allocation6 + $0x50] sm:$0xf]
    %v150 = vld [vmem:[#allocation6 + $0x54] sm:$0xf]
    %v151 = vld [vmem:[#allocation6 + $0x58] sm:$0xf]
    %v152 = vld [vmem:[#allocation6 + $0x5c] sm:$0xf]
    %v153 = vld [vmem:[#allocation6 + $0x60] sm:$0xf]
    %v154 = vld [vmem:[#allocation6 + $0x64] sm:$0xf]
    %v155 = vld [vmem:[#allocation6 + $0x68] sm:$0xf]
    %v156 = vld [vmem:[#allocation6 + $0x6c] sm:$0xf]
    %v157 = vld [vmem:[#allocation6 + $0x70] sm:$0xf]
    %v158 = vld [vmem:[#allocation6 + $0x74] sm:$0xf]
    %v159 = vld [vmem:[#allocation6 + $0x78] sm:$0xf]
    %v160 = vld [vmem:[#allocation6 + $0x7c] sm:$0xf]
    %v161 = vld [vmem:[#allocation6 + $0x80] sm:$0xf]
    %v162 = vld [vmem:[#allocation6 + $0x84] sm:$0xf]
    %v163 = vld [vmem:[#allocation6 + $0x88] sm:$0xf]
    %v164 = vld [vmem:[#allocation6 + $0x8c] sm:$0xf]
    %v165 = vld [vmem:[#allocation6 + $0x90] sm:$0xf]
    %v166 = vld [vmem:[#allocation6 + $0x94] sm:$0xf]
    %v167 = vld [vmem:[#allocation6 + $0x98] sm:$0xf]
    %v168 = vld [vmem:[#allocation6 + $0x9c] sm:$0xf]
    %v169 = vld [vmem:[#allocation6 + $0xa0] sm:$0xf]
    %v170 = vld [vmem:[#allocation6 + $0xa4] sm:$0xf]
    %v171 = vld [vmem:[#allocation6 + $0xa8] sm:$0xf]
    %v172 = vld [vmem:[#allocation6 + $0xac] sm:$0xf]
    %v173 = vld [vmem:[#allocation6 + $0xb0] sm:$0xf]
    %v174 = vld [vmem:[#allocation6 + $0xb4] sm:$0xf]
    %v175 = vld [vmem:[#allocation6 + $0xb8] sm:$0xf]
    %v176 = vld [vmem:[#allocation6 + $0xbc] sm:$0xf]
    %v177 = vld [vmem:[#allocation6 + $0xc0] sm:$0xf]
    %v178 = vld [vmem:[#allocation6 + $0xc4] sm:$0xf]
    %v179 = vld [vmem:[#allocation6 + $0xc8] sm:$0xf]
    %v180 = vld [vmem:[#allocation6 + $0xcc] sm:$0xf]
    %v181 = vld [vmem:[#allocation6 + $0xd0] sm:$0xf]
    %v182 = vld [vmem:[#allocation6 + $0xd4] sm:$0xf]
    %v183 = vld [vmem:[#allocation6 + $0xd8] sm:$0xf]
    %v184 = vld [vmem:[#allocation6 + $0xdc] sm:$0xf]
    %v185 = vld [vmem:[#allocation6 + $0xe0] sm:$0xf]
    %v186 = vld [vmem:[#allocation6 + $0xe4] sm:$0xf]
    %v187 = vld [vmem:[#allocation6 + $0xe8] sm:$0xf]
    %v188 = vld [vmem:[#allocation6 + $0xec] sm:$0xf]
    %v189 = vld [vmem:[#allocation6 + $0xf0] sm:$0xf]
    %v190 = vld [vmem:[#allocation6 + $0xf4] sm:$0xf]
    %v191 = vld [vmem:[#allocation6 + $0xf8] sm:$0xf]
    %v192 = vld [vmem:[#allocation6 + $0xfc] sm:$0xf]
    %v193 = vld [vmem:[#allocation6 + $0x100] sm:$0xf]
    %v194 = vld [vmem:[#allocation6 + $0x104] sm:$0xf]
    %v195 = vld [vmem:[#allocation6 + $0x108] sm:$0xf]
    %v196 = vld [vmem:[#allocation6 + $0x10c] sm:$0xf]
    %v197 = vld [vmem:[#allocation6 + $0x110] sm:$0xf]
    %v198 = vld [vmem:[#allocation6 + $0x114] sm:$0xf]
    %v199 = vld [vmem:[#allocation6 + $0x118] sm:$0xf]
    %v200 = vld [vmem:[#allocation6 + $0x11c] sm:$0xf]
    %v201 = vld [vmem:[#allocation6 + $0x120] sm:$0xf]
    %v202 = vld [vmem:[#allocation6 + $0x124] sm:$0xf]
    %v203 = vld [vmem:[#allocation6 + $0x128] sm:$0xf]
    %v204 = vld [vmem:[#allocation6 + $0x12c] sm:$0xf]
    %v205 = vld [vmem:[#allocation6 + $0x130] sm:$0xf]
    %v206 = vld [vmem:[#allocation6 + $0x134] sm:$0xf]
    %v207 = vld [vmem:[#allocation6 + $0x138] sm:$0xf]
    %v208 = vld [vmem:[#allocation6 + $0x13c] sm:$0xf]
    %v209 = vld [vmem:[#allocation6 + $0x140] sm:$0xf]
    %v210 = vld [vmem:[#allocation6 + $0x144] sm:$0xf]
    %v211 = vld [vmem:[#allocation6 + $0x148] sm:$0xf]
    %v212 = vld [vmem:[#allocation6 + $0x14c] sm:$0xf]
    %v213 = vld [vmem:[#allocation6 + $0x150] sm:$0xf]
    %v214 = vld [vmem:[#allocation6 + $0x154] sm:$0xf]
    %v215 = vld [vmem:[#allocation6 + $0x158] sm:$0xf]
    %v216 = vld [vmem:[#allocation6 + $0x15c] sm:$0xf]
    %v217 = vld [vmem:[#allocation6 + $0x160] sm:$0xf]
    %v218 = vld [vmem:[#allocation6 + $0x164] sm:$0xf]
    %v219 = vld [vmem:[#allocation6 + $0x168] sm:$0xf]
    %v220 = vld [vmem:[#allocation6 + $0x16c] sm:$0xf]
    %v221 = vld [vmem:[#allocation6 + $0x170] sm:$0xf]
    %v222 = vld [vmem:[#allocation6 + $0x174] sm:$0xf]
    %v223 = vld [vmem:[#allocation6 + $0x178] sm:$0xf]
    %v224 = vld [vmem:[#allocation6 + $0x17c] sm:$0xf]
    %v225 = vld [vmem:[#allocation6 + $0x180] sm:$0xf]
    %v226 = vld [vmem:[#allocation6 + $0x184] sm:$0xf]
    %v227 = vld [vmem:[#allocation6 + $0x188] sm:$0xf]
    %v228 = vld [vmem:[#allocation6 + $0x18c] sm:$0xf]
    %v229 = vld [vmem:[#allocation6 + $0x190] sm:$0xf]
    %v230 = vld [vmem:[#allocation6 + $0x194] sm:$0xf]
    %v231 = vld [vmem:[#allocation6 + $0x198] sm:$0xf]
    %v232 = vld [vmem:[#allocation6 + $0x19c] sm:$0xf]
    %v233 = vld [vmem:[#allocation6 + $0x1a0] sm:$0xf]
    %v234 = vld [vmem:[#allocation6 + $0x1a4] sm:$0xf]
    %v235 = vld [vmem:[#allocation6 + $0x1a8] sm:$0xf]
    %v236 = vld [vmem:[#allocation6 + $0x1ac] sm:$0xf]
    %v237 = vld [vmem:[#allocation6 + $0x1b0] sm:$0xf]
    %v238 = vld [vmem:[#allocation6 + $0x1b4] sm:$0xf]
    %v239 = vld [vmem:[#allocation6 + $0x1b8] sm:$0xf]
    %v240 = vld [vmem:[#allocation6 + $0x1bc] sm:$0xf]
    %v241 = vld [vmem:[#allocation6 + $0x1c0] sm:$0xf]
    %v242 = vld [vmem:[#allocation6 + $0x1c4] sm:$0xf]
    %v243 = vld [vmem:[#allocation6 + $0x1c8] sm:$0xf]
    %v244 = vld [vmem:[#allocation6 + $0x1cc] sm:$0xf]
    %v245 = vld [vmem:[#allocation6 + $0x1d0] sm:$0xf]
    %v246 = vld [vmem:[#allocation6 + $0x1d4] sm:$0xf]
    %v247 = vld [vmem:[#allocation6 + $0x1d8] sm:$0xf]
    %v248 = vld [vmem:[#allocation6 + $0x1dc] sm:$0xf]
    %v249 = vld [vmem:[#allocation6 + $0x1e0] sm:$0xf]
    %v250 = vld [vmem:[#allocation6 + $0x1e4] sm:$0xf]
    %v251 = vld [vmem:[#allocation6 + $0x1e8] sm:$0xf]
    %v252 = vld [vmem:[#allocation6 + $0x1ec] sm:$0xf]
    %v253 = vld [vmem:[#allocation6 + $0x1f0] sm:$0xf]
    %v254 = vld [vmem:[#allocation6 + $0x1f4] sm:$0xf]
    %v255 = vld [vmem:[#allocation6 + $0x1f8] sm:$0xf]
    %v256 = vld [vmem:[#allocation6 + $0x1fc] sm:$0xf]
    %v257 = vld [vmem:[#allocation6 + $0x200] sm:$0xf]
    %v258 = vld [vmem:[#allocation6 + $0x204] sm:$0xf]
    %v259 = vld [vmem:[#allocation6 + $0x208] sm:$0xf]
    %v260 = vld [vmem:[#allocation6 + $0x20c] sm:$0xf]
    %v261 = vld [vmem:[#allocation6 + $0x210] sm:$0xf]
    %v262 = vld [vmem:[#allocation6 + $0x214] sm:$0xf]
    %v263 = vld [vmem:[#allocation6 + $0x218] sm:$0xf]
    %v264 = vld [vmem:[#allocation6 + $0x21c] sm:$0xf]
    %v265 = vld [vmem:[#allocation6 + $0x220] sm:$0xf]
    %v266 = vld [vmem:[#allocation6 + $0x224] sm:$0xf]
    %v267 = vld [vmem:[#allocation6 + $0x228] sm:$0xf]
    %v268 = vld [vmem:[#allocation6 + $0x22c] sm:$0xf]
    %v269 = vld [vmem:[#allocation6 + $0x230] sm:$0xf]
    %v270 = vld [vmem:[#allocation6 + $0x234] sm:$0xf]
    %v271 = vld [vmem:[#allocation6 + $0x238] sm:$0xf]
    %v272 = vld [vmem:[#allocation6 + $0x23c] sm:$0xf]
    %v273 = vld [vmem:[#allocation6 + $0x240] sm:$0xf]
    %v274 = vld [vmem:[#allocation6 + $0x244] sm:$0xf]
    %v275 = vld [vmem:[#allocation6 + $0x248] sm:$0xf]
    %v276 = vld [vmem:[#allocation6 + $0x24c] sm:$0xf]
    %v277 = vld [vmem:[#allocation6 + $0x250] sm:$0xf]
    %v278 = vld [vmem:[#allocation6 + $0x254] sm:$0xf]
    %v279 = vld [vmem:[#allocation6 + $0x258] sm:$0xf]
    %v280 = vld [vmem:[#allocation6 + $0x25c] sm:$0xf]
    %v281 = vld [vmem:[#allocation6 + $0x260] sm:$0xf]
    %v282 = vld [vmem:[#allocation6 + $0x264] sm:$0xf]
    %v283 = vld [vmem:[#allocation6 + $0x268] sm:$0xf]
    %v284 = vld [vmem:[#allocation6 + $0x26c] sm:$0xf]
    %v285 = vld [vmem:[#allocation6 + $0x270] sm:$0xf]
    %v286 = vld [vmem:[#allocation6 + $0x274] sm:$0xf]
    %v287 = vld [vmem:[#allocation6 + $0x278] sm:$0xf]
    %v288 = vld [vmem:[#allocation6 + $0x27c] sm:$0xf]
    %v289 = vld [vmem:[#allocation6 + $0x280] sm:$0xf]
    %v290 = vld [vmem:[#allocation6 + $0x284] sm:$0xf]
    %v291 = vld [vmem:[#allocation6 + $0x288] sm:$0xf]
    %v292 = vld [vmem:[#allocation6 + $0x28c] sm:$0xf]
    %v293 = vld [vmem:[#allocation6 + $0x290] sm:$0xf]
    %v294 = vld [vmem:[#allocation6 + $0x294] sm:$0xf]
    %v295 = vld [vmem:[#allocation6 + $0x298] sm:$0xf]
    %v296 = vld [vmem:[#allocation6 + $0x29c] sm:$0xf]
    %v297 = vld [vmem:[#allocation6 + $0x2a0] sm:$0xf]
    %v298 = vld [vmem:[#allocation6 + $0x2a4] sm:$0xf]
    %v299 = vld [vmem:[#allocation6 + $0x2a8] sm:$0xf]
    %v300 = vld [vmem:[#allocation6 + $0x2ac] sm:$0xf]
    %v301 = vld [vmem:[#allocation6 + $0x2b0] sm:$0xf]
    %v302 = vld [vmem:[#allocation6 + $0x2b4] sm:$0xf]
    %v303 = vld [vmem:[#allocation6 + $0x2b8] sm:$0xf]
    %v304 = vld [vmem:[#allocation6 + $0x2bc] sm:$0xf]
    %v305 = vld [vmem:[#allocation6 + $0x2c0] sm:$0xf]
    %v306 = vld [vmem:[#allocation6 + $0x2c4] sm:$0xf]
    %v307 = vld [vmem:[#allocation6 + $0x2c8] sm:$0xf]
    %v308 = vld [vmem:[#allocation6 + $0x2cc] sm:$0xf]
    %v309 = vld [vmem:[#allocation6 + $0x2d0] sm:$0xf]
    %v310 = vld [vmem:[#allocation6 + $0x2d4] sm:$0xf]
    %v311 = vld [vmem:[#allocation6 + $0x2d8] sm:$0xf]
    %v312 = vld [vmem:[#allocation6 + $0x2dc] sm:$0xf]
    %v313 = vld [vmem:[#allocation6 + $0x2e0] sm:$0xf]
    %v314 = vld [vmem:[#allocation6 + $0x2e4] sm:$0xf]
    %v315 = vld [vmem:[#allocation6 + $0x2e8] sm:$0xf]
    %v316 = vld [vmem:[#allocation6 + $0x2ec] sm:$0xf]
    %v317 = vld [vmem:[#allocation6 + $0x2f0] sm:$0xf]
    %v318 = vld [vmem:[#allocation6 + $0x2f4] sm:$0xf]
    %v319 = vld [vmem:[#allocation6 + $0x2f8] sm:$0xf]
    %v320 = vld [vmem:[#allocation6 + $0x2fc] sm:$0xf]
    %v321 = vld [vmem:[#allocation6 + $0x300] sm:$0xf]
    %v322 = vld [vmem:[#allocation6 + $0x304] sm:$0xf]
    %v323 = vld [vmem:[#allocation6 + $0x308] sm:$0xf]
    %v324 = vld [vmem:[#allocation6 + $0x30c] sm:$0xf]
    %v325 = vld [vmem:[#allocation6 + $0x310] sm:$0xf]
    %v326 = vld [vmem:[#allocation6 + $0x314] sm:$0xf]
    %v327 = vld [vmem:[#allocation6 + $0x318] sm:$0xf]
    %v328 = vld [vmem:[#allocation6 + $0x31c] sm:$0xf]
    %v329 = vld [vmem:[#allocation6 + $0x320] sm:$0xf]
    %v330 = vld [vmem:[#allocation6 + $0x324] sm:$0xf]
    %v331 = vld [vmem:[#allocation6 + $0x328] sm:$0xf]
    %v332 = vld [vmem:[#allocation6 + $0x32c] sm:$0xf]
    %v333 = vld [vmem:[#allocation6 + $0x330] sm:$0xf]
    %v334 = vld [vmem:[#allocation6 + $0x334] sm:$0xf]
    %v335 = vld [vmem:[#allocation6 + $0x338] sm:$0xf]
    %v336 = vld [vmem:[#allocation6 + $0x33c] sm:$0xf]
    %v337 = vld [vmem:[#allocation6 + $0x340] sm:$0xf]
    %v338 = vld [vmem:[#allocation6 + $0x344] sm:$0xf]
    %v339 = vld [vmem:[#allocation6 + $0x348] sm:$0xf]
    %v340 = vld [vmem:[#allocation6 + $0x34c] sm:$0xf]
    %v341 = vld [vmem:[#allocation6 + $0x350] sm:$0xf]
    %v342 = vld [vmem:[#allocation6 + $0x354] sm:$0xf]
    %v343 = vld [vmem:[#allocation6 + $0x358] sm:$0xf]
    %v344 = vld [vmem:[#allocation6 + $0x35c] sm:$0xf]
    %v345 = vld [vmem:[#allocation6 + $0x360] sm:$0xf]
    %v346 = vld [vmem:[#allocation6 + $0x364] sm:$0xf]
    %v347 = vld [vmem:[#allocation6 + $0x368] sm:$0xf]
    %v348 = vld [vmem:[#allocation6 + $0x36c] sm:$0xf]
    %v349 = vld [vmem:[#allocation6 + $0x370] sm:$0xf]
    %v350 = vld [vmem:[#allocation6 + $0x374] sm:$0xf]
    %v351 = vld [vmem:[#allocation6 + $0x378] sm:$0xf]
    %v352 = vld [vmem:[#allocation6 + $0x37c] sm:$0xf]
    %v353 = vld [vmem:[#allocation6 + $0x380] sm:$0xf]
    %v354 = vld [vmem:[#allocation6 + $0x384] sm:$0xf]
    %v355 = vld [vmem:[#allocation6 + $0x388] sm:$0xf]
    %v356 = vld [vmem:[#allocation6 + $0x38c] sm:$0xf]
    %v357 = vld [vmem:[#allocation6 + $0x390] sm:$0xf]
    %v358 = vld [vmem:[#allocation6 + $0x394] sm:$0xf]
    %v359 = vld [vmem:[#allocation6 + $0x398] sm:$0xf]
    %v360 = vld [vmem:[#allocation6 + $0x39c] sm:$0xf]
    %v361 = vld [vmem:[#allocation6 + $0x3a0] sm:$0xf]
    %v362 = vld [vmem:[#allocation6 + $0x3a4] sm:$0xf]
    %v363 = vld [vmem:[#allocation6 + $0x3a8] sm:$0xf]
    %v364 = vld [vmem:[#allocation6 + $0x3ac] sm:$0xf]
    %v365 = vld [vmem:[#allocation6 + $0x3b0] sm:$0xf]
    %v366 = vld [vmem:[#allocation6 + $0x3b4] sm:$0xf]
    %v367 = vld [vmem:[#allocation6 + $0x3b8] sm:$0xf]
    %v368 = vld [vmem:[#allocation6 + $0x3bc] sm:$0xf]
    %v369 = vld [vmem:[#allocation6 + $0x3c0] sm:$0xf]
    %v370 = vld [vmem:[#allocation6 + $0x3c4] sm:$0xf]
    %v371 = vld [vmem:[#allocation6 + $0x3c8] sm:$0xf]
    %v372 = vld [vmem:[#allocation6 + $0x3cc] sm:$0xf]
    %v373 = vld [vmem:[#allocation6 + $0x3d0] sm:$0xf]
    %v374 = vld [vmem:[#allocation6 + $0x3d4] sm:$0xf]
    %v375 = vld [vmem:[#allocation6 + $0x3d8] sm:$0xf]
    %v376 = vld [vmem:[#allocation6 + $0x3dc] sm:$0xf]
    %v377 = vld [vmem:[#allocation6 + $0x3e0] sm:$0xf]
    %v378 = vld [vmem:[#allocation6 + $0x3e4] sm:$0xf]
    %v379 = vld [vmem:[#allocation6 + $0x3e8] sm:$0xf]
    %v380 = vld [vmem:[#allocation6 + $0x3ec] sm:$0xf]
    %v381 = vld [vmem:[#allocation6 + $0x3f0] sm:$0xf]
    %v382 = vld [vmem:[#allocation6 + $0x3f4] sm:$0xf]
    %v383 = vld [vmem:[#allocation6 + $0x3f8] sm:$0xf]
    %v384 = vld [vmem:[#allocation6 + $0x3fc] sm:$0xf]
    %v385 = vld [vmem:[#allocation6 + $0x400] sm:$0xf]
    %v386 = vld [vmem:[#allocation6 + $0x404] sm:$0xf]
    %v387 = vld [vmem:[#allocation6 + $0x408] sm:$0xf]
    %v388 = vld [vmem:[#allocation6 + $0x40c] sm:$0xf]
    %v389 = vld [vmem:[#allocation6 + $0x410] sm:$0xf]
    %v390 = vld [vmem:[#allocation6 + $0x414] sm:$0xf]
    %v391 = vld [vmem:[#allocation6 + $0x418] sm:$0xf]
    %v392 = vld [vmem:[#allocation6 + $0x41c] sm:$0xf]
    %v393 = vld [vmem:[#allocation6 + $0x420] sm:$0xf]
    %v394 = vld [vmem:[#allocation6 + $0x424] sm:$0xf]
    %v395 = vld [vmem:[#allocation6 + $0x428] sm:$0xf]
    %v396 = vld [vmem:[#allocation6 + $0x42c] sm:$0xf]
    %v397 = vld [vmem:[#allocation6 + $0x430] sm:$0xf]
    %v398 = vld [vmem:[#allocation6 + $0x434] sm:$0xf]
    %v399 = vld [vmem:[#allocation6 + $0x438] sm:$0xf]
    %v400 = vld [vmem:[#allocation6 + $0x43c] sm:$0xf]
    %v401 = vld [vmem:[#allocation6 + $0x440] sm:$0xf]
    %v402 = vld [vmem:[#allocation6 + $0x444] sm:$0xf]
    %v403 = vld [vmem:[#allocation6 + $0x448] sm:$0xf]
    %v404 = vld [vmem:[#allocation6 + $0x44c] sm:$0xf]
    %v405 = vld [vmem:[#allocation6 + $0x450] sm:$0xf]
    %v406 = vld [vmem:[#allocation6 + $0x454] sm:$0xf]
    %v407 = vld [vmem:[#allocation6 + $0x458] sm:$0xf]
    %v408 = vld [vmem:[#allocation6 + $0x45c] sm:$0xf]
    %v409 = vld [vmem:[#allocation6 + $0x460] sm:$0xf]
    %v410 = vld [vmem:[#allocation6 + $0x464] sm:$0xf]
    %v411 = vld [vmem:[#allocation6 + $0x468] sm:$0xf]
    %v412 = vld [vmem:[#allocation6 + $0x46c] sm:$0xf]
    %v413 = vld [vmem:[#allocation6 + $0x470] sm:$0xf]
    %v414 = vld [vmem:[#allocation6 + $0x474] sm:$0xf]
    %v415 = vld [vmem:[#allocation6 + $0x478] sm:$0xf]
    %v416 = vld [vmem:[#allocation6 + $0x47c] sm:$0xf]
    %v417 = vld [vmem:[#allocation6 + $0x480] sm:$0xf]
    %v418 = vld [vmem:[#allocation6 + $0x484] sm:$0xf]
    %v419 = vld [vmem:[#allocation6 + $0x488] sm:$0xf]
    %v420 = vld [vmem:[#allocation6 + $0x48c] sm:$0xf]
    %v421 = vld [vmem:[#allocation6 + $0x490] sm:$0xf]
    %v422 = vld [vmem:[#allocation6 + $0x494] sm:$0xf]
    %v423 = vld [vmem:[#allocation6 + $0x498] sm:$0xf]
    %v424 = vld [vmem:[#allocation6 + $0x49c] sm:$0xf]
    %v425 = vld [vmem:[#allocation6 + $0x4a0] sm:$0xf]
    %v426 = vld [vmem:[#allocation6 + $0x4a4] sm:$0xf]
    %v427 = vld [vmem:[#allocation6 + $0x4a8] sm:$0xf]
    %v428 = vld [vmem:[#allocation6 + $0x4ac] sm:$0xf]
    %v429 = vld [vmem:[#allocation6 + $0x4b0] sm:$0xf]
    %v430 = vld [vmem:[#allocation6 + $0x4b4] sm:$0xf]
    %v431 = vld [vmem:[#allocation6 + $0x4b8] sm:$0xf]
    %v432 = vld [vmem:[#allocation6 + $0x4bc] sm:$0xf]
    %v433 = vld [vmem:[#allocation6 + $0x4c0] sm:$0xf]
    %v434 = vld [vmem:[#allocation6 + $0x4c4] sm:$0xf]
    %v435 = vld [vmem:[#allocation6 + $0x4c8] sm:$0xf]
    %v436 = vld [vmem:[#allocation6 + $0x4cc] sm:$0xf]
    %v437 = vld [vmem:[#allocation6 + $0x4d0] sm:$0xf]
    %v438 = vld [vmem:[#allocation6 + $0x4d4] sm:$0xf]
    %v439 = vld [vmem:[#allocation6 + $0x4d8] sm:$0xf]
    %v440 = vld [vmem:[#allocation6 + $0x4dc] sm:$0xf]
    %v441 = vld [vmem:[#allocation6 + $0x4e0] sm:$0xf]
    %v442 = vld [vmem:[#allocation6 + $0x4e4] sm:$0xf]
    %v443 = vld [vmem:[#allocation6 + $0x4e8] sm:$0xf]
    %v444 = vld [vmem:[#allocation6 + $0x4ec] sm:$0xf]
    %v445 = vld [vmem:[#allocation6 + $0x4f0] sm:$0xf]
    %v446 = vld [vmem:[#allocation6 + $0x4f4] sm:$0xf]
    %v447 = vld [vmem:[#allocation6 + $0x4f8] sm:$0xf]
    %v448 = vld [vmem:[#allocation6 + $0x4fc] sm:$0xf]
    %v449 = vld [vmem:[#allocation6 + $0x500] sm:$0xf]
    %v450 = vld [vmem:[#allocation6 + $0x504] sm:$0xf]
    %v451 = vld [vmem:[#allocation6 + $0x508] sm:$0xf]
    %v452 = vld [vmem:[#allocation6 + $0x50c] sm:$0xf]
    %v453 = vld [vmem:[#allocation6 + $0x510] sm:$0xf]
    %v454 = vld [vmem:[#allocation6 + $0x514] sm:$0xf]
    %v455 = vld [vmem:[#allocation6 + $0x518] sm:$0xf]
    %v456 = vld [vmem:[#allocation6 + $0x51c] sm:$0xf]
    %v457 = vld [vmem:[#allocation6 + $0x520] sm:$0xf]
    %v458 = vld [vmem:[#allocation6 + $0x524] sm:$0xf]
    %v459 = vld [vmem:[#allocation6 + $0x528] sm:$0xf]
    %v460 = vld [vmem:[#allocation6 + $0x52c] sm:$0xf]
    %v461 = vld [vmem:[#allocation6 + $0x530] sm:$0xf]
    %v462 = vld [vmem:[#allocation6 + $0x534] sm:$0xf]
    %v463 = vld [vmem:[#allocation6 + $0x538] sm:$0xf]
    %v464 = vld [vmem:[#allocation6 + $0x53c] sm:$0xf]
    %v465 = vld [vmem:[#allocation6 + $0x540] sm:$0xf]
    %v466 = vld [vmem:[#allocation6 + $0x544] sm:$0xf]
    %v467 = vld [vmem:[#allocation6 + $0x548] sm:$0xf]
    %v468 = vld [vmem:[#allocation6 + $0x54c] sm:$0xf]
    %v469 = vld [vmem:[#allocation6 + $0x550] sm:$0xf]
    %v470 = vld [vmem:[#allocation6 + $0x554] sm:$0xf]
    %v471 = vld [vmem:[#allocation6 + $0x558] sm:$0xf]
    %v472 = vld [vmem:[#allocation6 + $0x55c] sm:$0xf]
    %v473 = vld [vmem:[#allocation6 + $0x560] sm:$0xf]
    %v474 = vld [vmem:[#allocation6 + $0x564] sm:$0xf]
    %v475 = vld [vmem:[#allocation6 + $0x568] sm:$0xf]
    %v476 = vld [vmem:[#allocation6 + $0x56c] sm:$0xf]
    %v477 = vld [vmem:[#allocation6 + $0x570] sm:$0xf]
    %v478 = vld [vmem:[#allocation6 + $0x574] sm:$0xf]
    %v479 = vld [vmem:[#allocation6 + $0x578] sm:$0xf]
    %v480 = vld [vmem:[#allocation6 + $0x57c] sm:$0xf]
    %v481 = vld [vmem:[#allocation6 + $0x580] sm:$0xf]
    %v482 = vld [vmem:[#allocation6 + $0x584] sm:$0xf]
    %v483 = vld [vmem:[#allocation6 + $0x588] sm:$0xf]
    %v484 = vld [vmem:[#allocation6 + $0x58c] sm:$0xf]
    %v485 = vld [vmem:[#allocation6 + $0x590] sm:$0xf]
    %v486 = vld [vmem:[#allocation6 + $0x594] sm:$0xf]
    %v487 = vld [vmem:[#allocation6 + $0x598] sm:$0xf]
    %v488 = vld [vmem:[#allocation6 + $0x59c] sm:$0xf]
    %v489 = vld [vmem:[#allocation6 + $0x5a0] sm:$0xf]
    %v490 = vld [vmem:[#allocation6 + $0x5a4] sm:$0xf]
    %v491 = vld [vmem:[#allocation6 + $0x5a8] sm:$0xf]
    %v492 = vld [vmem:[#allocation6 + $0x5ac] sm:$0xf]
    %v493 = vld [vmem:[#allocation6 + $0x5b0] sm:$0xf]
    %v494 = vld [vmem:[#allocation6 + $0x5b4] sm:$0xf]
    %v495 = vld [vmem:[#allocation6 + $0x5b8] sm:$0xf]
    %v496 = vld [vmem:[#allocation6 + $0x5bc] sm:$0xf]
    %v497 = vld [vmem:[#allocation6 + $0x5c0] sm:$0xf]
    %v498 = vld [vmem:[#allocation6 + $0x5c4] sm:$0xf]
    %v499 = vld [vmem:[#allocation6 + $0x5c8] sm:$0xf]
    %v500 = vld [vmem:[#allocation6 + $0x5cc] sm:$0xf]
    %v501 = vld [vmem:[#allocation6 + $0x5d0] sm:$0xf]
    %v502 = vld [vmem:[#allocation6 + $0x5d4] sm:$0xf]
    %v503 = vld [vmem:[#allocation6 + $0x5d8] sm:$0xf]
    %v504 = vld [vmem:[#allocation6 + $0x5dc] sm:$0xf]
    %v505 = vld [vmem:[#allocation6 + $0x5e0] sm:$0xf]
    %v506 = vld [vmem:[#allocation6 + $0x5e4] sm:$0xf]
    %v507 = vld [vmem:[#allocation6 + $0x5e8] sm:$0xf]
    %v508 = vld [vmem:[#allocation6 + $0x5ec] sm:$0xf]
    %v509 = vld [vmem:[#allocation6 + $0x5f0] sm:$0xf]
    %v510 = vld [vmem:[#allocation6 + $0x5f4] sm:$0xf]
    %v511 = vld [vmem:[#allocation6 + $0x5f8] sm:$0xf]
    %v512 = vld [vmem:[#allocation6 + $0x5fc] sm:$0xf]
    %v513 = vld [vmem:[%s3] sm:$0x1]
    %v514 = vstv %s80
    %v515 = vmul.f32 %v514, %v513
    %v517 = vlaneseq
    %v518 = vshrl.u32 %v517, 7
    %v519 = vsub.s32 0, %v518
    %v520 = vrot.slane %v515, %v519
    %v906 = vunpack.c.l.b16 %v129
    %v907 = vunpack.c.l.b16 %v130
    %v908 = vunpack.c.l.b16 %v131
    %v909 = vunpack.c.l.b16 %v132
    %v910 = vunpack.c.l.b16 %v133
    %v911 = vunpack.c.l.b16 %v134
    %v912 = vunpack.c.l.b16 %v135
    %v913 = vunpack.c.l.b16 %v136
    %v914 = vunpack.c.l.b16 %v137
    %v915 = vunpack.c.l.b16 %v138
    %v916 = vunpack.c.l.b16 %v139
    %v917 = vunpack.c.l.b16 %v140
    %v918 = vunpack.c.l.b16 %v141
    %v919 = vunpack.c.l.b16 %v142
    %v920 = vunpack.c.l.b16 %v143
    %v921 = vunpack.c.l.b16 %v144
    %v922 = vunpack.c.l.b16 %v145
    %v923 = vunpack.c.l.b16 %v146
    %v924 = vunpack.c.l.b16 %v147
    %v925 = vunpack.c.l.b16 %v148
    %v926 = vunpack.c.l.b16 %v149
    %v927 = vunpack.c.l.b16 %v150
    %v928 = vunpack.c.l.b16 %v151
    %v929 = vunpack.c.l.b16 %v152
    %v930 = vunpack.c.l.b16 %v153
    %v931 = vunpack.c.l.b16 %v154
    %v932 = vunpack.c.l.b16 %v155
    %v933 = vunpack.c.l.b16 %v156
    %v934 = vunpack.c.l.b16 %v157
    %v935 = vunpack.c.l.b16 %v158
    %v936 = vunpack.c.l.b16 %v159
    %v937 = vunpack.c.l.b16 %v160
    %v938 = vunpack.c.l.b16 %v161
    %v939 = vunpack.c.l.b16 %v162
    %v940 = vunpack.c.l.b16 %v163
    %v941 = vunpack.c.l.b16 %v164
    %v942 = vunpack.c.l.b16 %v165
    %v943 = vunpack.c.l.b16 %v166
    %v944 = vunpack.c.l.b16 %v167
    %v945 = vunpack.c.l.b16 %v168
    %v946 = vunpack.c.l.b16 %v169
    %v947 = vunpack.c.l.b16 %v170
    %v948 = vunpack.c.l.b16 %v171
    %v949 = vunpack.c.l.b16 %v172
    %v950 = vunpack.c.l.b16 %v173
    %v951 = vunpack.c.l.b16 %v174
    %v952 = vunpack.c.l.b16 %v175
    %v953 = vunpack.c.l.b16 %v176
    %v954 = vunpack.c.l.b16 %v177
    %v955 = vunpack.c.l.b16 %v178
    %v956 = vunpack.c.l.b16 %v179
    %v957 = vunpack.c.l.b16 %v180
    %v958 = vunpack.c.l.b16 %v181
    %v959 = vunpack.c.l.b16 %v182
    %v960 = vunpack.c.l.b16 %v183
    %v961 = vunpack.c.l.b16 %v184
    %v962 = vunpack.c.l.b16 %v185
    %v963 = vunpack.c.l.b16 %v186
    %v964 = vunpack.c.l.b16 %v187
    %v965 = vunpack.c.l.b16 %v188
    %v966 = vunpack.c.l.b16 %v189
    %v967 = vunpack.c.l.b16 %v190
    %v968 = vunpack.c.l.b16 %v191
    %v969 = vunpack.c.l.b16 %v192
    %v970 = vunpack.c.l.b16 %v193
    %v971 = vunpack.c.l.b16 %v194
    %v972 = vunpack.c.l.b16 %v195
    %v973 = vunpack.c.l.b16 %v196
    %v974 = vunpack.c.l.b16 %v197
    %v975 = vunpack.c.l.b16 %v198
    %v976 = vunpack.c.l.b16 %v199
    %v977 = vunpack.c.l.b16 %v200
    %v978 = vunpack.c.l.b16 %v201
    %v979 = vunpack.c.l.b16 %v202
    %v980 = vunpack.c.l.b16 %v203
    %v981 = vunpack.c.l.b16 %v204
    %v982 = vunpack.c.l.b16 %v205
    %v983 = vunpack.c.l.b16 %v206
    %v984 = vunpack.c.l.b16 %v207
    %v985 = vunpack.c.l.b16 %v208
    %v986 = vunpack.c.l.b16 %v209
    %v987 = vunpack.c.l.b16 %v210
    %v988 = vunpack.c.l.b16 %v211
    %v989 = vunpack.c.l.b16 %v212
    %v990 = vunpack.c.l.b16 %v213
    %v991 = vunpack.c.l.b16 %v214
    %v992 = vunpack.c.l.b16 %v215
    %v993 = vunpack.c.l.b16 %v216
    %v994 = vunpack.c.l.b16 %v217
    %v995 = vunpack.c.l.b16 %v218
    %v996 = vunpack.c.l.b16 %v219
    %v997 = vunpack.c.l.b16 %v220
    %v998 = vunpack.c.l.b16 %v221
    %v999 = vunpack.c.l.b16 %v222
    %v1000 = vunpack.c.l.b16 %v223
    %v1001 = vunpack.c.l.b16 %v224
    %v1002 = vunpack.c.l.b16 %v225
    %v1003 = vunpack.c.l.b16 %v226
    %v1004 = vunpack.c.l.b16 %v227
    %v1005 = vunpack.c.l.b16 %v228
    %v1006 = vunpack.c.l.b16 %v229
    %v1007 = vunpack.c.l.b16 %v230
    %v1008 = vunpack.c.l.b16 %v231
    %v1009 = vunpack.c.l.b16 %v232
    %v1010 = vunpack.c.l.b16 %v233
    %v1011 = vunpack.c.l.b16 %v234
    %v1012 = vunpack.c.l.b16 %v235
    %v1013 = vunpack.c.l.b16 %v236
    %v1014 = vunpack.c.l.b16 %v237
    %v1015 = vunpack.c.l.b16 %v238
    %v1016 = vunpack.c.l.b16 %v239
    %v1017 = vunpack.c.l.b16 %v240
    %v1018 = vunpack.c.l.b16 %v241
    %v1019 = vunpack.c.l.b16 %v242
    %v1020 = vunpack.c.l.b16 %v243
    %v1021 = vunpack.c.l.b16 %v244
    %v1022 = vunpack.c.l.b16 %v245
    %v1023 = vunpack.c.l.b16 %v246
    %v1024 = vunpack.c.l.b16 %v247
    %v1025 = vunpack.c.l.b16 %v248
    %v1026 = vunpack.c.l.b16 %v249
    %v1027 = vunpack.c.l.b16 %v250
    %v1028 = vunpack.c.l.b16 %v251
    %v1029 = vunpack.c.l.b16 %v252
    %v1030 = vunpack.c.l.b16 %v253
    %v1031 = vunpack.c.l.b16 %v254
    %v1032 = vunpack.c.l.b16 %v255
    %v1033 = vunpack.c.l.b16 %v256
    %v1034 = vunpack.c.l.b16 %v257
    %v1035 = vunpack.c.l.b16 %v258
    %v1036 = vunpack.c.l.b16 %v259
    %v1037 = vunpack.c.l.b16 %v260
    %v1038 = vunpack.c.l.b16 %v261
    %v1039 = vunpack.c.l.b16 %v262
    %v1040 = vunpack.c.l.b16 %v263
    %v1041 = vunpack.c.l.b16 %v264
    %v1042 = vunpack.c.l.b16 %v265
    %v1043 = vunpack.c.l.b16 %v266
    %v1044 = vunpack.c.l.b16 %v267
    %v1045 = vunpack.c.l.b16 %v268
    %v1046 = vunpack.c.l.b16 %v269
    %v1047 = vunpack.c.l.b16 %v270
    %v1048 = vunpack.c.l.b16 %v271
    %v1049 = vunpack.c.l.b16 %v272
    %v1050 = vunpack.c.l.b16 %v273
    %v1051 = vunpack.c.l.b16 %v274
    %v1052 = vunpack.c.l.b16 %v275
    %v1053 = vunpack.c.l.b16 %v276
    %v1054 = vunpack.c.l.b16 %v277
    %v1055 = vunpack.c.l.b16 %v278
    %v1056 = vunpack.c.l.b16 %v279
    %v1057 = vunpack.c.l.b16 %v280
    %v1058 = vunpack.c.l.b16 %v281
    %v1059 = vunpack.c.l.b16 %v282
    %v1060 = vunpack.c.l.b16 %v283
    %v1061 = vunpack.c.l.b16 %v284
    %v1062 = vunpack.c.l.b16 %v285
    %v1063 = vunpack.c.l.b16 %v286
    %v1064 = vunpack.c.l.b16 %v287
    %v1065 = vunpack.c.l.b16 %v288
    %v1066 = vunpack.c.l.b16 %v289
    %v1067 = vunpack.c.l.b16 %v290
    %v1068 = vunpack.c.l.b16 %v291
    %v1069 = vunpack.c.l.b16 %v292
    %v1070 = vunpack.c.l.b16 %v293
    %v1071 = vunpack.c.l.b16 %v294
    %v1072 = vunpack.c.l.b16 %v295
    %v1073 = vunpack.c.l.b16 %v296
    %v1074 = vunpack.c.l.b16 %v297
    %v1075 = vunpack.c.l.b16 %v298
    %v1076 = vunpack.c.l.b16 %v299
    %v1077 = vunpack.c.l.b16 %v300
    %v1078 = vunpack.c.l.b16 %v301
    %v1079 = vunpack.c.l.b16 %v302
    %v1080 = vunpack.c.l.b16 %v303
    %v1081 = vunpack.c.l.b16 %v304
    %v1082 = vunpack.c.l.b16 %v305
    %v1083 = vunpack.c.l.b16 %v306
    %v1084 = vunpack.c.l.b16 %v307
    %v1085 = vunpack.c.l.b16 %v308
    %v1086 = vunpack.c.l.b16 %v309
    %v1087 = vunpack.c.l.b16 %v310
    %v1088 = vunpack.c.l.b16 %v311
    %v1089 = vunpack.c.l.b16 %v312
    %v1090 = vunpack.c.l.b16 %v313
    %v1091 = vunpack.c.l.b16 %v314
    %v1092 = vunpack.c.l.b16 %v315
    %v1093 = vunpack.c.l.b16 %v316
    %v1094 = vunpack.c.l.b16 %v317
    %v1095 = vunpack.c.l.b16 %v318
    %v1096 = vunpack.c.l.b16 %v319
    %v1097 = vunpack.c.l.b16 %v320
    %v1098 = vunpack.c.l.b16 %v321
    %v1099 = vunpack.c.l.b16 %v322
    %v1100 = vunpack.c.l.b16 %v323
    %v1101 = vunpack.c.l.b16 %v324
    %v1102 = vunpack.c.l.b16 %v325
    %v1103 = vunpack.c.l.b16 %v326
    %v1104 = vunpack.c.l.b16 %v327
    %v1105 = vunpack.c.l.b16 %v328
    %v1106 = vunpack.c.l.b16 %v329
    %v1107 = vunpack.c.l.b16 %v330
    %v1108 = vunpack.c.l.b16 %v331
    %v1109 = vunpack.c.l.b16 %v332
    %v1110 = vunpack.c.l.b16 %v333
    %v1111 = vunpack.c.l.b16 %v334
    %v1112 = vunpack.c.l.b16 %v335
    %v1113 = vunpack.c.l.b16 %v336
    %v1114 = vunpack.c.l.b16 %v337
    %v1115 = vunpack.c.l.b16 %v338
    %v1116 = vunpack.c.l.b16 %v339
    %v1117 = vunpack.c.l.b16 %v340
    %v1118 = vunpack.c.l.b16 %v341
    %v1119 = vunpack.c.l.b16 %v342
    %v1120 = vunpack.c.l.b16 %v343
    %v1121 = vunpack.c.l.b16 %v344
    %v1122 = vunpack.c.l.b16 %v345
    %v1123 = vunpack.c.l.b16 %v346
    %v1124 = vunpack.c.l.b16 %v347
    %v1125 = vunpack.c.l.b16 %v348
    %v1126 = vunpack.c.l.b16 %v349
    %v1127 = vunpack.c.l.b16 %v350
    %v1128 = vunpack.c.l.b16 %v351
    %v1129 = vunpack.c.l.b16 %v352
    %v1130 = vunpack.c.l.b16 %v353
    %v1131 = vunpack.c.l.b16 %v354
    %v1132 = vunpack.c.l.b16 %v355
    %v1133 = vunpack.c.l.b16 %v356
    %v1134 = vunpack.c.l.b16 %v357
    %v1135 = vunpack.c.l.b16 %v358
    %v1136 = vunpack.c.l.b16 %v359
    %v1137 = vunpack.c.l.b16 %v360
    %v1138 = vunpack.c.l.b16 %v361
    %v1139 = vunpack.c.l.b16 %v362
    %v1140 = vunpack.c.l.b16 %v363
    %v1141 = vunpack.c.l.b16 %v364
    %v1142 = vunpack.c.l.b16 %v365
    %v1143 = vunpack.c.l.b16 %v366
    %v1144 = vunpack.c.l.b16 %v367
    %v1145 = vunpack.c.l.b16 %v368
    %v1146 = vunpack.c.l.b16 %v369
    %v1147 = vunpack.c.l.b16 %v370
    %v1148 = vunpack.c.l.b16 %v371
    %v1149 = vunpack.c.l.b16 %v372
    %v1150 = vunpack.c.l.b16 %v373
    %v1151 = vunpack.c.l.b16 %v374
    %v1152 = vunpack.c.l.b16 %v375
    %v1153 = vunpack.c.l.b16 %v376
    %v1154 = vunpack.c.l.b16 %v377
    %v1155 = vunpack.c.l.b16 %v378
    %v1156 = vunpack.c.l.b16 %v379
    %v1157 = vunpack.c.l.b16 %v380
    %v1158 = vunpack.c.l.b16 %v381
    %v1159 = vunpack.c.l.b16 %v382
    %v1160 = vunpack.c.l.b16 %v383
    %v1161 = vunpack.c.l.b16 %v384
    %v1162 = vunpack.c.l.b16 %v385
    %v1163 = vunpack.c.l.b16 %v386
    %v1164 = vunpack.c.l.b16 %v387
    %v1165 = vunpack.c.l.b16 %v388
    %v1166 = vunpack.c.l.b16 %v389
    %v1167 = vunpack.c.l.b16 %v390
    %v1168 = vunpack.c.l.b16 %v391
    %v1169 = vunpack.c.l.b16 %v392
    %v1170 = vunpack.c.l.b16 %v393
    %v1171 = vunpack.c.l.b16 %v394
    %v1172 = vunpack.c.l.b16 %v395
    %v1173 = vunpack.c.l.b16 %v396
    %v1174 = vunpack.c.l.b16 %v397
    %v1175 = vunpack.c.l.b16 %v398
    %v1176 = vunpack.c.l.b16 %v399
    %v1177 = vunpack.c.l.b16 %v400
    %v1178 = vunpack.c.l.b16 %v401
    %v1179 = vunpack.c.l.b16 %v402
    %v1180 = vunpack.c.l.b16 %v403
    %v1181 = vunpack.c.l.b16 %v404
    %v1182 = vunpack.c.l.b16 %v405
    %v1183 = vunpack.c.l.b16 %v406
    %v1184 = vunpack.c.l.b16 %v407
    %v1185 = vunpack.c.l.b16 %v408
    %v1186 = vunpack.c.l.b16 %v409
    %v1187 = vunpack.c.l.b16 %v410
    %v1188 = vunpack.c.l.b16 %v411
    %v1189 = vunpack.c.l.b16 %v412
    %v1190 = vunpack.c.l.b16 %v413
    %v1191 = vunpack.c.l.b16 %v414
    %v1192 = vunpack.c.l.b16 %v415
    %v1193 = vunpack.c.l.b16 %v416
    %v1194 = vunpack.c.l.b16 %v417
    %v1195 = vunpack.c.l.b16 %v418
    %v1196 = vunpack.c.l.b16 %v419
    %v1197 = vunpack.c.l.b16 %v420
    %v1198 = vunpack.c.l.b16 %v421
    %v1199 = vunpack.c.l.b16 %v422
    %v1200 = vunpack.c.l.b16 %v423
    %v1201 = vunpack.c.l.b16 %v424
    %v1202 = vunpack.c.l.b16 %v425
    %v1203 = vunpack.c.l.b16 %v426
    %v1204 = vunpack.c.l.b16 %v427
    %v1205 = vunpack.c.l.b16 %v428
    %v1206 = vunpack.c.l.b16 %v429
    %v1207 = vunpack.c.l.b16 %v430
    %v1208 = vunpack.c.l.b16 %v431
    %v1209 = vunpack.c.l.b16 %v432
    %v1210 = vunpack.c.l.b16 %v433
    %v1211 = vunpack.c.l.b16 %v434
    %v1212 = vunpack.c.l.b16 %v435
    %v1213 = vunpack.c.l.b16 %v436
    %v1214 = vunpack.c.l.b16 %v437
    %v1215 = vunpack.c.l.b16 %v438
    %v1216 = vunpack.c.l.b16 %v439
    %v1217 = vunpack.c.l.b16 %v440
    %v1218 = vunpack.c.l.b16 %v441
    %v1219 = vunpack.c.l.b16 %v442
    %v1220 = vunpack.c.l.b16 %v443
    %v1221 = vunpack.c.l.b16 %v444
    %v1222 = vunpack.c.l.b16 %v445
    %v1223 = vunpack.c.l.b16 %v446
    %v1224 = vunpack.c.l.b16 %v447
    %v1225 = vunpack.c.l.b16 %v448
    %v1226 = vunpack.c.l.b16 %v449
    %v1227 = vunpack.c.l.b16 %v450
    %v1228 = vunpack.c.l.b16 %v451
    %v1229 = vunpack.c.l.b16 %v452
    %v1230 = vunpack.c.l.b16 %v453
    %v1231 = vunpack.c.l.b16 %v454
    %v1232 = vunpack.c.l.b16 %v455
    %v1233 = vunpack.c.l.b16 %v456
    %v1234 = vunpack.c.l.b16 %v457
    %v1235 = vunpack.c.l.b16 %v458
    %v1236 = vunpack.c.l.b16 %v459
    %v1237 = vunpack.c.l.b16 %v460
    %v1238 = vunpack.c.l.b16 %v461
    %v1239 = vunpack.c.l.b16 %v462
    %v1240 = vunpack.c.l.b16 %v463
    %v1241 = vunpack.c.l.b16 %v464
    %v1242 = vunpack.c.l.b16 %v465
    %v1243 = vunpack.c.l.b16 %v466
    %v1244 = vunpack.c.l.b16 %v467
    %v1245 = vunpack.c.l.b16 %v468
    %v1246 = vunpack.c.l.b16 %v469
    %v1247 = vunpack.c.l.b16 %v470
    %v1248 = vunpack.c.l.b16 %v471
    %v1249 = vunpack.c.l.b16 %v472
    %v1250 = vunpack.c.l.b16 %v473
    %v1251 = vunpack.c.l.b16 %v474
    %v1252 = vunpack.c.l.b16 %v475
    %v1253 = vunpack.c.l.b16 %v476
    %v1254 = vunpack.c.l.b16 %v477
    %v1255 = vunpack.c.l.b16 %v478
    %v1256 = vunpack.c.l.b16 %v479
    %v1257 = vunpack.c.l.b16 %v480
    %v1258 = vunpack.c.l.b16 %v481
    %v1259 = vunpack.c.l.b16 %v482
    %v1260 = vunpack.c.l.b16 %v483
    %v1261 = vunpack.c.l.b16 %v484
    %v1262 = vunpack.c.l.b16 %v485
    %v1263 = vunpack.c.l.b16 %v486
    %v1264 = vunpack.c.l.b16 %v487
    %v1265 = vunpack.c.l.b16 %v488
    %v1266 = vunpack.c.l.b16 %v489
    %v1267 = vunpack.c.l.b16 %v490
    %v1268 = vunpack.c.l.b16 %v491
    %v1269 = vunpack.c.l.b16 %v492
    %v1270 = vunpack.c.l.b16 %v493
    %v1271 = vunpack.c.l.b16 %v494
    %v1272 = vunpack.c.l.b16 %v495
    %v1273 = vunpack.c.l.b16 %v496
    %v1274 = vunpack.c.l.b16 %v497
    %v1275 = vunpack.c.l.b16 %v498
    %v1276 = vunpack.c.l.b16 %v499
    %v1277 = vunpack.c.l.b16 %v500
    %v1278 = vunpack.c.l.b16 %v501
    %v1279 = vunpack.c.l.b16 %v502
    %v1280 = vunpack.c.l.b16 %v503
    %v1281 = vunpack.c.l.b16 %v504
    %v1282 = vunpack.c.l.b16 %v505
    %v1283 = vunpack.c.l.b16 %v506
    %v1284 = vunpack.c.l.b16 %v507
    %v1285 = vunpack.c.l.b16 %v508
    %v1286 = vunpack.c.l.b16 %v509
    %v1287 = vunpack.c.l.b16 %v510
    %v1288 = vunpack.c.l.b16 %v511
    %v1289 = vunpack.c.l.b16 %v512
    %v1290 = vpack.c.b16 %v907, %v906
    %v1291 = vpack.c.b16 %v909, %v908
    %v1292 = vpack.c.b16 %v911, %v910
    %v1293 = vpack.c.b16 %v913, %v912
    %v1294 = vpack.c.b16 %v915, %v914
    %v1295 = vpack.c.b16 %v917, %v916
    %v1296 = vpack.c.b16 %v919, %v918
    %v1297 = vpack.c.b16 %v921, %v920
    %v1298 = vpack.c.b16 %v923, %v922
    %v1299 = vpack.c.b16 %v925, %v924
    %v1300 = vpack.c.b16 %v927, %v926
    %v1301 = vpack.c.b16 %v929, %v928
    %v1302 = vpack.c.b16 %v931, %v930
    %v1303 = vpack.c.b16 %v933, %v932
    %v1304 = vpack.c.b16 %v935, %v934
    %v1305 = vpack.c.b16 %v937, %v936
    %v1306 = vpack.c.b16 %v939, %v938
    %v1307 = vpack.c.b16 %v941, %v940
    %v1308 = vpack.c.b16 %v943, %v942
    %v1309 = vpack.c.b16 %v945, %v944
    %v1310 = vpack.c.b16 %v947, %v946
    %v1311 = vpack.c.b16 %v949, %v948
    %v1312 = vpack.c.b16 %v951, %v950
    %v1313 = vpack.c.b16 %v953, %v952
    %v1314 = vpack.c.b16 %v955, %v954
    %v1315 = vpack.c.b16 %v957, %v956
    %v1316 = vpack.c.b16 %v959, %v958
    %v1317 = vpack.c.b16 %v961, %v960
    %v1318 = vpack.c.b16 %v963, %v962
    %v1319 = vpack.c.b16 %v965, %v964
    %v1320 = vpack.c.b16 %v967, %v966
    %v1321 = vpack.c.b16 %v969, %v968
    %v1322 = vpack.c.b16 %v971, %v970
    %v1323 = vpack.c.b16 %v973, %v972
    %v1324 = vpack.c.b16 %v975, %v974
    %v1325 = vpack.c.b16 %v977, %v976
    %v1326 = vpack.c.b16 %v979, %v978
    %v1327 = vpack.c.b16 %v981, %v980
    %v1328 = vpack.c.b16 %v983, %v982
    %v1329 = vpack.c.b16 %v985, %v984
    %v1330 = vpack.c.b16 %v987, %v986
    %v1331 = vpack.c.b16 %v989, %v988
    %v1332 = vpack.c.b16 %v991, %v990
    %v1333 = vpack.c.b16 %v993, %v992
    %v1334 = vpack.c.b16 %v995, %v994
    %v1335 = vpack.c.b16 %v997, %v996
    %v1336 = vpack.c.b16 %v999, %v998
    %v1337 = vpack.c.b16 %v1001, %v1000
    %v1338 = vpack.c.b16 %v1003, %v1002
    %v1339 = vpack.c.b16 %v1005, %v1004
    %v1340 = vpack.c.b16 %v1007, %v1006
    %v1341 = vpack.c.b16 %v1009, %v1008
    %v1342 = vpack.c.b16 %v1011, %v1010
    %v1343 = vpack.c.b16 %v1013, %v1012
    %v1344 = vpack.c.b16 %v1015, %v1014
    %v1345 = vpack.c.b16 %v1017, %v1016
    %v1346 = vpack.c.b16 %v1019, %v1018
    %v1347 = vpack.c.b16 %v1021, %v1020
    %v1348 = vpack.c.b16 %v1023, %v1022
    %v1349 = vpack.c.b16 %v1025, %v1024
    %v1350 = vpack.c.b16 %v1027, %v1026
    %v1351 = vpack.c.b16 %v1029, %v1028
    %v1352 = vpack.c.b16 %v1031, %v1030
    %v1353 = vpack.c.b16 %v1033, %v1032
    %v1354 = vpack.c.b16 %v1035, %v1034
    %v1355 = vpack.c.b16 %v1037, %v1036
    %v1356 = vpack.c.b16 %v1039, %v1038
    %v1357 = vpack.c.b16 %v1041, %v1040
    %v1358 = vpack.c.b16 %v1043, %v1042
    %v1359 = vpack.c.b16 %v1045, %v1044
    %v1360 = vpack.c.b16 %v1047, %v1046
    %v1361 = vpack.c.b16 %v1049, %v1048
    %v1362 = vpack.c.b16 %v1051, %v1050
    %v1363 = vpack.c.b16 %v1053, %v1052
    %v1364 = vpack.c.b16 %v1055, %v1054
    %v1365 = vpack.c.b16 %v1057, %v1056
    %v1366 = vpack.c.b16 %v1059, %v1058
    %v1367 = vpack.c.b16 %v1061, %v1060
    %v1368 = vpack.c.b16 %v1063, %v1062
    %v1369 = vpack.c.b16 %v1065, %v1064
    %v1370 = vpack.c.b16 %v1067, %v1066
    %v1371 = vpack.c.b16 %v1069, %v1068
    %v1372 = vpack.c.b16 %v1071, %v1070
    %v1373 = vpack.c.b16 %v1073, %v1072
    %v1374 = vpack.c.b16 %v1075, %v1074
    %v1375 = vpack.c.b16 %v1077, %v1076
    %v1376 = vpack.c.b16 %v1079, %v1078
    %v1377 = vpack.c.b16 %v1081, %v1080
    %v1378 = vpack.c.b16 %v1083, %v1082
    %v1379 = vpack.c.b16 %v1085, %v1084
    %v1380 = vpack.c.b16 %v1087, %v1086
    %v1381 = vpack.c.b16 %v1089, %v1088
    %v1382 = vpack.c.b16 %v1091, %v1090
    %v1383 = vpack.c.b16 %v1093, %v1092
    %v1384 = vpack.c.b16 %v1095, %v1094
    %v1385 = vpack.c.b16 %v1097, %v1096
    %v1386 = vpack.c.b16 %v1099, %v1098
    %v1387 = vpack.c.b16 %v1101, %v1100
    %v1388 = vpack.c.b16 %v1103, %v1102
    %v1389 = vpack.c.b16 %v1105, %v1104
    %v1390 = vpack.c.b16 %v1107, %v1106
    %v1391 = vpack.c.b16 %v1109, %v1108
    %v1392 = vpack.c.b16 %v1111, %v1110
    %v1393 = vpack.c.b16 %v1113, %v1112
    %v1394 = vpack.c.b16 %v1115, %v1114
    %v1395 = vpack.c.b16 %v1117, %v1116
    %v1396 = vpack.c.b16 %v1119, %v1118
    %v1397 = vpack.c.b16 %v1121, %v1120
    %v1398 = vpack.c.b16 %v1123, %v1122
    %v1399 = vpack.c.b16 %v1125, %v1124
    %v1400 = vpack.c.b16 %v1127, %v1126
    %v1401 = vpack.c.b16 %v1129, %v1128
    %v1402 = vpack.c.b16 %v1131, %v1130
    %v1403 = vpack.c.b16 %v1133, %v1132
    %v1404 = vpack.c.b16 %v1135, %v1134
    %v1405 = vpack.c.b16 %v1137, %v1136
    %v1406 = vpack.c.b16 %v1139, %v1138
    %v1407 = vpack.c.b16 %v1141, %v1140
    %v1408 = vpack.c.b16 %v1143, %v1142
    %v1409 = vpack.c.b16 %v1145, %v1144
    %v1410 = vpack.c.b16 %v1147, %v1146
    %v1411 = vpack.c.b16 %v1149, %v1148
    %v1412 = vpack.c.b16 %v1151, %v1150
    %v1413 = vpack.c.b16 %v1153, %v1152
    %v1414 = vpack.c.b16 %v1155, %v1154
    %v1415 = vpack.c.b16 %v1157, %v1156
    %v1416 = vpack.c.b16 %v1159, %v1158
    %v1417 = vpack.c.b16 %v1161, %v1160
    %v1418 = vpack.c.b16 %v1163, %v1162
    %v1419 = vpack.c.b16 %v1165, %v1164
    %v1420 = vpack.c.b16 %v1167, %v1166
    %v1421 = vpack.c.b16 %v1169, %v1168
    %v1422 = vpack.c.b16 %v1171, %v1170
    %v1423 = vpack.c.b16 %v1173, %v1172
    %v1424 = vpack.c.b16 %v1175, %v1174
    %v1425 = vpack.c.b16 %v1177, %v1176
    %v1426 = vpack.c.b16 %v1179, %v1178
    %v1427 = vpack.c.b16 %v1181, %v1180
    %v1428 = vpack.c.b16 %v1183, %v1182
    %v1429 = vpack.c.b16 %v1185, %v1184
    %v1430 = vpack.c.b16 %v1187, %v1186
    %v1431 = vpack.c.b16 %v1189, %v1188
    %v1432 = vpack.c.b16 %v1191, %v1190
    %v1433 = vpack.c.b16 %v1193, %v1192
    %v1434 = vpack.c.b16 %v1195, %v1194
    %v1435 = vpack.c.b16 %v1197, %v1196
    %v1436 = vpack.c.b16 %v1199, %v1198
    %v1437 = vpack.c.b16 %v1201, %v1200
    %v1438 = vpack.c.b16 %v1203, %v1202
    %v1439 = vpack.c.b16 %v1205, %v1204
    %v1440 = vpack.c.b16 %v1207, %v1206
    %v1441 = vpack.c.b16 %v1209, %v1208
    %v1442 = vpack.c.b16 %v1211, %v1210
    %v1443 = vpack.c.b16 %v1213, %v1212
    %v1444 = vpack.c.b16 %v1215, %v1214
    %v1445 = vpack.c.b16 %v1217, %v1216
    %v1446 = vpack.c.b16 %v1219, %v1218
    %v1447 = vpack.c.b16 %v1221, %v1220
    %v1448 = vpack.c.b16 %v1223, %v1222
    %v1449 = vpack.c.b16 %v1225, %v1224
    %v1450 = vpack.c.b16 %v1227, %v1226
    %v1451 = vpack.c.b16 %v1229, %v1228
    %v1452 = vpack.c.b16 %v1231, %v1230
    %v1453 = vpack.c.b16 %v1233, %v1232
    %v1454 = vpack.c.b16 %v1235, %v1234
    %v1455 = vpack.c.b16 %v1237, %v1236
    %v1456 = vpack.c.b16 %v1239, %v1238
    %v1457 = vpack.c.b16 %v1241, %v1240
    %v1458 = vpack.c.b16 %v1243, %v1242
    %v1459 = vpack.c.b16 %v1245, %v1244
    %v1460 = vpack.c.b16 %v1247, %v1246
    %v1461 = vpack.c.b16 %v1249, %v1248
    %v1462 = vpack.c.b16 %v1251, %v1250
    %v1463 = vpack.c.b16 %v1253, %v1252
    %v1464 = vpack.c.b16 %v1255, %v1254
    %v1465 = vpack.c.b16 %v1257, %v1256
    %v1466 = vpack.c.b16 %v1259, %v1258
    %v1467 = vpack.c.b16 %v1261, %v1260
    %v1468 = vpack.c.b16 %v1263, %v1262
    %v1469 = vpack.c.b16 %v1265, %v1264
    %v1470 = vpack.c.b16 %v1267, %v1266
    %v1471 = vpack.c.b16 %v1269, %v1268
    %v1472 = vpack.c.b16 %v1271, %v1270
    %v1473 = vpack.c.b16 %v1273, %v1272
    %v1474 = vpack.c.b16 %v1275, %v1274
    %v1475 = vpack.c.b16 %v1277, %v1276
    %v1476 = vpack.c.b16 %v1279, %v1278
    %v1477 = vpack.c.b16 %v1281, %v1280
    %v1478 = vpack.c.b16 %v1283, %v1282
    %v1479 = vpack.c.b16 %v1285, %v1284
    %v1480 = vpack.c.b16 %v1287, %v1286
    %v1481 = vpack.c.b16 %v1289, %v1288
    %1674 = vmatprep.subr.bf16.mxu0 0
    %1675 = vmatpush1.bf16.msra.mxu0 %v1290
    %1676 = vmatprep.subr.bf16.mxu0 0
    %1677 = vmatpush1.bf16.msra.mxu0 %v1291
    %1678 = vmatprep.subr.bf16.mxu0 0
    %1679 = vmatpush1.bf16.msra.mxu0 %v1292
    %1680 = vmatprep.subr.bf16.mxu0 0
    %1681 = vmatpush1.bf16.msra.mxu0 %v1293
    %1682 = vmatprep.subr.bf16.mxu0 0
    %1683 = vmatpush1.bf16.msra.mxu0 %v1294
    %1684 = vmatprep.subr.bf16.mxu0 0
    %1685 = vmatpush1.bf16.msra.mxu0 %v1295
    %1686 = vmatprep.subr.bf16.mxu0 0
    %1687 = vmatpush1.bf16.msra.mxu0 %v1296
    %1688 = vmatprep.subr.bf16.mxu0 0
    %1689 = vmatpush1.bf16.msra.mxu0 %v1297
    %1690 = vmatprep.subr.bf16.mxu0 0
    %1691 = vmatpush1.bf16.msra.mxu0 %v1298
    %1692 = vmatprep.subr.bf16.mxu0 0
    %1693 = vmatpush1.bf16.msra.mxu0 %v1299
    %1694 = vmatprep.subr.bf16.mxu0 0
    %1695 = vmatpush1.bf16.msra.mxu0 %v1300
    %1696 = vmatprep.subr.bf16.mxu0 0
    %1697 = vmatpush1.bf16.msra.mxu0 %v1301
    %1698 = vmatprep.subr.bf16.mxu0 0
    %1699 = vmatpush1.bf16.msra.mxu0 %v1302
    %1700 = vmatprep.subr.bf16.mxu0 0
    %1701 = vmatpush1.bf16.msra.mxu0 %v1303
    %1702 = vmatprep.subr.bf16.mxu0 0
    %1703 = vmatpush1.bf16.msra.mxu0 %v1304
    %1704 = vmatprep.subr.bf16.mxu0 0
    %1705 = vmatpush1.bf16.msra.mxu0 %v1305
    %1706 = vmatprep.mubr.bf16.mxu0 %v106
    %1707 = vmatmul.mubr.bf16.gmra.mrb[0].mxu0 %v105
    %v1708 = vpop.f32.mrb[0].mxu0
    %v1709 = vadd.f32 %v520, %v1708
    %v1710 = vpop.f32.mrb[0].mxu0
    %v1711 = vpop.f32.mrb[0].mxu0
    %v1712 = vpop.f32.mrb[0].mxu0
    %1713 = vdwg.mxu0
    %1714 = vmatprep.subr.bf16.mxu0 0
    %1715 = vmatpush1.bf16.msra.mxu0 %v1306
    %1716 = vmatprep.subr.bf16.mxu0 0
    %1717 = vmatpush1.bf16.msra.mxu0 %v1307
    %1718 = vmatprep.subr.bf16.mxu0 0
    %1719 = vmatpush1.bf16.msra.mxu0 %v1308
    %1720 = vmatprep.subr.bf16.mxu0 0
    %1721 = vmatpush1.bf16.msra.mxu0 %v1309
    %1722 = vmatprep.subr.bf16.mxu0 0
    %1723 = vmatpush1.bf16.msra.mxu0 %v1310
    %1724 = vmatprep.subr.bf16.mxu0 0
    %1725 = vmatpush1.bf16.msra.mxu0 %v1311
    %1726 = vmatprep.subr.bf16.mxu0 0
    %1727 = vmatpush1.bf16.msra.mxu0 %v1312
    %1728 = vmatprep.subr.bf16.mxu0 0
    %1729 = vmatpush1.bf16.msra.mxu0 %v1313
    %1730 = vmatprep.subr.bf16.mxu0 0
    %1731 = vmatpush1.bf16.msra.mxu0 %v1314
    %1732 = vmatprep.subr.bf16.mxu0 0
    %1733 = vmatpush1.bf16.msra.mxu0 %v1315
    %1734 = vmatprep.subr.bf16.mxu0 0
    %1735 = vmatpush1.bf16.msra.mxu0 %v1316
    %1736 = vmatprep.subr.bf16.mxu0 0
    %1737 = vmatpush1.bf16.msra.mxu0 %v1317
    %1738 = vmatprep.subr.bf16.mxu0 0
    %1739 = vmatpush1.bf16.msra.mxu0 %v1318
    %1740 = vmatprep.subr.bf16.mxu0 0
    %1741 = vmatpush1.bf16.msra.mxu0 %v1319
    %1742 = vmatprep.subr.bf16.mxu0 0
    %1743 = vmatpush1.bf16.msra.mxu0 %v1320
    %1744 = vmatprep.subr.bf16.mxu0 0
    %1745 = vmatpush1.bf16.msra.mxu0 %v1321
    %1746 = vmatprep.mubr.bf16.mxu0 %v108
    %1747 = vmatmul.mubr.bf16.gmra.mrb[0].mxu0 %v107
    %v1748 = vpop.f32.mrb[0].mxu0
    %v1749 = vadd.f32 %v1709, %v1748
    %v1750 = vpop.f32.mrb[0].mxu0
    %v1751 = vpop.f32.mrb[0].mxu0
    %v1752 = vpop.f32.mrb[0].mxu0
    %1753 = vdwg.mxu0
    %1754 = vmatprep.subr.bf16.mxu0 0
    %1755 = vmatpush1.bf16.msra.mxu0 %v1322
    %1756 = vmatprep.subr.bf16.mxu0 0
    %1757 = vmatpush1.bf16.msra.mxu0 %v1323
    %1758 = vmatprep.subr.bf16.mxu0 0
    %1759 = vmatpush1.bf16.msra.mxu0 %v1324
    %1760 = vmatprep.subr.bf16.mxu0 0
    %1761 = vmatpush1.bf16.msra.mxu0 %v1325
    %1762 = vmatprep.subr.bf16.mxu0 0
    %1763 = vmatpush1.bf16.msra.mxu0 %v1326
    %1764 = vmatprep.subr.bf16.mxu0 0
    %1765 = vmatpush1.bf16.msra.mxu0 %v1327
    %1766 = vmatprep.subr.bf16.mxu0 0
    %1767 = vmatpush1.bf16.msra.mxu0 %v1328
    %1768 = vmatprep.subr.bf16.mxu0 0
    %1769 = vmatpush1.bf16.msra.mxu0 %v1329
    %1770 = vmatprep.subr.bf16.mxu0 0
    %1771 = vmatpush1.bf16.msra.mxu0 %v1330
    %1772 = vmatprep.subr.bf16.mxu0 0
    %1773 = vmatpush1.bf16.msra.mxu0 %v1331
    %1774 = vmatprep.subr.bf16.mxu0 0
    %1775 = vmatpush1.bf16.msra.mxu0 %v1332
    %1776 = vmatprep.subr.bf16.mxu0 0
    %1777 = vmatpush1.bf16.msra.mxu0 %v1333
    %1778 = vmatprep.subr.bf16.mxu0 0
    %1779 = vmatpush1.bf16.msra.mxu0 %v1334
    %1780 = vmatprep.subr.bf16.mxu0 0
    %1781 = vmatpush1.bf16.msra.mxu0 %v1335
    %1782 = vmatprep.subr.bf16.mxu0 0
    %1783 = vmatpush1.bf16.msra.mxu0 %v1336
    %1784 = vmatprep.subr.bf16.mxu0 0
    %1785 = vmatpush1.bf16.msra.mxu0 %v1337
    %1786 = vmatprep.mubr.bf16.mxu0 %v110
    %1787 = vmatmul.mubr.bf16.gmra.mrb[0].mxu0 %v109
    %v1788 = vpop.f32.mrb[0].mxu0
    %v1789 = vadd.f32 %v1749, %v1788
    %v1790 = vpop.f32.mrb[0].mxu0
    %v1791 = vpop.f32.mrb[0].mxu0
    %v1792 = vpop.f32.mrb[0].mxu0
    %1793 = vdwg.mxu0
    %1794 = vmatprep.subr.bf16.mxu0 0
    %1795 = vmatpush1.bf16.msra.mxu0 %v1338
    %1796 = vmatprep.subr.bf16.mxu0 0
    %1797 = vmatpush1.bf16.msra.mxu0 %v1339
    %1798 = vmatprep.subr.bf16.mxu0 0
    %1799 = vmatpush1.bf16.msra.mxu0 %v1340
    %1800 = vmatprep.subr.bf16.mxu0 0
    %1801 = vmatpush1.bf16.msra.mxu0 %v1341
    %1802 = vmatprep.subr.bf16.mxu0 0
    %1803 = vmatpush1.bf16.msra.mxu0 %v1342
    %1804 = vmatprep.subr.bf16.mxu0 0
    %1805 = vmatpush1.bf16.msra.mxu0 %v1343
    %1806 = vmatprep.subr.bf16.mxu0 0
    %1807 = vmatpush1.bf16.msra.mxu0 %v1344
    %1808 = vmatprep.subr.bf16.mxu0 0
    %1809 = vmatpush1.bf16.msra.mxu0 %v1345
    %1810 = vmatprep.subr.bf16.mxu0 0
    %1811 = vmatpush1.bf16.msra.mxu0 %v1346
    %1812 = vmatprep.subr.bf16.mxu0 0
    %1813 = vmatpush1.bf16.msra.mxu0 %v1347
    %1814 = vmatprep.subr.bf16.mxu0 0
    %1815 = vmatpush1.bf16.msra.mxu0 %v1348
    %1816 = vmatprep.subr.bf16.mxu0 0
    %1817 = vmatpush1.bf16.msra.mxu0 %v1349
    %1818 = vmatprep.subr.bf16.mxu0 0
    %1819 = vmatpush1.bf16.msra.mxu0 %v1350
    %1820 = vmatprep.subr.bf16.mxu0 0
    %1821 = vmatpush1.bf16.msra.mxu0 %v1351
    %1822 = vmatprep.subr.bf16.mxu0 0
    %1823 = vmatpush1.bf16.msra.mxu0 %v1352
    %1824 = vmatprep.subr.bf16.mxu0 0
    %1825 = vmatpush1.bf16.msra.mxu0 %v1353
    %1826 = vmatprep.mubr.bf16.mxu0 %v112
    %1827 = vmatmul.mubr.bf16.gmra.mrb[0].mxu0 %v111
    %v1828 = vpop.f32.mrb[0].mxu0
    %v1829 = vadd.f32 %v1789, %v1828
    %v1830 = vpop.f32.mrb[0].mxu0
    %v1831 = vpop.f32.mrb[0].mxu0
    %v1832 = vpop.f32.mrb[0].mxu0
    %1833 = vdwg.mxu0
    %1834 = vmatprep.subr.bf16.mxu0 0
    %1835 = vmatpush1.bf16.msra.mxu0 %v1354
    %1836 = vmatprep.subr.bf16.mxu0 0
    %1837 = vmatpush1.bf16.msra.mxu0 %v1355
    %1838 = vmatprep.subr.bf16.mxu0 0
    %1839 = vmatpush1.bf16.msra.mxu0 %v1356
    %1840 = vmatprep.subr.bf16.mxu0 0
    %1841 = vmatpush1.bf16.msra.mxu0 %v1357
    %1842 = vmatprep.subr.bf16.mxu0 0
    %1843 = vmatpush1.bf16.msra.mxu0 %v1358
    %1844 = vmatprep.subr.bf16.mxu0 0
    %1845 = vmatpush1.bf16.msra.mxu0 %v1359
    %1846 = vmatprep.subr.bf16.mxu0 0
    %1847 = vmatpush1.bf16.msra.mxu0 %v1360
    %1848 = vmatprep.subr.bf16.mxu0 0
    %1849 = vmatpush1.bf16.msra.mxu0 %v1361
    %1850 = vmatprep.subr.bf16.mxu0 0
    %1851 = vmatpush1.bf16.msra.mxu0 %v1362
    %1852 = vmatprep.subr.bf16.mxu0 0
    %1853 = vmatpush1.bf16.msra.mxu0 %v1363
    %1854 = vmatprep.subr.bf16.mxu0 0
    %1855 = vmatpush1.bf16.msra.mxu0 %v1364
    %1856 = vmatprep.subr.bf16.mxu0 0
    %1857 = vmatpush1.bf16.msra.mxu0 %v1365
    %1858 = vmatprep.subr.bf16.mxu0 0
    %1859 = vmatpush1.bf16.msra.mxu0 %v1366
    %1860 = vmatprep.subr.bf16.mxu0 0
    %1861 = vmatpush1.bf16.msra.mxu0 %v1367
    %1862 = vmatprep.subr.bf16.mxu0 0
    %1863 = vmatpush1.bf16.msra.mxu0 %v1368
    %1864 = vmatprep.subr.bf16.mxu0 0
    %1865 = vmatpush1.bf16.msra.mxu0 %v1369
    %1866 = vmatprep.mubr.bf16.mxu0 %v114
    %1867 = vmatmul.mubr.bf16.gmra.mrb[0].mxu0 %v113
    %v1868 = vpop.f32.mrb[0].mxu0
    %v1869 = vadd.f32 %v1829, %v1868
    %v1870 = vpop.f32.mrb[0].mxu0
    %v1871 = vpop.f32.mrb[0].mxu0
    %v1872 = vpop.f32.mrb[0].mxu0
    %1873 = vdwg.mxu0
    %1874 = vmatprep.subr.bf16.mxu0 0
    %1875 = vmatpush1.bf16.msra.mxu0 %v1370
    %1876 = vmatprep.subr.bf16.mxu0 0
    %1877 = vmatpush1.bf16.msra.mxu0 %v1371
    %1878 = vmatprep.subr.bf16.mxu0 0
    %1879 = vmatpush1.bf16.msra.mxu0 %v1372
    %1880 = vmatprep.subr.bf16.mxu0 0
    %1881 = vmatpush1.bf16.msra.mxu0 %v1373
    %1882 = vmatprep.subr.bf16.mxu0 0
    %1883 = vmatpush1.bf16.msra.mxu0 %v1374
    %1884 = vmatprep.subr.bf16.mxu0 0
    %1885 = vmatpush1.bf16.msra.mxu0 %v1375
    %1886 = vmatprep.subr.bf16.mxu0 0
    %1887 = vmatpush1.bf16.msra.mxu0 %v1376
    %1888 = vmatprep.subr.bf16.mxu0 0
    %1889 = vmatpush1.bf16.msra.mxu0 %v1377
    %1890 = vmatprep.subr.bf16.mxu0 0
    %1891 = vmatpush1.bf16.msra.mxu0 %v1378
    %1892 = vmatprep.subr.bf16.mxu0 0
    %1893 = vmatpush1.bf16.msra.mxu0 %v1379
    %1894 = vmatprep.subr.bf16.mxu0 0
    %1895 = vmatpush1.bf16.msra.mxu0 %v1380
    %1896 = vmatprep.subr.bf16.mxu0 0
    %1897 = vmatpush1.bf16.msra.mxu0 %v1381
    %1898 = vmatprep.subr.bf16.mxu0 0
    %1899 = vmatpush1.bf16.msra.mxu0 %v1382
    %1900 = vmatprep.subr.bf16.mxu0 0
    %1901 = vmatpush1.bf16.msra.mxu0 %v1383
    %1902 = vmatprep.subr.bf16.mxu0 0
    %1903 = vmatpush1.bf16.msra.mxu0 %v1384
    %1904 = vmatprep.subr.bf16.mxu0 0
    %1905 = vmatpush1.bf16.msra.mxu0 %v1385
    %1906 = vmatprep.mubr.bf16.mxu0 %v116
    %1907 = vmatmul.mubr.bf16.gmra.mrb[0].mxu0 %v115
    %v1908 = vpop.f32.mrb[0].mxu0
    %v1909 = vadd.f32 %v1869, %v1908
    %v1910 = vpop.f32.mrb[0].mxu0
    %v1911 = vpop.f32.mrb[0].mxu0
    %v1912 = vpop.f32.mrb[0].mxu0
    %1913 = vdwg.mxu0
    %1914 = vmatprep.subr.bf16.mxu0 0
    %1915 = vmatpush1.bf16.msra.mxu0 %v1386
    %1916 = vmatprep.subr.bf16.mxu0 0
    %1917 = vmatpush1.bf16.msra.mxu0 %v1387
    %1918 = vmatprep.subr.bf16.mxu0 0
    %1919 = vmatpush1.bf16.msra.mxu0 %v1388
    %1920 = vmatprep.subr.bf16.mxu0 0
    %1921 = vmatpush1.bf16.msra.mxu0 %v1389
    %1922 = vmatprep.subr.bf16.mxu0 0
    %1923 = vmatpush1.bf16.msra.mxu0 %v1390
    %1924 = vmatprep.subr.bf16.mxu0 0
    %1925 = vmatpush1.bf16.msra.mxu0 %v1391
    %1926 = vmatprep.subr.bf16.mxu0 0
    %1927 = vmatpush1.bf16.msra.mxu0 %v1392
    %1928 = vmatprep.subr.bf16.mxu0 0
    %1929 = vmatpush1.bf16.msra.mxu0 %v1393
    %1930 = vmatprep.subr.bf16.mxu0 0
    %1931 = vmatpush1.bf16.msra.mxu0 %v1394
    %1932 = vmatprep.subr.bf16.mxu0 0
    %1933 = vmatpush1.bf16.msra.mxu0 %v1395
    %1934 = vmatprep.subr.bf16.mxu0 0
    %1935 = vmatpush1.bf16.msra.mxu0 %v1396
    %1936 = vmatprep.subr.bf16.mxu0 0
    %1937 = vmatpush1.bf16.msra.mxu0 %v1397
    %1938 = vmatprep.subr.bf16.mxu0 0
    %1939 = vmatpush1.bf16.msra.mxu0 %v1398
    %1940 = vmatprep.subr.bf16.mxu0 0
    %1941 = vmatpush1.bf16.msra.mxu0 %v1399
    %1942 = vmatprep.subr.bf16.mxu0 0
    %1943 = vmatpush1.bf16.msra.mxu0 %v1400
    %1944 = vmatprep.subr.bf16.mxu0 0
    %1945 = vmatpush1.bf16.msra.mxu0 %v1401
    %1946 = vmatprep.mubr.bf16.mxu0 %v118
    %1947 = vmatmul.mubr.bf16.gmra.mrb[0].mxu0 %v117
    %v1948 = vpop.f32.mrb[0].mxu0
    %v1949 = vadd.f32 %v1909, %v1948
    %v1950 = vpop.f32.mrb[0].mxu0
    %v1951 = vpop.f32.mrb[0].mxu0
    %v1952 = vpop.f32.mrb[0].mxu0
    %1953 = vdwg.mxu0
    %1954 = vmatprep.subr.bf16.mxu0 0
    %1955 = vmatpush1.bf16.msra.mxu0 %v1402
    %1956 = vmatprep.subr.bf16.mxu0 0
    %1957 = vmatpush1.bf16.msra.mxu0 %v1403
    %1958 = vmatprep.subr.bf16.mxu0 0
    %1959 = vmatpush1.bf16.msra.mxu0 %v1404
    %1960 = vmatprep.subr.bf16.mxu0 0
    %1961 = vmatpush1.bf16.msra.mxu0 %v1405
    %1962 = vmatprep.subr.bf16.mxu0 0
    %1963 = vmatpush1.bf16.msra.mxu0 %v1406
    %1964 = vmatprep.subr.bf16.mxu0 0
    %1965 = vmatpush1.bf16.msra.mxu0 %v1407
    %1966 = vmatprep.subr.bf16.mxu0 0
    %1967 = vmatpush1.bf16.msra.mxu0 %v1408
    %1968 = vmatprep.subr.bf16.mxu0 0
    %1969 = vmatpush1.bf16.msra.mxu0 %v1409
    %1970 = vmatprep.subr.bf16.mxu0 0
    %1971 = vmatpush1.bf16.msra.mxu0 %v1410
    %1972 = vmatprep.subr.bf16.mxu0 0
    %1973 = vmatpush1.bf16.msra.mxu0 %v1411
    %1974 = vmatprep.subr.bf16.mxu0 0
    %1975 = vmatpush1.bf16.msra.mxu0 %v1412
    %1976 = vmatprep.subr.bf16.mxu0 0
    %1977 = vmatpush1.bf16.msra.mxu0 %v1413
    %1978 = vmatprep.subr.bf16.mxu0 0
    %1979 = vmatpush1.bf16.msra.mxu0 %v1414
    %1980 = vmatprep.subr.bf16.mxu0 0
    %1981 = vmatpush1.bf16.msra.mxu0 %v1415
    %1982 = vmatprep.subr.bf16.mxu0 0
    %1983 = vmatpush1.bf16.msra.mxu0 %v1416
    %1984 = vmatprep.subr.bf16.mxu0 0
    %1985 = vmatpush1.bf16.msra.mxu0 %v1417
    %1986 = vmatprep.mubr.bf16.mxu0 %v120
    %1987 = vmatmul.mubr.bf16.gmra.mrb[0].mxu0 %v119
    %v1988 = vpop.f32.mrb[0].mxu0
    %v1989 = vadd.f32 %v1949, %v1988
    %v1990 = vpop.f32.mrb[0].mxu0
    %v1991 = vpop.f32.mrb[0].mxu0
    %v1992 = vpop.f32.mrb[0].mxu0
    %1993 = vdwg.mxu0
    %1994 = vmatprep.subr.bf16.mxu0 0
    %1995 = vmatpush1.bf16.msra.mxu0 %v1418
    %1996 = vmatprep.subr.bf16.mxu0 0
    %1997 = vmatpush1.bf16.msra.mxu0 %v1419
    %1998 = vmatprep.subr.bf16.mxu0 0
    %1999 = vmatpush1.bf16.msra.mxu0 %v1420
    %2000 = vmatprep.subr.bf16.mxu0 0
    %2001 = vmatpush1.bf16.msra.mxu0 %v1421
    %2002 = vmatprep.subr.bf16.mxu0 0
    %2003 = vmatpush1.bf16.msra.mxu0 %v1422
    %2004 = vmatprep.subr.bf16.mxu0 0
    %2005 = vmatpush1.bf16.msra.mxu0 %v1423
    %2006 = vmatprep.subr.bf16.mxu0 0
    %2007 = vmatpush1.bf16.msra.mxu0 %v1424
    %2008 = vmatprep.subr.bf16.mxu0 0
    %2009 = vmatpush1.bf16.msra.mxu0 %v1425
    %2010 = vmatprep.subr.bf16.mxu0 0
    %2011 = vmatpush1.bf16.msra.mxu0 %v1426
    %2012 = vmatprep.subr.bf16.mxu0 0
    %2013 = vmatpush1.bf16.msra.mxu0 %v1427
    %2014 = vmatprep.subr.bf16.mxu0 0
    %2015 = vmatpush1.bf16.msra.mxu0 %v1428
    %2016 = vmatprep.subr.bf16.mxu0 0
    %2017 = vmatpush1.bf16.msra.mxu0 %v1429
    %2018 = vmatprep.subr.bf16.mxu0 0
    %2019 = vmatpush1.bf16.msra.mxu0 %v1430
    %2020 = vmatprep.subr.bf16.mxu0 0
    %2021 = vmatpush1.bf16.msra.mxu0 %v1431
    %2022 = vmatprep.subr.bf16.mxu0 0
    %2023 = vmatpush1.bf16.msra.mxu0 %v1432
    %2024 = vmatprep.subr.bf16.mxu0 0
    %2025 = vmatpush1.bf16.msra.mxu0 %v1433
    %2026 = vmatprep.mubr.bf16.mxu0 %v122
    %2027 = vmatmul.mubr.bf16.gmra.mrb[0].mxu0 %v121
    %v2028 = vpop.f32.mrb[0].mxu0
    %v2029 = vadd.f32 %v1989, %v2028
    %v2030 = vpop.f32.mrb[0].mxu0
    %v2031 = vpop.f32.mrb[0].mxu0
    %v2032 = vpop.f32.mrb[0].mxu0
    %2033 = vdwg.mxu0
    %2034 = vmatprep.subr.bf16.mxu0 0
    %2035 = vmatpush1.bf16.msra.mxu0 %v1434
    %2036 = vmatprep.subr.bf16.mxu0 0
    %2037 = vmatpush1.bf16.msra.mxu0 %v1435
    %2038 = vmatprep.subr.bf16.mxu0 0
    %2039 = vmatpush1.bf16.msra.mxu0 %v1436
    %2040 = vmatprep.subr.bf16.mxu0 0
    %2041 = vmatpush1.bf16.msra.mxu0 %v1437
    %2042 = vmatprep.subr.bf16.mxu0 0
    %2043 = vmatpush1.bf16.msra.mxu0 %v1438
    %2044 = vmatprep.subr.bf16.mxu0 0
    %2045 = vmatpush1.bf16.msra.mxu0 %v1439
    %2046 = vmatprep.subr.bf16.mxu0 0
    %2047 = vmatpush1.bf16.msra.mxu0 %v1440
    %2048 = vmatprep.subr.bf16.mxu0 0
    %2049 = vmatpush1.bf16.msra.mxu0 %v1441
    %2050 = vmatprep.subr.bf16.mxu0 0
    %2051 = vmatpush1.bf16.msra.mxu0 %v1442
    %2052 = vmatprep.subr.bf16.mxu0 0
    %2053 = vmatpush1.bf16.msra.mxu0 %v1443
    %2054 = vmatprep.subr.bf16.mxu0 0
    %2055 = vmatpush1.bf16.msra.mxu0 %v1444
    %2056 = vmatprep.subr.bf16.mxu0 0
    %2057 = vmatpush1.bf16.msra.mxu0 %v1445
    %2058 = vmatprep.subr.bf16.mxu0 0
    %2059 = vmatpush1.bf16.msra.mxu0 %v1446
    %2060 = vmatprep.subr.bf16.mxu0 0
    %2061 = vmatpush1.bf16.msra.mxu0 %v1447
    %2062 = vmatprep.subr.bf16.mxu0 0
    %2063 = vmatpush1.bf16.msra.mxu0 %v1448
    %2064 = vmatprep.subr.bf16.mxu0 0
    %2065 = vmatpush1.bf16.msra.mxu0 %v1449
    %2066 = vmatprep.mubr.bf16.mxu0 %v124
    %2067 = vmatmul.mubr.bf16.gmra.mrb[0].mxu0 %v123
    %v2068 = vpop.f32.mrb[0].mxu0
    %v2069 = vadd.f32 %v2029, %v2068
    %v2070 = vpop.f32.mrb[0].mxu0
    %v2071 = vpop.f32.mrb[0].mxu0
    %v2072 = vpop.f32.mrb[0].mxu0
    %2073 = vdwg.mxu0
    %2074 = vmatprep.subr.bf16.mxu0 0
    %2075 = vmatpush1.bf16.msra.mxu0 %v1450
    %2076 = vmatprep.subr.bf16.mxu0 0
    %2077 = vmatpush1.bf16.msra.mxu0 %v1451
    %2078 = vmatprep.subr.bf16.mxu0 0
    %2079 = vmatpush1.bf16.msra.mxu0 %v1452
    %2080 = vmatprep.subr.bf16.mxu0 0
    %2081 = vmatpush1.bf16.msra.mxu0 %v1453
    %2082 = vmatprep.subr.bf16.mxu0 0
    %2083 = vmatpush1.bf16.msra.mxu0 %v1454
    %2084 = vmatprep.subr.bf16.mxu0 0
    %2085 = vmatpush1.bf16.msra.mxu0 %v1455
    %2086 = vmatprep.subr.bf16.mxu0 0
    %2087 = vmatpush1.bf16.msra.mxu0 %v1456
    %2088 = vmatprep.subr.bf16.mxu0 0
    %2089 = vmatpush1.bf16.msra.mxu0 %v1457
    %2090 = vmatprep.subr.bf16.mxu0 0
    %2091 = vmatpush1.bf16.msra.mxu0 %v1458
    %2092 = vmatprep.subr.bf16.mxu0 0
    %2093 = vmatpush1.bf16.msra.mxu0 %v1459
    %2094 = vmatprep.subr.bf16.mxu0 0
    %2095 = vmatpush1.bf16.msra.mxu0 %v1460
    %2096 = vmatprep.subr.bf16.mxu0 0
    %2097 = vmatpush1.bf16.msra.mxu0 %v1461
    %2098 = vmatprep.subr.bf16.mxu0 0
    %2099 = vmatpush1.bf16.msra.mxu0 %v1462
    %2100 = vmatprep.subr.bf16.mxu0 0
    %2101 = vmatpush1.bf16.msra.mxu0 %v1463
    %2102 = vmatprep.subr.bf16.mxu0 0
    %2103 = vmatpush1.bf16.msra.mxu0 %v1464
    %2104 = vmatprep.subr.bf16.mxu0 0
    %2105 = vmatpush1.bf16.msra.mxu0 %v1465
    %2106 = vmatprep.mubr.bf16.mxu0 %v126
    %2107 = vmatmul.mubr.bf16.gmra.mrb[0].mxu0 %v125
    %v2108 = vpop.f32.mrb[0].mxu0
    %v2109 = vadd.f32 %v2069, %v2108
    %v2110 = vpop.f32.mrb[0].mxu0
    %v2111 = vpop.f32.mrb[0].mxu0
    %v2112 = vpop.f32.mrb[0].mxu0
    %2113 = vdwg.mxu0
    %2114 = vmatprep.subr.bf16.mxu0 0
    %2115 = vmatpush1.bf16.msra.mxu0 %v1466
    %2116 = vmatprep.subr.bf16.mxu0 0
    %2117 = vmatpush1.bf16.msra.mxu0 %v1467
    %2118 = vmatprep.subr.bf16.mxu0 0
    %2119 = vmatpush1.bf16.msra.mxu0 %v1468
    %2120 = vmatprep.subr.bf16.mxu0 0
    %2121 = vmatpush1.bf16.msra.mxu0 %v1469
    %2122 = vmatprep.subr.bf16.mxu0 0
    %2123 = vmatpush1.bf16.msra.mxu0 %v1470
    %2124 = vmatprep.subr.bf16.mxu0 0
    %2125 = vmatpush1.bf16.msra.mxu0 %v1471
    %2126 = vmatprep.subr.bf16.mxu0 0
    %2127 = vmatpush1.bf16.msra.mxu0 %v1472
    %2128 = vmatprep.subr.bf16.mxu0 0
    %2129 = vmatpush1.bf16.msra.mxu0 %v1473
    %2130 = vmatprep.subr.bf16.mxu0 0
    %2131 = vmatpush1.bf16.msra.mxu0 %v1474
    %2132 = vmatprep.subr.bf16.mxu0 0
    %2133 = vmatpush1.bf16.msra.mxu0 %v1475
    %2134 = vmatprep.subr.bf16.mxu0 0
    %2135 = vmatpush1.bf16.msra.mxu0 %v1476
    %2136 = vmatprep.subr.bf16.mxu0 0
    %2137 = vmatpush1.bf16.msra.mxu0 %v1477
    %2138 = vmatprep.subr.bf16.mxu0 0
    %2139 = vmatpush1.bf16.msra.mxu0 %v1478
    %2140 = vmatprep.subr.bf16.mxu0 0
    %2141 = vmatpush1.bf16.msra.mxu0 %v1479
    %2142 = vmatprep.subr.bf16.mxu0 0
    %2143 = vmatpush1.bf16.msra.mxu0 %v1480
    %2144 = vmatprep.subr.bf16.mxu0 0
    %2145 = vmatpush1.bf16.msra.mxu0 %v1481
    %2146 = vmatprep.mubr.bf16.mxu0 %v128
    %2147 = vmatmul.mubr.bf16.gmra.mrb[0].mxu0 %v127
    %v2148 = vpop.f32.mrb[0].mxu0
    %v2149 = vadd.f32 %v2109, %v2148
    %v2150 = vpop.f32.mrb[0].mxu0
    %v2151 = vpop.f32.mrb[0].mxu0
    %v2152 = vpop.f32.mrb[0].mxu0
    %2153 = vdwg.mxu0
    %v2154 = vld [vmem:[%s4] sm:$0x1]
    %v2156 = vlaneseq
    %v2157 = vshrl.u32 %v2156, 7
    %v2158 = vsub.s32 0, %v2157
    %v2159 = vrot.slane %v2154, %v2158
    %v2161 = vadd.f32 %v2149, %v2159
    %v2162 = vmax.f32 %v2161, 0.0
    %v2163 = vpack.c.bf16 %v2162, %v2162
    %v2164 = vld [vmem:[#allocation8] sm:$0xff]
    %v2165 = vld [vmem:[#allocation8 + $0x8] sm:$0xff]
    %v2166 = vld [vmem:[#allocation8 + $0x10] sm:$0xff]
    %v2167 = vld [vmem:[#allocation8 + $0x18] sm:$0xff]
    %v2168 = vld [vmem:[#allocation8 + $0x20] sm:$0xff]
    %v2169 = vld [vmem:[#allocation8 + $0x28] sm:$0xff]
    %v2170 = vld [vmem:[#allocation8 + $0x30] sm:$0xff]
    %v2171 = vld [vmem:[#allocation8 + $0x38] sm:$0xff]
    %v2172 = vld [vmem:[#allocation8 + $0x40] sm:$0xff]
    %v2173 = vld [vmem:[#allocation8 + $0x48] sm:$0xff]
    %v2174 = vld [vmem:[#allocation8 + $0x50] sm:$0xff]
    %v2175 = vld [vmem:[#allocation8 + $0x58] sm:$0xff]
    %v2176 = vld [vmem:[#allocation8 + $0x60] sm:$0xff]
    %v2177 = vld [vmem:[#allocation8 + $0x68] sm:$0xff]
    %v2178 = vld [vmem:[#allocation8 + $0x70] sm:$0xff]
    %v2179 = vld [vmem:[#allocation8 + $0x78] sm:$0xff]
    %v2180 = vld [vmem:[#allocation8 + $0x80] sm:$0xff]
    %v2181 = vld [vmem:[#allocation8 + $0x88] sm:$0xff]
    %v2182 = vld [vmem:[#allocation8 + $0x90] sm:$0xff]
    %v2183 = vld [vmem:[#allocation8 + $0x98] sm:$0xff]
    %v2184 = vld [vmem:[#allocation8 + $0xa0] sm:$0xff]
    %v2185 = vld [vmem:[#allocation8 + $0xa8] sm:$0xff]
    %v2186 = vld [vmem:[#allocation8 + $0xb0] sm:$0xff]
    %v2187 = vld [vmem:[#allocation8 + $0xb8] sm:$0xff]
    %v2188 = vld [vmem:[#allocation8 + $0xc0] sm:$0xff]
    %v2189 = vld [vmem:[#allocation8 + $0xc8] sm:$0xff]
    %v2190 = vld [vmem:[#allocation8 + $0xd0] sm:$0xff]
    %v2191 = vld [vmem:[#allocation8 + $0xd8] sm:$0xff]
    %v2192 = vld [vmem:[#allocation8 + $0xe0] sm:$0xff]
    %v2193 = vld [vmem:[#allocation8 + $0xe8] sm:$0xff]
    %v2194 = vld [vmem:[#allocation8 + $0xf0] sm:$0xff]
    %v2195 = vld [vmem:[#allocation8 + $0xf8] sm:$0xff]
    %v2196 = vld [vmem:[#allocation8 + $0x100] sm:$0xff]
    %v2197 = vld [vmem:[#allocation8 + $0x108] sm:$0xff]
    %v2198 = vld [vmem:[#allocation8 + $0x110] sm:$0xff]
    %v2199 = vld [vmem:[#allocation8 + $0x118] sm:$0xff]
    %v2200 = vld [vmem:[#allocation8 + $0x120] sm:$0xff]
    %v2201 = vld [vmem:[#allocation8 + $0x128] sm:$0xff]
    %v2202 = vld [vmem:[#allocation8 + $0x130] sm:$0xff]
    %v2203 = vld [vmem:[#allocation8 + $0x138] sm:$0xff]
    %v2204 = vld [vmem:[#allocation8 + $0x140] sm:$0xff]
    %v2205 = vld [vmem:[#allocation8 + $0x148] sm:$0xff]
    %v2206 = vld [vmem:[#allocation8 + $0x150] sm:$0xff]
    %v2207 = vld [vmem:[#allocation8 + $0x158] sm:$0xff]
    %v2208 = vld [vmem:[#allocation8 + $0x160] sm:$0xff]
    %v2209 = vld [vmem:[#allocation8 + $0x168] sm:$0xff]
    %v2210 = vld [vmem:[#allocation8 + $0x170] sm:$0xff]
    %v2211 = vld [vmem:[#allocation8 + $0x178] sm:$0xff]
    %v2212 = vld [vmem:[#allocation8 + $0x180] sm:$0xff]
    %v2213 = vld [vmem:[#allocation8 + $0x188] sm:$0xff]
    %v2214 = vld [vmem:[#allocation8 + $0x190] sm:$0xff]
    %v2215 = vld [vmem:[#allocation8 + $0x198] sm:$0xff]
    %v2216 = vld [vmem:[#allocation8 + $0x1a0] sm:$0xff]
    %v2217 = vld [vmem:[#allocation8 + $0x1a8] sm:$0xff]
    %v2218 = vld [vmem:[#allocation8 + $0x1b0] sm:$0xff]
    %v2219 = vld [vmem:[#allocation8 + $0x1b8] sm:$0xff]
    %v2220 = vld [vmem:[#allocation8 + $0x1c0] sm:$0xff]
    %v2221 = vld [vmem:[#allocation8 + $0x1c8] sm:$0xff]
    %v2222 = vld [vmem:[#allocation8 + $0x1d0] sm:$0xff]
    %v2223 = vld [vmem:[#allocation8 + $0x1d8] sm:$0xff]
    %v2224 = vld [vmem:[#allocation8 + $0x1e0] sm:$0xff]
    %v2225 = vld [vmem:[#allocation8 + $0x1e8] sm:$0xff]
    %v2226 = vld [vmem:[#allocation8 + $0x1f0] sm:$0xff]
    %v2227 = vld [vmem:[#allocation8 + $0x1f8] sm:$0xff]
    %v2228 = vld [vmem:[#allocation8 + $0x200] sm:$0xff]
    %v2229 = vld [vmem:[#allocation8 + $0x208] sm:$0xff]
    %v2230 = vld [vmem:[#allocation8 + $0x210] sm:$0xff]
    %v2231 = vld [vmem:[#allocation8 + $0x218] sm:$0xff]
    %v2232 = vld [vmem:[#allocation8 + $0x220] sm:$0xff]
    %v2233 = vld [vmem:[#allocation8 + $0x228] sm:$0xff]
    %v2234 = vld [vmem:[#allocation8 + $0x230] sm:$0xff]
    %v2235 = vld [vmem:[#allocation8 + $0x238] sm:$0xff]
    %v2236 = vld [vmem:[#allocation8 + $0x240] sm:$0xff]
    %v2237 = vld [vmem:[#allocation8 + $0x248] sm:$0xff]
    %v2238 = vld [vmem:[#allocation8 + $0x250] sm:$0xff]
    %v2239 = vld [vmem:[#allocation8 + $0x258] sm:$0xff]
    %v2240 = vld [vmem:[#allocation8 + $0x260] sm:$0xff]
    %v2241 = vld [vmem:[#allocation8 + $0x268] sm:$0xff]
    %v2242 = vld [vmem:[#allocation8 + $0x270] sm:$0xff]
    %v2243 = vld [vmem:[#allocation8 + $0x278] sm:$0xff]
    %v2244 = vld [vmem:[#allocation8 + $0x280] sm:$0xff]
    %v2245 = vld [vmem:[#allocation8 + $0x288] sm:$0xff]
    %v2246 = vld [vmem:[#allocation8 + $0x290] sm:$0xff]
    %v2247 = vld [vmem:[#allocation8 + $0x298] sm:$0xff]
    %v2248 = vld [vmem:[#allocation8 + $0x2a0] sm:$0xff]
    %v2249 = vld [vmem:[#allocation8 + $0x2a8] sm:$0xff]
    %v2250 = vld [vmem:[#allocation8 + $0x2b0] sm:$0xff]
    %v2251 = vld [vmem:[#allocation8 + $0x2b8] sm:$0xff]
    %v2252 = vld [vmem:[#allocation8 + $0x2c0] sm:$0xff]
    %v2253 = vld [vmem:[#allocation8 + $0x2c8] sm:$0xff]
    %v2254 = vld [vmem:[#allocation8 + $0x2d0] sm:$0xff]
    %v2255 = vld [vmem:[#allocation8 + $0x2d8] sm:$0xff]
    %v2256 = vld [vmem:[#allocation8 + $0x2e0] sm:$0xff]
    %v2257 = vld [vmem:[#allocation8 + $0x2e8] sm:$0xff]
    %v2258 = vld [vmem:[#allocation8 + $0x2f0] sm:$0xff]
    %v2259 = vld [vmem:[#allocation8 + $0x2f8] sm:$0xff]
    %v2260 = vld [vmem:[#allocation8 + $0x300] sm:$0xff]
    %v2261 = vld [vmem:[#allocation8 + $0x308] sm:$0xff]
    %v2262 = vld [vmem:[#allocation8 + $0x310] sm:$0xff]
    %v2263 = vld [vmem:[#allocation8 + $0x318] sm:$0xff]
    %v2264 = vld [vmem:[#allocation8 + $0x320] sm:$0xff]
    %v2265 = vld [vmem:[#allocation8 + $0x328] sm:$0xff]
    %v2266 = vld [vmem:[#allocation8 + $0x330] sm:$0xff]
    %v2267 = vld [vmem:[#allocation8 + $0x338] sm:$0xff]
    %v2268 = vld [vmem:[#allocation8 + $0x340] sm:$0xff]
    %v2269 = vld [vmem:[#allocation8 + $0x348] sm:$0xff]
    %v2270 = vld [vmem:[#allocation8 + $0x350] sm:$0xff]
    %v2271 = vld [vmem:[#allocation8 + $0x358] sm:$0xff]
    %v2272 = vld [vmem:[#allocation8 + $0x360] sm:$0xff]
    %v2273 = vld [vmem:[#allocation8 + $0x368] sm:$0xff]
    %v2274 = vld [vmem:[#allocation8 + $0x370] sm:$0xff]
    %v2275 = vld [vmem:[#allocation8 + $0x378] sm:$0xff]
    %v2276 = vld [vmem:[#allocation8 + $0x380] sm:$0xff]
    %v2277 = vld [vmem:[#allocation8 + $0x388] sm:$0xff]
    %v2278 = vld [vmem:[#allocation8 + $0x390] sm:$0xff]
    %v2279 = vld [vmem:[#allocation8 + $0x398] sm:$0xff]
    %v2280 = vld [vmem:[#allocation8 + $0x3a0] sm:$0xff]
    %v2281 = vld [vmem:[#allocation8 + $0x3a8] sm:$0xff]
    %v2282 = vld [vmem:[#allocation8 + $0x3b0] sm:$0xff]
    %v2283 = vld [vmem:[#allocation8 + $0x3b8] sm:$0xff]
    %v2284 = vld [vmem:[#allocation8 + $0x3c0] sm:$0xff]
    %v2285 = vld [vmem:[#allocation8 + $0x3c8] sm:$0xff]
    %v2286 = vld [vmem:[#allocation8 + $0x3d0] sm:$0xff]
    %v2287 = vld [vmem:[#allocation8 + $0x3d8] sm:$0xff]
    %v2288 = vld [vmem:[#allocation8 + $0x3e0] sm:$0xff]
    %v2289 = vld [vmem:[#allocation8 + $0x3e8] sm:$0xff]
    %v2290 = vld [vmem:[#allocation8 + $0x3f0] sm:$0xff]
    %v2291 = vld [vmem:[#allocation8 + $0x3f8] sm:$0xff]
    %v2292 = vld [vmem:[#allocation8 + $0x400] sm:$0xff]
    %v2293 = vld [vmem:[#allocation8 + $0x408] sm:$0xff]
    %v2294 = vld [vmem:[#allocation8 + $0x410] sm:$0xff]
    %v2295 = vld [vmem:[#allocation8 + $0x418] sm:$0xff]
    %v2296 = vld [vmem:[#allocation8 + $0x420] sm:$0xff]
    %v2297 = vld [vmem:[#allocation8 + $0x428] sm:$0xff]
    %v2298 = vld [vmem:[#allocation8 + $0x430] sm:$0xff]
    %v2299 = vld [vmem:[#allocation8 + $0x438] sm:$0xff]
    %v2300 = vld [vmem:[#allocation8 + $0x440] sm:$0xff]
    %v2301 = vld [vmem:[#allocation8 + $0x448] sm:$0xff]
    %v2302 = vld [vmem:[#allocation8 + $0x450] sm:$0xff]
    %v2303 = vld [vmem:[#allocation8 + $0x458] sm:$0xff]
    %v2304 = vld [vmem:[#allocation8 + $0x460] sm:$0xff]
    %v2305 = vld [vmem:[#allocation8 + $0x468] sm:$0xff]
    %v2306 = vld [vmem:[#allocation8 + $0x470] sm:$0xff]
    %v2307 = vld [vmem:[#allocation8 + $0x478] sm:$0xff]
    %v2308 = vld [vmem:[#allocation8 + $0x480] sm:$0xff]
    %v2309 = vld [vmem:[#allocation8 + $0x488] sm:$0xff]
    %v2310 = vld [vmem:[#allocation8 + $0x490] sm:$0xff]
    %v2311 = vld [vmem:[#allocation8 + $0x498] sm:$0xff]
    %v2312 = vld [vmem:[#allocation8 + $0x4a0] sm:$0xff]
    %v2313 = vld [vmem:[#allocation8 + $0x4a8] sm:$0xff]
    %v2314 = vld [vmem:[#allocation8 + $0x4b0] sm:$0xff]
    %v2315 = vld [vmem:[#allocation8 + $0x4b8] sm:$0xff]
    %v2316 = vld [vmem:[#allocation8 + $0x4c0] sm:$0xff]
    %v2317 = vld [vmem:[#allocation8 + $0x4c8] sm:$0xff]
    %v2318 = vld [vmem:[#allocation8 + $0x4d0] sm:$0xff]
    %v2319 = vld [vmem:[#allocation8 + $0x4d8] sm:$0xff]
    %v2320 = vld [vmem:[#allocation8 + $0x4e0] sm:$0xff]
    %v2321 = vld [vmem:[#allocation8 + $0x4e8] sm:$0xff]
    %v2322 = vld [vmem:[#allocation8 + $0x4f0] sm:$0xff]
    %v2323 = vld [vmem:[#allocation8 + $0x4f8] sm:$0xff]
    %v2324 = vld [vmem:[#allocation8 + $0x500] sm:$0xff]
    %v2325 = vld [vmem:[#allocation8 + $0x508] sm:$0xff]
    %v2326 = vld [vmem:[#allocation8 + $0x510] sm:$0xff]
    %v2327 = vld [vmem:[#allocation8 + $0x518] sm:$0xff]
    %v2328 = vld [vmem:[#allocation8 + $0x520] sm:$0xff]
    %v2329 = vld [vmem:[#allocation8 + $0x528] sm:$0xff]
    %v2330 = vld [vmem:[#allocation8 + $0x530] sm:$0xff]
    %v2331 = vld [vmem:[#allocation8 + $0x538] sm:$0xff]
    %v2332 = vld [vmem:[#allocation8 + $0x540] sm:$0xff]
    %v2333 = vld [vmem:[#allocation8 + $0x548] sm:$0xff]
    %v2334 = vld [vmem:[#allocation8 + $0x550] sm:$0xff]
    %v2335 = vld [vmem:[#allocation8 + $0x558] sm:$0xff]
    %v2336 = vld [vmem:[#allocation8 + $0x560] sm:$0xff]
    %v2337 = vld [vmem:[#allocation8 + $0x568] sm:$0xff]
    %v2338 = vld [vmem:[#allocation8 + $0x570] sm:$0xff]
    %v2339 = vld [vmem:[#allocation8 + $0x578] sm:$0xff]
    %v2340 = vld [vmem:[#allocation8 + $0x580] sm:$0xff]
    %v2341 = vld [vmem:[#allocation8 + $0x588] sm:$0xff]
    %v2342 = vld [vmem:[#allocation8 + $0x590] sm:$0xff]
    %v2343 = vld [vmem:[#allocation8 + $0x598] sm:$0xff]
    %v2344 = vld [vmem:[#allocation8 + $0x5a0] sm:$0xff]
    %v2345 = vld [vmem:[#allocation8 + $0x5a8] sm:$0xff]
    %v2346 = vld [vmem:[#allocation8 + $0x5b0] sm:$0xff]
    %v2347 = vld [vmem:[#allocation8 + $0x5b8] sm:$0xff]
    %v2348 = vld [vmem:[#allocation8 + $0x5c0] sm:$0xff]
    %v2349 = vld [vmem:[#allocation8 + $0x5c8] sm:$0xff]
    %v2350 = vld [vmem:[#allocation8 + $0x5d0] sm:$0xff]
    %v2351 = vld [vmem:[#allocation8 + $0x5d8] sm:$0xff]
    %v2352 = vld [vmem:[#allocation8 + $0x5e0] sm:$0xff]
    %v2353 = vld [vmem:[#allocation8 + $0x5e8] sm:$0xff]
    %v2354 = vld [vmem:[#allocation8 + $0x5f0] sm:$0xff]
    %v2355 = vld [vmem:[#allocation8 + $0x5f8] sm:$0xff]
    %v2356 = vld [vmem:[#allocation9] sm:$0xff]
    %v2357 = vld [vmem:[#allocation9 + $0x8] sm:$0xff]
    %v2358 = vld [vmem:[#allocation9 + $0x10] sm:$0xff]
    %v2362 = vlaneseq
    %v2363 = vshrl.u32 %v2362, 7
    %v2364 = vsub.s32 0, %v2363
    %v2365 = vrot.slane %v2356, %v2364
    %v2366 = vlaneseq
    %v2367 = vshrl.u32 %v2366, 7
    %v2368 = vsub.s32 1, %v2367
    %v2369 = vrot.slane %v2356, %v2368
    %v2370 = vlaneseq
    %v2371 = vshrl.u32 %v2370, 7
    %v2372 = vsub.s32 2, %v2371
    %v2373 = vrot.slane %v2356, %v2372
    %v2374 = vlaneseq
    %v2375 = vshrl.u32 %v2374, 7
    %v2376 = vsub.s32 3, %v2375
    %v2377 = vrot.slane %v2356, %v2376
    %v2378 = vlaneseq
    %v2379 = vshrl.u32 %v2378, 7
    %v2380 = vsub.s32 4, %v2379
    %v2381 = vrot.slane %v2356, %v2380
    %v2382 = vlaneseq
    %v2383 = vshrl.u32 %v2382, 7
    %v2384 = vsub.s32 5, %v2383
    %v2385 = vrot.slane %v2356, %v2384
    %v2386 = vlaneseq
    %v2387 = vshrl.u32 %v2386, 7
    %v2388 = vsub.s32 6, %v2387
    %v2389 = vrot.slane %v2356, %v2388
    %v2390 = vlaneseq
    %v2391 = vshrl.u32 %v2390, 7
    %v2392 = vsub.s32 7, %v2391
    %v2393 = vrot.slane %v2356, %v2392
    %v2394 = vlaneseq
    %v2395 = vshrl.u32 %v2394, 7
    %v2396 = vsub.s32 0, %v2395
    %v2397 = vrot.slane %v2357, %v2396
    %v2398 = vlaneseq
    %v2399 = vshrl.u32 %v2398, 7
    %v2400 = vsub.s32 1, %v2399
    %v2401 = vrot.slane %v2357, %v2400
    %v2402 = vlaneseq
    %v2403 = vshrl.u32 %v2402, 7
    %v2404 = vsub.s32 2, %v2403
    %v2405 = vrot.slane %v2357, %v2404
    %v2406 = vlaneseq
    %v2407 = vshrl.u32 %v2406, 7
    %v2408 = vsub.s32 3, %v2407
    %v2409 = vrot.slane %v2357, %v2408
    %v2410 = vlaneseq
    %v2411 = vshrl.u32 %v2410, 7
    %v2412 = vsub.s32 4, %v2411
    %v2413 = vrot.slane %v2357, %v2412
    %v2414 = vlaneseq
    %v2415 = vshrl.u32 %v2414, 7
    %v2416 = vsub.s32 5, %v2415
    %v2417 = vrot.slane %v2357, %v2416
    %v2418 = vlaneseq
    %v2419 = vshrl.u32 %v2418, 7
    %v2420 = vsub.s32 6, %v2419
    %v2421 = vrot.slane %v2357, %v2420
    %v2422 = vlaneseq
    %v2423 = vshrl.u32 %v2422, 7
    %v2424 = vsub.s32 7, %v2423
    %v2425 = vrot.slane %v2357, %v2424
    %v2426 = vlaneseq
    %v2427 = vshrl.u32 %v2426, 7
    %v2428 = vsub.s32 0, %v2427
    %v2429 = vrot.slane %v2358, %v2428
    %v2430 = vlaneseq
    %v2431 = vshrl.u32 %v2430, 7
    %v2432 = vsub.s32 1, %v2431
    %v2433 = vrot.slane %v2358, %v2432
    %v2434 = vlaneseq
    %v2435 = vshrl.u32 %v2434, 7
    %v2436 = vsub.s32 2, %v2435
    %v2437 = vrot.slane %v2358, %v2436
    %v2438 = vlaneseq
    %v2439 = vshrl.u32 %v2438, 7
    %v2440 = vsub.s32 3, %v2439
    %v2441 = vrot.slane %v2358, %v2440
    %v2442 = vlaneseq
    %v2443 = vshrl.u32 %v2442, 7
    %v2444 = vsub.s32 4, %v2443
    %v2445 = vrot.slane %v2358, %v2444
    %v2446 = vlaneseq
    %v2447 = vshrl.u32 %v2446, 7
    %v2448 = vsub.s32 5, %v2447
    %v2449 = vrot.slane %v2358, %v2448
    %v2450 = vlaneseq
    %v2451 = vshrl.u32 %v2450, 7
    %v2452 = vsub.s32 6, %v2451
    %v2453 = vrot.slane %v2358, %v2452
    %v2454 = vlaneseq
    %v2455 = vshrl.u32 %v2454, 7
    %v2456 = vsub.s32 7, %v2455
    %v2457 = vrot.slane %v2358, %v2456
    %v2674 = vunpack.c.l.b16 %v2164
    %v2675 = vunpack.c.h.b16 %v2164
    %v2676 = vunpack.c.l.b16 %v2165
    %v2677 = vunpack.c.h.b16 %v2165
    %v2678 = vunpack.c.l.b16 %v2166
    %v2679 = vunpack.c.h.b16 %v2166
    %v2680 = vunpack.c.l.b16 %v2167
    %v2681 = vunpack.c.h.b16 %v2167
    %v2682 = vunpack.c.l.b16 %v2168
    %v2683 = vunpack.c.h.b16 %v2168
    %v2684 = vunpack.c.l.b16 %v2169
    %v2685 = vunpack.c.h.b16 %v2169
    %v2686 = vunpack.c.l.b16 %v2170
    %v2687 = vunpack.c.h.b16 %v2170
    %v2688 = vunpack.c.l.b16 %v2171
    %v2689 = vunpack.c.h.b16 %v2171
    %v2690 = vunpack.c.l.b16 %v2172
    %v2691 = vunpack.c.h.b16 %v2172
    %v2692 = vunpack.c.l.b16 %v2173
    %v2693 = vunpack.c.h.b16 %v2173
    %v2694 = vunpack.c.l.b16 %v2174
    %v2695 = vunpack.c.h.b16 %v2174
    %v2696 = vunpack.c.l.b16 %v2175
    %v2697 = vunpack.c.h.b16 %v2175
    %v2698 = vunpack.c.l.b16 %v2176
    %v2699 = vunpack.c.h.b16 %v2176
    %v2700 = vunpack.c.l.b16 %v2177
    %v2701 = vunpack.c.h.b16 %v2177
    %v2702 = vunpack.c.l.b16 %v2178
    %v2703 = vunpack.c.h.b16 %v2178
    %v2704 = vunpack.c.l.b16 %v2179
    %v2705 = vunpack.c.h.b16 %v2179
    %v2706 = vunpack.c.l.b16 %v2180
    %v2707 = vunpack.c.h.b16 %v2180
    %v2708 = vunpack.c.l.b16 %v2181
    %v2709 = vunpack.c.h.b16 %v2181
    %v2710 = vunpack.c.l.b16 %v2182
    %v2711 = vunpack.c.h.b16 %v2182
    %v2712 = vunpack.c.l.b16 %v2183
    %v2713 = vunpack.c.h.b16 %v2183
    %v2714 = vunpack.c.l.b16 %v2184
    %v2715 = vunpack.c.h.b16 %v2184
    %v2716 = vunpack.c.l.b16 %v2185
    %v2717 = vunpack.c.h.b16 %v2185
    %v2718 = vunpack.c.l.b16 %v2186
    %v2719 = vunpack.c.h.b16 %v2186
    %v2720 = vunpack.c.l.b16 %v2187
    %v2721 = vunpack.c.h.b16 %v2187
    %v2722 = vunpack.c.l.b16 %v2188
    %v2723 = vunpack.c.h.b16 %v2188
    %v2724 = vunpack.c.l.b16 %v2189
    %v2725 = vunpack.c.h.b16 %v2189
    %v2726 = vunpack.c.l.b16 %v2190
    %v2727 = vunpack.c.h.b16 %v2190
    %v2728 = vunpack.c.l.b16 %v2191
    %v2729 = vunpack.c.h.b16 %v2191
    %v2730 = vunpack.c.l.b16 %v2192
    %v2731 = vunpack.c.h.b16 %v2192
    %v2732 = vunpack.c.l.b16 %v2193
    %v2733 = vunpack.c.h.b16 %v2193
    %v2734 = vunpack.c.l.b16 %v2194
    %v2735 = vunpack.c.h.b16 %v2194
    %v2736 = vunpack.c.l.b16 %v2195
    %v2737 = vunpack.c.h.b16 %v2195
    %v2738 = vunpack.c.l.b16 %v2196
    %v2739 = vunpack.c.h.b16 %v2196
    %v2740 = vunpack.c.l.b16 %v2197
    %v2741 = vunpack.c.h.b16 %v2197
    %v2742 = vunpack.c.l.b16 %v2198
    %v2743 = vunpack.c.h.b16 %v2198
    %v2744 = vunpack.c.l.b16 %v2199
    %v2745 = vunpack.c.h.b16 %v2199
    %v2746 = vunpack.c.l.b16 %v2200
    %v2747 = vunpack.c.h.b16 %v2200
    %v2748 = vunpack.c.l.b16 %v2201
    %v2749 = vunpack.c.h.b16 %v2201
    %v2750 = vunpack.c.l.b16 %v2202
    %v2751 = vunpack.c.h.b16 %v2202
    %v2752 = vunpack.c.l.b16 %v2203
    %v2753 = vunpack.c.h.b16 %v2203
    %v2754 = vunpack.c.l.b16 %v2204
    %v2755 = vunpack.c.h.b16 %v2204
    %v2756 = vunpack.c.l.b16 %v2205
    %v2757 = vunpack.c.h.b16 %v2205
    %v2758 = vunpack.c.l.b16 %v2206
    %v2759 = vunpack.c.h.b16 %v2206
    %v2760 = vunpack.c.l.b16 %v2207
    %v2761 = vunpack.c.h.b16 %v2207
    %v2762 = vunpack.c.l.b16 %v2208
    %v2763 = vunpack.c.h.b16 %v2208
    %v2764 = vunpack.c.l.b16 %v2209
    %v2765 = vunpack.c.h.b16 %v2209
    %v2766 = vunpack.c.l.b16 %v2210
    %v2767 = vunpack.c.h.b16 %v2210
    %v2768 = vunpack.c.l.b16 %v2211
    %v2769 = vunpack.c.h.b16 %v2211
    %v2770 = vunpack.c.l.b16 %v2212
    %v2771 = vunpack.c.h.b16 %v2212
    %v2772 = vunpack.c.l.b16 %v2213
    %v2773 = vunpack.c.h.b16 %v2213
    %v2774 = vunpack.c.l.b16 %v2214
    %v2775 = vunpack.c.h.b16 %v2214
    %v2776 = vunpack.c.l.b16 %v2215
    %v2777 = vunpack.c.h.b16 %v2215
    %v2778 = vunpack.c.l.b16 %v2216
    %v2779 = vunpack.c.h.b16 %v2216
    %v2780 = vunpack.c.l.b16 %v2217
    %v2781 = vunpack.c.h.b16 %v2217
    %v2782 = vunpack.c.l.b16 %v2218
    %v2783 = vunpack.c.h.b16 %v2218
    %v2784 = vunpack.c.l.b16 %v2219
    %v2785 = vunpack.c.h.b16 %v2219
    %v2786 = vunpack.c.l.b16 %v2220
    %v2787 = vunpack.c.h.b16 %v2220
    %v2788 = vunpack.c.l.b16 %v2221
    %v2789 = vunpack.c.h.b16 %v2221
    %v2790 = vunpack.c.l.b16 %v2222
    %v2791 = vunpack.c.h.b16 %v2222
    %v2792 = vunpack.c.l.b16 %v2223
    %v2793 = vunpack.c.h.b16 %v2223
    %v2794 = vunpack.c.l.b16 %v2224
    %v2795 = vunpack.c.h.b16 %v2224
    %v2796 = vunpack.c.l.b16 %v2225
    %v2797 = vunpack.c.h.b16 %v2225
    %v2798 = vunpack.c.l.b16 %v2226
    %v2799 = vunpack.c.h.b16 %v2226
    %v2800 = vunpack.c.l.b16 %v2227
    %v2801 = vunpack.c.h.b16 %v2227
    %v2802 = vunpack.c.l.b16 %v2228
    %v2803 = vunpack.c.h.b16 %v2228
    %v2804 = vunpack.c.l.b16 %v2229
    %v2805 = vunpack.c.h.b16 %v2229
    %v2806 = vunpack.c.l.b16 %v2230
    %v2807 = vunpack.c.h.b16 %v2230
    %v2808 = vunpack.c.l.b16 %v2231
    %v2809 = vunpack.c.h.b16 %v2231
    %v2810 = vunpack.c.l.b16 %v2232
    %v2811 = vunpack.c.h.b16 %v2232
    %v2812 = vunpack.c.l.b16 %v2233
    %v2813 = vunpack.c.h.b16 %v2233
    %v2814 = vunpack.c.l.b16 %v2234
    %v2815 = vunpack.c.h.b16 %v2234
    %v2816 = vunpack.c.l.b16 %v2235
    %v2817 = vunpack.c.h.b16 %v2235
    %v2818 = vunpack.c.l.b16 %v2236
    %v2819 = vunpack.c.h.b16 %v2236
    %v2820 = vunpack.c.l.b16 %v2237
    %v2821 = vunpack.c.h.b16 %v2237
    %v2822 = vunpack.c.l.b16 %v2238
    %v2823 = vunpack.c.h.b16 %v2238
    %v2824 = vunpack.c.l.b16 %v2239
    %v2825 = vunpack.c.h.b16 %v2239
    %v2826 = vunpack.c.l.b16 %v2240
    %v2827 = vunpack.c.h.b16 %v2240
    %v2828 = vunpack.c.l.b16 %v2241
    %v2829 = vunpack.c.h.b16 %v2241
    %v2830 = vunpack.c.l.b16 %v2242
    %v2831 = vunpack.c.h.b16 %v2242
    %v2832 = vunpack.c.l.b16 %v2243
    %v2833 = vunpack.c.h.b16 %v2243
    %v2834 = vunpack.c.l.b16 %v2244
    %v2835 = vunpack.c.h.b16 %v2244
    %v2836 = vunpack.c.l.b16 %v2245
    %v2837 = vunpack.c.h.b16 %v2245
    %v2838 = vunpack.c.l.b16 %v2246
    %v2839 = vunpack.c.h.b16 %v2246
    %v2840 = vunpack.c.l.b16 %v2247
    %v2841 = vunpack.c.h.b16 %v2247
    %v2842 = vunpack.c.l.b16 %v2248
    %v2843 = vunpack.c.h.b16 %v2248
    %v2844 = vunpack.c.l.b16 %v2249
    %v2845 = vunpack.c.h.b16 %v2249
    %v2846 = vunpack.c.l.b16 %v2250
    %v2847 = vunpack.c.h.b16 %v2250
    %v2848 = vunpack.c.l.b16 %v2251
    %v2849 = vunpack.c.h.b16 %v2251
    %v2850 = vunpack.c.l.b16 %v2252
    %v2851 = vunpack.c.h.b16 %v2252
    %v2852 = vunpack.c.l.b16 %v2253
    %v2853 = vunpack.c.h.b16 %v2253
    %v2854 = vunpack.c.l.b16 %v2254
    %v2855 = vunpack.c.h.b16 %v2254
    %v2856 = vunpack.c.l.b16 %v2255
    %v2857 = vunpack.c.h.b16 %v2255
    %v2858 = vunpack.c.l.b16 %v2256
    %v2859 = vunpack.c.h.b16 %v2256
    %v2860 = vunpack.c.l.b16 %v2257
    %v2861 = vunpack.c.h.b16 %v2257
    %v2862 = vunpack.c.l.b16 %v2258
    %v2863 = vunpack.c.h.b16 %v2258
    %v2864 = vunpack.c.l.b16 %v2259
    %v2865 = vunpack.c.h.b16 %v2259
    %v2866 = vunpack.c.l.b16 %v2260
    %v2867 = vunpack.c.h.b16 %v2260
    %v2868 = vunpack.c.l.b16 %v2261
    %v2869 = vunpack.c.h.b16 %v2261
    %v2870 = vunpack.c.l.b16 %v2262
    %v2871 = vunpack.c.h.b16 %v2262
    %v2872 = vunpack.c.l.b16 %v2263
    %v2873 = vunpack.c.h.b16 %v2263
    %v2874 = vunpack.c.l.b16 %v2264
    %v2875 = vunpack.c.h.b16 %v2264
    %v2876 = vunpack.c.l.b16 %v2265
    %v2877 = vunpack.c.h.b16 %v2265
    %v2878 = vunpack.c.l.b16 %v2266
    %v2879 = vunpack.c.h.b16 %v2266
    %v2880 = vunpack.c.l.b16 %v2267
    %v2881 = vunpack.c.h.b16 %v2267
    %v2882 = vunpack.c.l.b16 %v2268
    %v2883 = vunpack.c.h.b16 %v2268
    %v2884 = vunpack.c.l.b16 %v2269
    %v2885 = vunpack.c.h.b16 %v2269
    %v2886 = vunpack.c.l.b16 %v2270
    %v2887 = vunpack.c.h.b16 %v2270
    %v2888 = vunpack.c.l.b16 %v2271
    %v2889 = vunpack.c.h.b16 %v2271
    %v2890 = vunpack.c.l.b16 %v2272
    %v2891 = vunpack.c.h.b16 %v2272
    %v2892 = vunpack.c.l.b16 %v2273
    %v2893 = vunpack.c.h.b16 %v2273
    %v2894 = vunpack.c.l.b16 %v2274
    %v2895 = vunpack.c.h.b16 %v2274
    %v2896 = vunpack.c.l.b16 %v2275
    %v2897 = vunpack.c.h.b16 %v2275
    %v2898 = vunpack.c.l.b16 %v2276
    %v2899 = vunpack.c.h.b16 %v2276
    %v2900 = vunpack.c.l.b16 %v2277
    %v2901 = vunpack.c.h.b16 %v2277
    %v2902 = vunpack.c.l.b16 %v2278
    %v2903 = vunpack.c.h.b16 %v2278
    %v2904 = vunpack.c.l.b16 %v2279
    %v2905 = vunpack.c.h.b16 %v2279
    %v2906 = vunpack.c.l.b16 %v2280
    %v2907 = vunpack.c.h.b16 %v2280
    %v2908 = vunpack.c.l.b16 %v2281
    %v2909 = vunpack.c.h.b16 %v2281
    %v2910 = vunpack.c.l.b16 %v2282
    %v2911 = vunpack.c.h.b16 %v2282
    %v2912 = vunpack.c.l.b16 %v2283
    %v2913 = vunpack.c.h.b16 %v2283
    %v2914 = vunpack.c.l.b16 %v2284
    %v2915 = vunpack.c.h.b16 %v2284
    %v2916 = vunpack.c.l.b16 %v2285
    %v2917 = vunpack.c.h.b16 %v2285
    %v2918 = vunpack.c.l.b16 %v2286
    %v2919 = vunpack.c.h.b16 %v2286
    %v2920 = vunpack.c.l.b16 %v2287
    %v2921 = vunpack.c.h.b16 %v2287
    %v2922 = vunpack.c.l.b16 %v2288
    %v2923 = vunpack.c.h.b16 %v2288
    %v2924 = vunpack.c.l.b16 %v2289
    %v2925 = vunpack.c.h.b16 %v2289
    %v2926 = vunpack.c.l.b16 %v2290
    %v2927 = vunpack.c.h.b16 %v2290
    %v2928 = vunpack.c.l.b16 %v2291
    %v2929 = vunpack.c.h.b16 %v2291
    %v2930 = vunpack.c.l.b16 %v2292
    %v2931 = vunpack.c.h.b16 %v2292
    %v2932 = vunpack.c.l.b16 %v2293
    %v2933 = vunpack.c.h.b16 %v2293
    %v2934 = vunpack.c.l.b16 %v2294
    %v2935 = vunpack.c.h.b16 %v2294
    %v2936 = vunpack.c.l.b16 %v2295
    %v2937 = vunpack.c.h.b16 %v2295
    %v2938 = vunpack.c.l.b16 %v2296
    %v2939 = vunpack.c.h.b16 %v2296
    %v2940 = vunpack.c.l.b16 %v2297
    %v2941 = vunpack.c.h.b16 %v2297
    %v2942 = vunpack.c.l.b16 %v2298
    %v2943 = vunpack.c.h.b16 %v2298
    %v2944 = vunpack.c.l.b16 %v2299
    %v2945 = vunpack.c.h.b16 %v2299
    %v2946 = vunpack.c.l.b16 %v2300
    %v2947 = vunpack.c.h.b16 %v2300
    %v2948 = vunpack.c.l.b16 %v2301
    %v2949 = vunpack.c.h.b16 %v2301
    %v2950 = vunpack.c.l.b16 %v2302
    %v2951 = vunpack.c.h.b16 %v2302
    %v2952 = vunpack.c.l.b16 %v2303
    %v2953 = vunpack.c.h.b16 %v2303
    %v2954 = vunpack.c.l.b16 %v2304
    %v2955 = vunpack.c.h.b16 %v2304
    %v2956 = vunpack.c.l.b16 %v2305
    %v2957 = vunpack.c.h.b16 %v2305
    %v2958 = vunpack.c.l.b16 %v2306
    %v2959 = vunpack.c.h.b16 %v2306
    %v2960 = vunpack.c.l.b16 %v2307
    %v2961 = vunpack.c.h.b16 %v2307
    %v2962 = vunpack.c.l.b16 %v2308
    %v2963 = vunpack.c.h.b16 %v2308
    %v2964 = vunpack.c.l.b16 %v2309
    %v2965 = vunpack.c.h.b16 %v2309
    %v2966 = vunpack.c.l.b16 %v2310
    %v2967 = vunpack.c.h.b16 %v2310
    %v2968 = vunpack.c.l.b16 %v2311
    %v2969 = vunpack.c.h.b16 %v2311
    %v2970 = vunpack.c.l.b16 %v2312
    %v2971 = vunpack.c.h.b16 %v2312
    %v2972 = vunpack.c.l.b16 %v2313
    %v2973 = vunpack.c.h.b16 %v2313
    %v2974 = vunpack.c.l.b16 %v2314
    %v2975 = vunpack.c.h.b16 %v2314
    %v2976 = vunpack.c.l.b16 %v2315
    %v2977 = vunpack.c.h.b16 %v2315
    %v2978 = vunpack.c.l.b16 %v2316
    %v2979 = vunpack.c.h.b16 %v2316
    %v2980 = vunpack.c.l.b16 %v2317
    %v2981 = vunpack.c.h.b16 %v2317
    %v2982 = vunpack.c.l.b16 %v2318
    %v2983 = vunpack.c.h.b16 %v2318
    %v2984 = vunpack.c.l.b16 %v2319
    %v2985 = vunpack.c.h.b16 %v2319
    %v2986 = vunpack.c.l.b16 %v2320
    %v2987 = vunpack.c.h.b16 %v2320
    %v2988 = vunpack.c.l.b16 %v2321
    %v2989 = vunpack.c.h.b16 %v2321
    %v2990 = vunpack.c.l.b16 %v2322
    %v2991 = vunpack.c.h.b16 %v2322
    %v2992 = vunpack.c.l.b16 %v2323
    %v2993 = vunpack.c.h.b16 %v2323
    %v2994 = vunpack.c.l.b16 %v2324
    %v2995 = vunpack.c.h.b16 %v2324
    %v2996 = vunpack.c.l.b16 %v2325
    %v2997 = vunpack.c.h.b16 %v2325
    %v2998 = vunpack.c.l.b16 %v2326
    %v2999 = vunpack.c.h.b16 %v2326
    %v3000 = vunpack.c.l.b16 %v2327
    %v3001 = vunpack.c.h.b16 %v2327
    %v3002 = vunpack.c.l.b16 %v2328
    %v3003 = vunpack.c.h.b16 %v2328
    %v3004 = vunpack.c.l.b16 %v2329
    %v3005 = vunpack.c.h.b16 %v2329
    %v3006 = vunpack.c.l.b16 %v2330
    %v3007 = vunpack.c.h.b16 %v2330
    %v3008 = vunpack.c.l.b16 %v2331
    %v3009 = vunpack.c.h.b16 %v2331
    %v3010 = vunpack.c.l.b16 %v2332
    %v3011 = vunpack.c.h.b16 %v2332
    %v3012 = vunpack.c.l.b16 %v2333
    %v3013 = vunpack.c.h.b16 %v2333
    %v3014 = vunpack.c.l.b16 %v2334
    %v3015 = vunpack.c.h.b16 %v2334
    %v3016 = vunpack.c.l.b16 %v2335
    %v3017 = vunpack.c.h.b16 %v2335
    %v3018 = vunpack.c.l.b16 %v2336
    %v3019 = vunpack.c.h.b16 %v2336
    %v3020 = vunpack.c.l.b16 %v2337
    %v3021 = vunpack.c.h.b16 %v2337
    %v3022 = vunpack.c.l.b16 %v2338
    %v3023 = vunpack.c.h.b16 %v2338
    %v3024 = vunpack.c.l.b16 %v2339
    %v3025 = vunpack.c.h.b16 %v2339
    %v3026 = vunpack.c.l.b16 %v2340
    %v3027 = vunpack.c.h.b16 %v2340
    %v3028 = vunpack.c.l.b16 %v2341
    %v3029 = vunpack.c.h.b16 %v2341
    %v3030 = vunpack.c.l.b16 %v2342
    %v3031 = vunpack.c.h.b16 %v2342
    %v3032 = vunpack.c.l.b16 %v2343
    %v3033 = vunpack.c.h.b16 %v2343
    %v3034 = vunpack.c.l.b16 %v2344
    %v3035 = vunpack.c.h.b16 %v2344
    %v3036 = vunpack.c.l.b16 %v2345
    %v3037 = vunpack.c.h.b16 %v2345
    %v3038 = vunpack.c.l.b16 %v2346
    %v3039 = vunpack.c.h.b16 %v2346
    %v3040 = vunpack.c.l.b16 %v2347
    %v3041 = vunpack.c.h.b16 %v2347
    %v3042 = vunpack.c.l.b16 %v2348
    %v3043 = vunpack.c.h.b16 %v2348
    %v3044 = vunpack.c.l.b16 %v2349
    %v3045 = vunpack.c.h.b16 %v2349
    %v3046 = vunpack.c.l.b16 %v2350
    %v3047 = vunpack.c.h.b16 %v2350
    %v3048 = vunpack.c.l.b16 %v2351
    %v3049 = vunpack.c.h.b16 %v2351
    %v3050 = vunpack.c.l.b16 %v2352
    %v3051 = vunpack.c.h.b16 %v2352
    %v3052 = vunpack.c.l.b16 %v2353
    %v3053 = vunpack.c.h.b16 %v2353
    %v3054 = vunpack.c.l.b16 %v2354
    %v3055 = vunpack.c.h.b16 %v2354
    %v3056 = vunpack.c.l.b16 %v2355
    %v3057 = vunpack.c.h.b16 %v2355
    %v3058 = vpack.c.b16 %v2698, %v2674
    %v3059 = vpack.c.b16 %v2699, %v2675
    %v3060 = vpack.c.b16 %v2700, %v2676
    %v3061 = vpack.c.b16 %v2701, %v2677
    %v3062 = vpack.c.b16 %v2702, %v2678
    %v3063 = vpack.c.b16 %v2703, %v2679
    %v3064 = vpack.c.b16 %v2704, %v2680
    %v3065 = vpack.c.b16 %v2705, %v2681
    %v3066 = vpack.c.b16 %v2706, %v2682
    %v3067 = vpack.c.b16 %v2707, %v2683
    %v3068 = vpack.c.b16 %v2708, %v2684
    %v3069 = vpack.c.b16 %v2709, %v2685
    %v3070 = vpack.c.b16 %v2710, %v2686
    %v3071 = vpack.c.b16 %v2711, %v2687
    %v3072 = vpack.c.b16 %v2712, %v2688
    %v3073 = vpack.c.b16 %v2713, %v2689
    %v3074 = vpack.c.b16 %v2714, %v2690
    %v3075 = vpack.c.b16 %v2715, %v2691
    %v3076 = vpack.c.b16 %v2716, %v2692
    %v3077 = vpack.c.b16 %v2717, %v2693
    %v3078 = vpack.c.b16 %v2718, %v2694
    %v3079 = vpack.c.b16 %v2719, %v2695
    %v3080 = vpack.c.b16 %v2720, %v2696
    %v3081 = vpack.c.b16 %v2721, %v2697
    %v3082 = vpack.c.b16 %v2746, %v2722
    %v3083 = vpack.c.b16 %v2747, %v2723
    %v3084 = vpack.c.b16 %v2748, %v2724
    %v3085 = vpack.c.b16 %v2749, %v2725
    %v3086 = vpack.c.b16 %v2750, %v2726
    %v3087 = vpack.c.b16 %v2751, %v2727
    %v3088 = vpack.c.b16 %v2752, %v2728
    %v3089 = vpack.c.b16 %v2753, %v2729
    %v3090 = vpack.c.b16 %v2754, %v2730
    %v3091 = vpack.c.b16 %v2755, %v2731
    %v3092 = vpack.c.b16 %v2756, %v2732
    %v3093 = vpack.c.b16 %v2757, %v2733
    %v3094 = vpack.c.b16 %v2758, %v2734
    %v3095 = vpack.c.b16 %v2759, %v2735
    %v3096 = vpack.c.b16 %v2760, %v2736
    %v3097 = vpack.c.b16 %v2761, %v2737
    %v3098 = vpack.c.b16 %v2762, %v2738
    %v3099 = vpack.c.b16 %v2763, %v2739
    %v3100 = vpack.c.b16 %v2764, %v2740
    %v3101 = vpack.c.b16 %v2765, %v2741
    %v3102 = vpack.c.b16 %v2766, %v2742
    %v3103 = vpack.c.b16 %v2767, %v2743
    %v3104 = vpack.c.b16 %v2768, %v2744
    %v3105 = vpack.c.b16 %v2769, %v2745
    %v3106 = vpack.c.b16 %v2794, %v2770
    %v3107 = vpack.c.b16 %v2795, %v2771
    %v3108 = vpack.c.b16 %v2796, %v2772
    %v3109 = vpack.c.b16 %v2797, %v2773
    %v3110 = vpack.c.b16 %v2798, %v2774
    %v3111 = vpack.c.b16 %v2799, %v2775
    %v3112 = vpack.c.b16 %v2800, %v2776
    %v3113 = vpack.c.b16 %v2801, %v2777
    %v3114 = vpack.c.b16 %v2802, %v2778
    %v3115 = vpack.c.b16 %v2803, %v2779
    %v3116 = vpack.c.b16 %v2804, %v2780
    %v3117 = vpack.c.b16 %v2805, %v2781
    %v3118 = vpack.c.b16 %v2806, %v2782
    %v3119 = vpack.c.b16 %v2807, %v2783
    %v3120 = vpack.c.b16 %v2808, %v2784
    %v3121 = vpack.c.b16 %v2809, %v2785
    %v3122 = vpack.c.b16 %v2810, %v2786
    %v3123 = vpack.c.b16 %v2811, %v2787
    %v3124 = vpack.c.b16 %v2812, %v2788
    %v3125 = vpack.c.b16 %v2813, %v2789
    %v3126 = vpack.c.b16 %v2814, %v2790
    %v3127 = vpack.c.b16 %v2815, %v2791
    %v3128 = vpack.c.b16 %v2816, %v2792
    %v3129 = vpack.c.b16 %v2817, %v2793
    %v3130 = vpack.c.b16 %v2842, %v2818
    %v3131 = vpack.c.b16 %v2843, %v2819
    %v3132 = vpack.c.b16 %v2844, %v2820
    %v3133 = vpack.c.b16 %v2845, %v2821
    %v3134 = vpack.c.b16 %v2846, %v2822
    %v3135 = vpack.c.b16 %v2847, %v2823
    %v3136 = vpack.c.b16 %v2848, %v2824
    %v3137 = vpack.c.b16 %v2849, %v2825
    %v3138 = vpack.c.b16 %v2850, %v2826
    %v3139 = vpack.c.b16 %v2851, %v2827
    %v3140 = vpack.c.b16 %v2852, %v2828
    %v3141 = vpack.c.b16 %v2853, %v2829
    %v3142 = vpack.c.b16 %v2854, %v2830
    %v3143 = vpack.c.b16 %v2855, %v2831
    %v3144 = vpack.c.b16 %v2856, %v2832
    %v3145 = vpack.c.b16 %v2857, %v2833
    %v3146 = vpack.c.b16 %v2858, %v2834
    %v3147 = vpack.c.b16 %v2859, %v2835
    %v3148 = vpack.c.b16 %v2860, %v2836
    %v3149 = vpack.c.b16 %v2861, %v2837
    %v3150 = vpack.c.b16 %v2862, %v2838
    %v3151 = vpack.c.b16 %v2863, %v2839
    %v3152 = vpack.c.b16 %v2864, %v2840
    %v3153 = vpack.c.b16 %v2865, %v2841
    %v3154 = vpack.c.b16 %v2890, %v2866
    %v3155 = vpack.c.b16 %v2891, %v2867
    %v3156 = vpack.c.b16 %v2892, %v2868
    %v3157 = vpack.c.b16 %v2893, %v2869
    %v3158 = vpack.c.b16 %v2894, %v2870
    %v3159 = vpack.c.b16 %v2895, %v2871
    %v3160 = vpack.c.b16 %v2896, %v2872
    %v3161 = vpack.c.b16 %v2897, %v2873
    %v3162 = vpack.c.b16 %v2898, %v2874
    %v3163 = vpack.c.b16 %v2899, %v2875
    %v3164 = vpack.c.b16 %v2900, %v2876
    %v3165 = vpack.c.b16 %v2901, %v2877
    %v3166 = vpack.c.b16 %v2902, %v2878
    %v3167 = vpack.c.b16 %v2903, %v2879
    %v3168 = vpack.c.b16 %v2904, %v2880
    %v3169 = vpack.c.b16 %v2905, %v2881
    %v3170 = vpack.c.b16 %v2906, %v2882
    %v3171 = vpack.c.b16 %v2907, %v2883
    %v3172 = vpack.c.b16 %v2908, %v2884
    %v3173 = vpack.c.b16 %v2909, %v2885
    %v3174 = vpack.c.b16 %v2910, %v2886
    %v3175 = vpack.c.b16 %v2911, %v2887
    %v3176 = vpack.c.b16 %v2912, %v2888
    %v3177 = vpack.c.b16 %v2913, %v2889
    %v3178 = vpack.c.b16 %v2938, %v2914
    %v3179 = vpack.c.b16 %v2939, %v2915
    %v3180 = vpack.c.b16 %v2940, %v2916
    %v3181 = vpack.c.b16 %v2941, %v2917
    %v3182 = vpack.c.b16 %v2942, %v2918
    %v3183 = vpack.c.b16 %v2943, %v2919
    %v3184 = vpack.c.b16 %v2944, %v2920
    %v3185 = vpack.c.b16 %v2945, %v2921
    %v3186 = vpack.c.b16 %v2946, %v2922
    %v3187 = vpack.c.b16 %v2947, %v2923
    %v3188 = vpack.c.b16 %v2948, %v2924
    %v3189 = vpack.c.b16 %v2949, %v2925
    %v3190 = vpack.c.b16 %v2950, %v2926
    %v3191 = vpack.c.b16 %v2951, %v2927
    %v3192 = vpack.c.b16 %v2952, %v2928
    %v3193 = vpack.c.b16 %v2953, %v2929
    %v3194 = vpack.c.b16 %v2954, %v2930
    %v3195 = vpack.c.b16 %v2955, %v2931
    %v3196 = vpack.c.b16 %v2956, %v2932
    %v3197 = vpack.c.b16 %v2957, %v2933
    %v3198 = vpack.c.b16 %v2958, %v2934
    %v3199 = vpack.c.b16 %v2959, %v2935
    %v3200 = vpack.c.b16 %v2960, %v2936
    %v3201 = vpack.c.b16 %v2961, %v2937
    %v3202 = vpack.c.b16 %v2986, %v2962
    %v3203 = vpack.c.b16 %v2987, %v2963
    %v3204 = vpack.c.b16 %v2988, %v2964
    %v3205 = vpack.c.b16 %v2989, %v2965
    %v3206 = vpack.c.b16 %v2990, %v2966
    %v3207 = vpack.c.b16 %v2991, %v2967
    %v3208 = vpack.c.b16 %v2992, %v2968
    %v3209 = vpack.c.b16 %v2993, %v2969
    %v3210 = vpack.c.b16 %v2994, %v2970
    %v3211 = vpack.c.b16 %v2995, %v2971
    %v3212 = vpack.c.b16 %v2996, %v2972
    %v3213 = vpack.c.b16 %v2997, %v2973
    %v3214 = vpack.c.b16 %v2998, %v2974
    %v3215 = vpack.c.b16 %v2999, %v2975
    %v3216 = vpack.c.b16 %v3000, %v2976
    %v3217 = vpack.c.b16 %v3001, %v2977
    %v3218 = vpack.c.b16 %v3002, %v2978
    %v3219 = vpack.c.b16 %v3003, %v2979
    %v3220 = vpack.c.b16 %v3004, %v2980
    %v3221 = vpack.c.b16 %v3005, %v2981
    %v3222 = vpack.c.b16 %v3006, %v2982
    %v3223 = vpack.c.b16 %v3007, %v2983
    %v3224 = vpack.c.b16 %v3008, %v2984
    %v3225 = vpack.c.b16 %v3009, %v2985
    %v3226 = vpack.c.b16 %v3034, %v3010
    %v3227 = vpack.c.b16 %v3035, %v3011
    %v3228 = vpack.c.b16 %v3036, %v3012
    %v3229 = vpack.c.b16 %v3037, %v3013
    %v3230 = vpack.c.b16 %v3038, %v3014
    %v3231 = vpack.c.b16 %v3039, %v3015
    %v3232 = vpack.c.b16 %v3040, %v3016
    %v3233 = vpack.c.b16 %v3041, %v3017
    %v3234 = vpack.c.b16 %v3042, %v3018
    %v3235 = vpack.c.b16 %v3043, %v3019
    %v3236 = vpack.c.b16 %v3044, %v3020
    %v3237 = vpack.c.b16 %v3045, %v3021
    %v3238 = vpack.c.b16 %v3046, %v3022
    %v3239 = vpack.c.b16 %v3047, %v3023
    %v3240 = vpack.c.b16 %v3048, %v3024
    %v3241 = vpack.c.b16 %v3049, %v3025
    %v3242 = vpack.c.b16 %v3050, %v3026
    %v3243 = vpack.c.b16 %v3051, %v3027
    %v3244 = vpack.c.b16 %v3052, %v3028
    %v3245 = vpack.c.b16 %v3053, %v3029
    %v3246 = vpack.c.b16 %v3054, %v3030
    %v3247 = vpack.c.b16 %v3055, %v3031
    %v3248 = vpack.c.b16 %v3056, %v3032
    %v3249 = vpack.c.b16 %v3057, %v3033
    %3442 = vmatprep.subr.bf16.mxu0 %v3059
    %3443 = vmatpush1.bf16.msra.mxu0 %v3058
    %3444 = vmatprep.subr.bf16.mxu0 %v3083
    %3445 = vmatpush1.bf16.msra.mxu0 %v3082
    %3446 = vmatprep.subr.bf16.mxu0 %v3107
    %3447 = vmatpush1.bf16.msra.mxu0 %v3106
    %3448 = vmatprep.subr.bf16.mxu0 %v3131
    %3449 = vmatpush1.bf16.msra.mxu0 %v3130
    %3450 = vmatprep.subr.bf16.mxu0 %v3155
    %3451 = vmatpush1.bf16.msra.mxu0 %v3154
    %3452 = vmatprep.subr.bf16.mxu0 %v3179
    %3453 = vmatpush1.bf16.msra.mxu0 %v3178
    %3454 = vmatprep.subr.bf16.mxu0 %v3203
    %3455 = vmatpush1.bf16.msra.mxu0 %v3202
    %3456 = vmatprep.subr.bf16.mxu0 %v3227
    %3457 = vmatpush1.bf16.msra.mxu0 %v3226
    %3458 = vmatprep.subr.bf16.mxu0 0
    %3459 = vmatpush1.bf16.msra.mxu0 0
    %3460 = vmatprep.subr.bf16.mxu0 0
    %3461 = vmatpush1.bf16.msra.mxu0 0
    %3462 = vmatprep.subr.bf16.mxu0 0
    %3463 = vmatpush1.bf16.msra.mxu0 0
    %3464 = vmatprep.subr.bf16.mxu0 0
    %3465 = vmatpush1.bf16.msra.mxu0 0
    %3466 = vmatprep.subr.bf16.mxu0 0
    %3467 = vmatpush1.bf16.msra.mxu0 0
    %3468 = vmatprep.subr.bf16.mxu0 0
    %3469 = vmatpush1.bf16.msra.mxu0 0
    %3470 = vmatprep.subr.bf16.mxu0 0
    %3471 = vmatpush1.bf16.msra.mxu0 0
    %3472 = vmatprep.subr.bf16.mxu0 0
    %3473 = vmatpush1.bf16.msra.mxu0 0
    %3474 = vmatprep.mubr.bf16.mxu0 0
    %3475 = vmatmul.mubr.bf16.gmra.mrb[0].mxu0 %v2163
    %v3476 = vpop.f32.mrb[0].mxu0
    %v3477 = vadd.f32 %v2365, %v3476
    %v3478 = vpop.f32.mrb[0].mxu0
    %v3479 = vadd.f32 %v2369, %v3478
    %v3480 = vpop.f32.mrb[0].mxu0
    %v3481 = vpop.f32.mrb[0].mxu0
    %3482 = vdwg.mxu0
    %3483 = vmatprep.subr.bf16.mxu0 %v3061
    %3484 = vmatpush1.bf16.msra.mxu0 %v3060
    %3485 = vmatprep.subr.bf16.mxu0 %v3085
    %3486 = vmatpush1.bf16.msra.mxu0 %v3084
    %3487 = vmatprep.subr.bf16.mxu0 %v3109
    %3488 = vmatpush1.bf16.msra.mxu0 %v3108
    %3489 = vmatprep.subr.bf16.mxu0 %v3133
    %3490 = vmatpush1.bf16.msra.mxu0 %v3132
    %3491 = vmatprep.subr.bf16.mxu0 %v3157
    %3492 = vmatpush1.bf16.msra.mxu0 %v3156
    %3493 = vmatprep.subr.bf16.mxu0 %v3181
    %3494 = vmatpush1.bf16.msra.mxu0 %v3180
    %3495 = vmatprep.subr.bf16.mxu0 %v3205
    %3496 = vmatpush1.bf16.msra.mxu0 %v3204
    %3497 = vmatprep.subr.bf16.mxu0 %v3229
    %3498 = vmatpush1.bf16.msra.mxu0 %v3228
    %3499 = vmatprep.subr.bf16.mxu0 0
    %3500 = vmatpush1.bf16.msra.mxu0 0
    %3501 = vmatprep.subr.bf16.mxu0 0
    %3502 = vmatpush1.bf16.msra.mxu0 0
    %3503 = vmatprep.subr.bf16.mxu0 0
    %3504 = vmatpush1.bf16.msra.mxu0 0
    %3505 = vmatprep.subr.bf16.mxu0 0
    %3506 = vmatpush1.bf16.msra.mxu0 0
    %3507 = vmatprep.subr.bf16.mxu0 0
    %3508 = vmatpush1.bf16.msra.mxu0 0
    %3509 = vmatprep.subr.bf16.mxu0 0
    %3510 = vmatpush1.bf16.msra.mxu0 0
    %3511 = vmatprep.subr.bf16.mxu0 0
    %3512 = vmatpush1.bf16.msra.mxu0 0
    %3513 = vmatprep.subr.bf16.mxu0 0
    %3514 = vmatpush1.bf16.msra.mxu0 0
    %3515 = vmatprep.mubr.bf16.mxu0 0
    %3516 = vmatmul.mubr.bf16.gmra.mrb[0].mxu0 %v2163
    %v3517 = vpop.f32.mrb[0].mxu0
    %v3518 = vadd.f32 %v2373, %v3517
    %v3519 = vpop.f32.mrb[0].mxu0
    %v3520 = vadd.f32 %v2377, %v3519
    %v3521 = vpop.f32.mrb[0].mxu0
    %v3522 = vpop.f32.mrb[0].mxu0
    %3523 = vdwg.mxu0
    %3524 = vmatprep.subr.bf16.mxu0 %v3063
    %3525 = vmatpush1.bf16.msra.mxu0 %v3062
    %3526 = vmatprep.subr.bf16.mxu0 %v3087
    %3527 = vmatpush1.bf16.msra.mxu0 %v3086
    %3528 = vmatprep.subr.bf16.mxu0 %v3111
    %3529 = vmatpush1.bf16.msra.mxu0 %v3110
    %3530 = vmatprep.subr.bf16.mxu0 %v3135
    %3531 = vmatpush1.bf16.msra.mxu0 %v3134
    %3532 = vmatprep.subr.bf16.mxu0 %v3159
    %3533 = vmatpush1.bf16.msra.mxu0 %v3158
    %3534 = vmatprep.subr.bf16.mxu0 %v3183
    %3535 = vmatpush1.bf16.msra.mxu0 %v3182
    %3536 = vmatprep.subr.bf16.mxu0 %v3207
    %3537 = vmatpush1.bf16.msra.mxu0 %v3206
    %3538 = vmatprep.subr.bf16.mxu0 %v3231
    %3539 = vmatpush1.bf16.msra.mxu0 %v3230
    %3540 = vmatprep.subr.bf16.mxu0 0
    %3541 = vmatpush1.bf16.msra.mxu0 0
    %3542 = vmatprep.subr.bf16.mxu0 0
    %3543 = vmatpush1.bf16.msra.mxu0 0
    %3544 = vmatprep.subr.bf16.mxu0 0
    %3545 = vmatpush1.bf16.msra.mxu0 0
    %3546 = vmatprep.subr.bf16.mxu0 0
    %3547 = vmatpush1.bf16.msra.mxu0 0
    %3548 = vmatprep.subr.bf16.mxu0 0
    %3549 = vmatpush1.bf16.msra.mxu0 0
    %3550 = vmatprep.subr.bf16.mxu0 0
    %3551 = vmatpush1.bf16.msra.mxu0 0
    %3552 = vmatprep.subr.bf16.mxu0 0
    %3553 = vmatpush1.bf16.msra.mxu0 0
    %3554 = vmatprep.subr.bf16.mxu0 0
    %3555 = vmatpush1.bf16.msra.mxu0 0
    %3556 = vmatprep.mubr.bf16.mxu0 0
    %3557 = vmatmul.mubr.bf16.gmra.mrb[0].mxu0 %v2163
    %v3558 = vpop.f32.mrb[0].mxu0
    %v3559 = vadd.f32 %v2381, %v3558
    %v3560 = vpop.f32.mrb[0].mxu0
    %v3561 = vadd.f32 %v2385, %v3560
    %v3562 = vpop.f32.mrb[0].mxu0
    %v3563 = vpop.f32.mrb[0].mxu0
    %3564 = vdwg.mxu0
    %3565 = vmatprep.subr.bf16.mxu0 %v3065
    %3566 = vmatpush1.bf16.msra.mxu0 %v3064
    %3567 = vmatprep.subr.bf16.mxu0 %v3089
    %3568 = vmatpush1.bf16.msra.mxu0 %v3088
    %3569 = vmatprep.subr.bf16.mxu0 %v3113
    %3570 = vmatpush1.bf16.msra.mxu0 %v3112
    %3571 = vmatprep.subr.bf16.mxu0 %v3137
    %3572 = vmatpush1.bf16.msra.mxu0 %v3136
    %3573 = vmatprep.subr.bf16.mxu0 %v3161
    %3574 = vmatpush1.bf16.msra.mxu0 %v3160
    %3575 = vmatprep.subr.bf16.mxu0 %v3185
    %3576 = vmatpush1.bf16.msra.mxu0 %v3184
    %3577 = vmatprep.subr.bf16.mxu0 %v3209
    %3578 = vmatpush1.bf16.msra.mxu0 %v3208
    %3579 = vmatprep.subr.bf16.mxu0 %v3233
    %3580 = vmatpush1.bf16.msra.mxu0 %v3232
    %3581 = vmatprep.subr.bf16.mxu0 0
    %3582 = vmatpush1.bf16.msra.mxu0 0
    %3583 = vmatprep.subr.bf16.mxu0 0
    %3584 = vmatpush1.bf16.msra.mxu0 0
    %3585 = vmatprep.subr.bf16.mxu0 0
    %3586 = vmatpush1.bf16.msra.mxu0 0
    %3587 = vmatprep.subr.bf16.mxu0 0
    %3588 = vmatpush1.bf16.msra.mxu0 0
    %3589 = vmatprep.subr.bf16.mxu0 0
    %3590 = vmatpush1.bf16.msra.mxu0 0
    %3591 = vmatprep.subr.bf16.mxu0 0
    %3592 = vmatpush1.bf16.msra.mxu0 0
    %3593 = vmatprep.subr.bf16.mxu0 0
    %3594 = vmatpush1.bf16.msra.mxu0 0
    %3595 = vmatprep.subr.bf16.mxu0 0
    %3596 = vmatpush1.bf16.msra.mxu0 0
    %3597 = vmatprep.mubr.bf16.mxu0 0
    %3598 = vmatmul.mubr.bf16.gmra.mrb[0].mxu0 %v2163
    %v3599 = vpop.f32.mrb[0].mxu0
    %v3600 = vadd.f32 %v2389, %v3599
    %v3601 = vpop.f32.mrb[0].mxu0
    %v3602 = vadd.f32 %v2393, %v3601
    %v3603 = vpop.f32.mrb[0].mxu0
    %v3604 = vpop.f32.mrb[0].mxu0
    %3605 = vdwg.mxu0
    %3606 = vmatprep.subr.bf16.mxu0 %v3067
    %3607 = vmatpush1.bf16.msra.mxu0 %v3066
    %3608 = vmatprep.subr.bf16.mxu0 %v3091
    %3609 = vmatpush1.bf16.msra.mxu0 %v3090
    %3610 = vmatprep.subr.bf16.mxu0 %v3115
    %3611 = vmatpush1.bf16.msra.mxu0 %v3114
    %3612 = vmatprep.subr.bf16.mxu0 %v3139
    %3613 = vmatpush1.bf16.msra.mxu0 %v3138
    %3614 = vmatprep.subr.bf16.mxu0 %v3163
    %3615 = vmatpush1.bf16.msra.mxu0 %v3162
    %3616 = vmatprep.subr.bf16.mxu0 %v3187
    %3617 = vmatpush1.bf16.msra.mxu0 %v3186
    %3618 = vmatprep.subr.bf16.mxu0 %v3211
    %3619 = vmatpush1.bf16.msra.mxu0 %v3210
    %3620 = vmatprep.subr.bf16.mxu0 %v3235
    %3621 = vmatpush1.bf16.msra.mxu0 %v3234
    %3622 = vmatprep.subr.bf16.mxu0 0
    %3623 = vmatpush1.bf16.msra.mxu0 0
    %3624 = vmatprep.subr.bf16.mxu0 0
    %3625 = vmatpush1.bf16.msra.mxu0 0
    %3626 = vmatprep.subr.bf16.mxu0 0
    %3627 = vmatpush1.bf16.msra.mxu0 0
    %3628 = vmatprep.subr.bf16.mxu0 0
    %3629 = vmatpush1.bf16.msra.mxu0 0
    %3630 = vmatprep.subr.bf16.mxu0 0
    %3631 = vmatpush1.bf16.msra.mxu0 0
    %3632 = vmatprep.subr.bf16.mxu0 0
    %3633 = vmatpush1.bf16.msra.mxu0 0
    %3634 = vmatprep.subr.bf16.mxu0 0
    %3635 = vmatpush1.bf16.msra.mxu0 0
    %3636 = vmatprep.subr.bf16.mxu0 0
    %3637 = vmatpush1.bf16.msra.mxu0 0
    %3638 = vmatprep.mubr.bf16.mxu0 0
    %3639 = vmatmul.mubr.bf16.gmra.mrb[0].mxu0 %v2163
    %v3640 = vpop.f32.mrb[0].mxu0
    %v3641 = vadd.f32 %v2397, %v3640
    %v3642 = vpop.f32.mrb[0].mxu0
    %v3643 = vadd.f32 %v2401, %v3642
    %v3644 = vpop.f32.mrb[0].mxu0
    %v3645 = vpop.f32.mrb[0].mxu0
    %3646 = vdwg.mxu0
    %3647 = vmatprep.subr.bf16.mxu0 %v3069
    %3648 = vmatpush1.bf16.msra.mxu0 %v3068
    %3649 = vmatprep.subr.bf16.mxu0 %v3093
    %3650 = vmatpush1.bf16.msra.mxu0 %v3092
    %3651 = vmatprep.subr.bf16.mxu0 %v3117
    %3652 = vmatpush1.bf16.msra.mxu0 %v3116
    %3653 = vmatprep.subr.bf16.mxu0 %v3141
    %3654 = vmatpush1.bf16.msra.mxu0 %v3140
    %3655 = vmatprep.subr.bf16.mxu0 %v3165
    %3656 = vmatpush1.bf16.msra.mxu0 %v3164
    %3657 = vmatprep.subr.bf16.mxu0 %v3189
    %3658 = vmatpush1.bf16.msra.mxu0 %v3188
    %3659 = vmatprep.subr.bf16.mxu0 %v3213
    %3660 = vmatpush1.bf16.msra.mxu0 %v3212
    %3661 = vmatprep.subr.bf16.mxu0 %v3237
    %3662 = vmatpush1.bf16.msra.mxu0 %v3236
    %3663 = vmatprep.subr.bf16.mxu0 0
    %3664 = vmatpush1.bf16.msra.mxu0 0
    %3665 = vmatprep.subr.bf16.mxu0 0
    %3666 = vmatpush1.bf16.msra.mxu0 0
    %3667 = vmatprep.subr.bf16.mxu0 0
    %3668 = vmatpush1.bf16.msra.mxu0 0
    %3669 = vmatprep.subr.bf16.mxu0 0
    %3670 = vmatpush1.bf16.msra.mxu0 0
    %3671 = vmatprep.subr.bf16.mxu0 0
    %3672 = vmatpush1.bf16.msra.mxu0 0
    %3673 = vmatprep.subr.bf16.mxu0 0
    %3674 = vmatpush1.bf16.msra.mxu0 0
    %3675 = vmatprep.subr.bf16.mxu0 0
    %3676 = vmatpush1.bf16.msra.mxu0 0
    %3677 = vmatprep.subr.bf16.mxu0 0
    %3678 = vmatpush1.bf16.msra.mxu0 0
    %3679 = vmatprep.mubr.bf16.mxu0 0
    %3680 = vmatmul.mubr.bf16.gmra.mrb[0].mxu0 %v2163
    %v3681 = vpop.f32.mrb[0].mxu0
    %v3682 = vadd.f32 %v2405, %v3681
    %v3683 = vpop.f32.mrb[0].mxu0
    %v3684 = vadd.f32 %v2409, %v3683
    %v3685 = vpop.f32.mrb[0].mxu0
    %v3686 = vpop.f32.mrb[0].mxu0
    %3687 = vdwg.mxu0
    %3688 = vmatprep.subr.bf16.mxu0 %v3071
    %3689 = vmatpush1.bf16.msra.mxu0 %v3070
    %3690 = vmatprep.subr.bf16.mxu0 %v3095
    %3691 = vmatpush1.bf16.msra.mxu0 %v3094
    %3692 = vmatprep.subr.bf16.mxu0 %v3119
    %3693 = vmatpush1.bf16.msra.mxu0 %v3118
    %3694 = vmatprep.subr.bf16.mxu0 %v3143
    %3695 = vmatpush1.bf16.msra.mxu0 %v3142
    %3696 = vmatprep.subr.bf16.mxu0 %v3167
    %3697 = vmatpush1.bf16.msra.mxu0 %v3166
    %3698 = vmatprep.subr.bf16.mxu0 %v3191
    %3699 = vmatpush1.bf16.msra.mxu0 %v3190
    %3700 = vmatprep.subr.bf16.mxu0 %v3215
    %3701 = vmatpush1.bf16.msra.mxu0 %v3214
    %3702 = vmatprep.subr.bf16.mxu0 %v3239
    %3703 = vmatpush1.bf16.msra.mxu0 %v3238
    %3704 = vmatprep.subr.bf16.mxu0 0
    %3705 = vmatpush1.bf16.msra.mxu0 0
    %3706 = vmatprep.subr.bf16.mxu0 0
    %3707 = vmatpush1.bf16.msra.mxu0 0
    %3708 = vmatprep.subr.bf16.mxu0 0
    %3709 = vmatpush1.bf16.msra.mxu0 0
    %3710 = vmatprep.subr.bf16.mxu0 0
    %3711 = vmatpush1.bf16.msra.mxu0 0
    %3712 = vmatprep.subr.bf16.mxu0 0
    %3713 = vmatpush1.bf16.msra.mxu0 0
    %3714 = vmatprep.subr.bf16.mxu0 0
    %3715 = vmatpush1.bf16.msra.mxu0 0
    %3716 = vmatprep.subr.bf16.mxu0 0
    %3717 = vmatpush1.bf16.msra.mxu0 0
    %3718 = vmatprep.subr.bf16.mxu0 0
    %3719 = vmatpush1.bf16.msra.mxu0 0
    %3720 = vmatprep.mubr.bf16.mxu0 0
    %3721 = vmatmul.mubr.bf16.gmra.mrb[0].mxu0 %v2163
    %v3722 = vpop.f32.mrb[0].mxu0
    %v3723 = vadd.f32 %v2413, %v3722
    %v3724 = vpop.f32.mrb[0].mxu0
    %v3725 = vadd.f32 %v2417, %v3724
    %v3726 = vpop.f32.mrb[0].mxu0
    %v3727 = vpop.f32.mrb[0].mxu0
    %3728 = vdwg.mxu0
    %3729 = vmatprep.subr.bf16.mxu0 %v3073
    %3730 = vmatpush1.bf16.msra.mxu0 %v3072
    %3731 = vmatprep.subr.bf16.mxu0 %v3097
    %3732 = vmatpush1.bf16.msra.mxu0 %v3096
    %3733 = vmatprep.subr.bf16.mxu0 %v3121
    %3734 = vmatpush1.bf16.msra.mxu0 %v3120
    %3735 = vmatprep.subr.bf16.mxu0 %v3145
    %3736 = vmatpush1.bf16.msra.mxu0 %v3144
    %3737 = vmatprep.subr.bf16.mxu0 %v3169
    %3738 = vmatpush1.bf16.msra.mxu0 %v3168
    %3739 = vmatprep.subr.bf16.mxu0 %v3193
    %3740 = vmatpush1.bf16.msra.mxu0 %v3192
    %3741 = vmatprep.subr.bf16.mxu0 %v3217
    %3742 = vmatpush1.bf16.msra.mxu0 %v3216
    %3743 = vmatprep.subr.bf16.mxu0 %v3241
    %3744 = vmatpush1.bf16.msra.mxu0 %v3240
    %3745 = vmatprep.subr.bf16.mxu0 0
    %3746 = vmatpush1.bf16.msra.mxu0 0
    %3747 = vmatprep.subr.bf16.mxu0 0
    %3748 = vmatpush1.bf16.msra.mxu0 0
    %3749 = vmatprep.subr.bf16.mxu0 0
    %3750 = vmatpush1.bf16.msra.mxu0 0
    %3751 = vmatprep.subr.bf16.mxu0 0
    %3752 = vmatpush1.bf16.msra.mxu0 0
    %3753 = vmatprep.subr.bf16.mxu0 0
    %3754 = vmatpush1.bf16.msra.mxu0 0
    %3755 = vmatprep.subr.bf16.mxu0 0
    %3756 = vmatpush1.bf16.msra.mxu0 0
    %3757 = vmatprep.subr.bf16.mxu0 0
    %3758 = vmatpush1.bf16.msra.mxu0 0
    %3759 = vmatprep.subr.bf16.mxu0 0
    %3760 = vmatpush1.bf16.msra.mxu0 0
    %3761 = vmatprep.mubr.bf16.mxu0 0
    %3762 = vmatmul.mubr.bf16.gmra.mrb[0].mxu0 %v2163
    %v3763 = vpop.f32.mrb[0].mxu0
    %v3764 = vadd.f32 %v2421, %v3763
    %v3765 = vpop.f32.mrb[0].mxu0
    %v3766 = vadd.f32 %v2425, %v3765
    %v3767 = vpop.f32.mrb[0].mxu0
    %v3768 = vpop.f32.mrb[0].mxu0
    %3769 = vdwg.mxu0
    %3770 = vmatprep.subr.bf16.mxu0 %v3075
    %3771 = vmatpush1.bf16.msra.mxu0 %v3074
    %3772 = vmatprep.subr.bf16.mxu0 %v3099
    %3773 = vmatpush1.bf16.msra.mxu0 %v3098
    %3774 = vmatprep.subr.bf16.mxu0 %v3123
    %3775 = vmatpush1.bf16.msra.mxu0 %v3122
    %3776 = vmatprep.subr.bf16.mxu0 %v3147
    %3777 = vmatpush1.bf16.msra.mxu0 %v3146
    %3778 = vmatprep.subr.bf16.mxu0 %v3171
    %3779 = vmatpush1.bf16.msra.mxu0 %v3170
    %3780 = vmatprep.subr.bf16.mxu0 %v3195
    %3781 = vmatpush1.bf16.msra.mxu0 %v3194
    %3782 = vmatprep.subr.bf16.mxu0 %v3219
    %3783 = vmatpush1.bf16.msra.mxu0 %v3218
    %3784 = vmatprep.subr.bf16.mxu0 %v3243
    %3785 = vmatpush1.bf16.msra.mxu0 %v3242
    %3786 = vmatprep.subr.bf16.mxu0 0
    %3787 = vmatpush1.bf16.msra.mxu0 0
    %3788 = vmatprep.subr.bf16.mxu0 0
    %3789 = vmatpush1.bf16.msra.mxu0 0
    %3790 = vmatprep.subr.bf16.mxu0 0
    %3791 = vmatpush1.bf16.msra.mxu0 0
    %3792 = vmatprep.subr.bf16.mxu0 0
    %3793 = vmatpush1.bf16.msra.mxu0 0
    %3794 = vmatprep.subr.bf16.mxu0 0
    %3795 = vmatpush1.bf16.msra.mxu0 0
    %3796 = vmatprep.subr.bf16.mxu0 0
    %3797 = vmatpush1.bf16.msra.mxu0 0
    %3798 = vmatprep.subr.bf16.mxu0 0
    %3799 = vmatpush1.bf16.msra.mxu0 0
    %3800 = vmatprep.subr.bf16.mxu0 0
    %3801 = vmatpush1.bf16.msra.mxu0 0
    %3802 = vmatprep.mubr.bf16.mxu0 0
    %3803 = vmatmul.mubr.bf16.gmra.mrb[0].mxu0 %v2163
    %v3804 = vpop.f32.mrb[0].mxu0
    %v3805 = vadd.f32 %v2429, %v3804
    %v3806 = vpop.f32.mrb[0].mxu0
    %v3807 = vadd.f32 %v2433, %v3806
    %v3808 = vpop.f32.mrb[0].mxu0
    %v3809 = vpop.f32.mrb[0].mxu0
    %3810 = vdwg.mxu0
    %3811 = vmatprep.subr.bf16.mxu0 %v3077
    %3812 = vmatpush1.bf16.msra.mxu0 %v3076
    %3813 = vmatprep.subr.bf16.mxu0 %v3101
    %3814 = vmatpush1.bf16.msra.mxu0 %v3100
    %3815 = vmatprep.subr.bf16.mxu0 %v3125
    %3816 = vmatpush1.bf16.msra.mxu0 %v3124
    %3817 = vmatprep.subr.bf16.mxu0 %v3149
    %3818 = vmatpush1.bf16.msra.mxu0 %v3148
    %3819 = vmatprep.subr.bf16.mxu0 %v3173
    %3820 = vmatpush1.bf16.msra.mxu0 %v3172
    %3821 = vmatprep.subr.bf16.mxu0 %v3197
    %3822 = vmatpush1.bf16.msra.mxu0 %v3196
    %3823 = vmatprep.subr.bf16.mxu0 %v3221
    %3824 = vmatpush1.bf16.msra.mxu0 %v3220
    %3825 = vmatprep.subr.bf16.mxu0 %v3245
    %3826 = vmatpush1.bf16.msra.mxu0 %v3244
    %3827 = vmatprep.subr.bf16.mxu0 0
    %3828 = vmatpush1.bf16.msra.mxu0 0
    %3829 = vmatprep.subr.bf16.mxu0 0
    %3830 = vmatpush1.bf16.msra.mxu0 0
    %3831 = vmatprep.subr.bf16.mxu0 0
    %3832 = vmatpush1.bf16.msra.mxu0 0
    %3833 = vmatprep.subr.bf16.mxu0 0
    %3834 = vmatpush1.bf16.msra.mxu0 0
    %3835 = vmatprep.subr.bf16.mxu0 0
    %3836 = vmatpush1.bf16.msra.mxu0 0
    %3837 = vmatprep.subr.bf16.mxu0 0
    %3838 = vmatpush1.bf16.msra.mxu0 0
    %3839 = vmatprep.subr.bf16.mxu0 0
    %3840 = vmatpush1.bf16.msra.mxu0 0
    %3841 = vmatprep.subr.bf16.mxu0 0
    %3842 = vmatpush1.bf16.msra.mxu0 0
    %3843 = vmatprep.mubr.bf16.mxu0 0
    %3844 = vmatmul.mubr.bf16.gmra.mrb[0].mxu0 %v2163
    %v3845 = vpop.f32.mrb[0].mxu0
    %v3846 = vadd.f32 %v2437, %v3845
    %v3847 = vpop.f32.mrb[0].mxu0
    %v3848 = vadd.f32 %v2441, %v3847
    %v3849 = vpop.f32.mrb[0].mxu0
    %v3850 = vpop.f32.mrb[0].mxu0
    %3851 = vdwg.mxu0
    %3852 = vmatprep.subr.bf16.mxu0 %v3079
    %3853 = vmatpush1.bf16.msra.mxu0 %v3078
    %3854 = vmatprep.subr.bf16.mxu0 %v3103
    %3855 = vmatpush1.bf16.msra.mxu0 %v3102
    %3856 = vmatprep.subr.bf16.mxu0 %v3127
    %3857 = vmatpush1.bf16.msra.mxu0 %v3126
    %3858 = vmatprep.subr.bf16.mxu0 %v3151
    %3859 = vmatpush1.bf16.msra.mxu0 %v3150
    %3860 = vmatprep.subr.bf16.mxu0 %v3175
    %3861 = vmatpush1.bf16.msra.mxu0 %v3174
    %3862 = vmatprep.subr.bf16.mxu0 %v3199
    %3863 = vmatpush1.bf16.msra.mxu0 %v3198
    %3864 = vmatprep.subr.bf16.mxu0 %v3223
    %3865 = vmatpush1.bf16.msra.mxu0 %v3222
    %3866 = vmatprep.subr.bf16.mxu0 %v3247
    %3867 = vmatpush1.bf16.msra.mxu0 %v3246
    %3868 = vmatprep.subr.bf16.mxu0 0
    %3869 = vmatpush1.bf16.msra.mxu0 0
    %3870 = vmatprep.subr.bf16.mxu0 0
    %3871 = vmatpush1.bf16.msra.mxu0 0
    %3872 = vmatprep.subr.bf16.mxu0 0
    %3873 = vmatpush1.bf16.msra.mxu0 0
    %3874 = vmatprep.subr.bf16.mxu0 0
    %3875 = vmatpush1.bf16.msra.mxu0 0
    %3876 = vmatprep.subr.bf16.mxu0 0
    %3877 = vmatpush1.bf16.msra.mxu0 0
    %3878 = vmatprep.subr.bf16.mxu0 0
    %3879 = vmatpush1.bf16.msra.mxu0 0
    %3880 = vmatprep.subr.bf16.mxu0 0
    %3881 = vmatpush1.bf16.msra.mxu0 0
    %3882 = vmatprep.subr.bf16.mxu0 0
    %3883 = vmatpush1.bf16.msra.mxu0 0
    %3884 = vmatprep.mubr.bf16.mxu0 0
    %3885 = vmatmul.mubr.bf16.gmra.mrb[0].mxu0 %v2163
    %v3886 = vpop.f32.mrb[0].mxu0
    %v3887 = vadd.f32 %v2445, %v3886
    %v3888 = vpop.f32.mrb[0].mxu0
    %v3889 = vadd.f32 %v2449, %v3888
    %v3890 = vpop.f32.mrb[0].mxu0
    %v3891 = vpop.f32.mrb[0].mxu0
    %3892 = vdwg.mxu0
    %3893 = vmatprep.subr.bf16.mxu0 %v3081
    %3894 = vmatpush1.bf16.msra.mxu0 %v3080
    %3895 = vmatprep.subr.bf16.mxu0 %v3105
    %3896 = vmatpush1.bf16.msra.mxu0 %v3104
    %3897 = vmatprep.subr.bf16.mxu0 %v3129
    %3898 = vmatpush1.bf16.msra.mxu0 %v3128
    %3899 = vmatprep.subr.bf16.mxu0 %v3153
    %3900 = vmatpush1.bf16.msra.mxu0 %v3152
    %3901 = vmatprep.subr.bf16.mxu0 %v3177
    %3902 = vmatpush1.bf16.msra.mxu0 %v3176
    %3903 = vmatprep.subr.bf16.mxu0 %v3201
    %3904 = vmatpush1.bf16.msra.mxu0 %v3200
    %3905 = vmatprep.subr.bf16.mxu0 %v3225
    %3906 = vmatpush1.bf16.msra.mxu0 %v3224
    %3907 = vmatprep.subr.bf16.mxu0 %v3249
    %3908 = vmatpush1.bf16.msra.mxu0 %v3248
    %3909 = vmatprep.subr.bf16.mxu0 0
    %3910 = vmatpush1.bf16.msra.mxu0 0
    %3911 = vmatprep.subr.bf16.mxu0 0
    %3912 = vmatpush1.bf16.msra.mxu0 0
    %3913 = vmatprep.subr.bf16.mxu0 0
    %3914 = vmatpush1.bf16.msra.mxu0 0
    %3915 = vmatprep.subr.bf16.mxu0 0
    %3916 = vmatpush1.bf16.msra.mxu0 0
    %3917 = vmatprep.subr.bf16.mxu0 0
    %3918 = vmatpush1.bf16.msra.mxu0 0
    %3919 = vmatprep.subr.bf16.mxu0 0
    %3920 = vmatpush1.bf16.msra.mxu0 0
    %3921 = vmatprep.subr.bf16.mxu0 0
    %3922 = vmatpush1.bf16.msra.mxu0 0
    %3923 = vmatprep.subr.bf16.mxu0 0
    %3924 = vmatpush1.bf16.msra.mxu0 0
    %3925 = vmatprep.mubr.bf16.mxu0 0
    %3926 = vmatmul.mubr.bf16.gmra.mrb[0].mxu0 %v2163
    %v3927 = vpop.f32.mrb[0].mxu0
    %v3928 = vadd.f32 %v2453, %v3927
    %v3929 = vpop.f32.mrb[0].mxu0
    %v3930 = vadd.f32 %v2457, %v3929
    %v3931 = vpop.f32.mrb[0].mxu0
    %v3932 = vpop.f32.mrb[0].mxu0
    %3933 = vdwg.mxu0
    %3934 = vst [vmem:[#allocation11] sm:$0xff] %v3477
    %3935 = vst [vmem:[#allocation11 + $0x8] sm:$0xff] %v3479
    %3936 = vst [vmem:[#allocation11 + $0x10] sm:$0xff] %v3518
    %3937 = vst [vmem:[#allocation11 + $0x18] sm:$0xff] %v3520
    %3938 = vst [vmem:[#allocation11 + $0x20] sm:$0xff] %v3559
    %3939 = vst [vmem:[#allocation11 + $0x28] sm:$0xff] %v3561
    %3940 = vst [vmem:[#allocation11 + $0x30] sm:$0xff] %v3600
    %3941 = vst [vmem:[#allocation11 + $0x38] sm:$0xff] %v3602
    %3942 = vst [vmem:[#allocation11 + $0x40] sm:$0xff] %v3641
    %3943 = vst [vmem:[#allocation11 + $0x48] sm:$0xff] %v3643
    %3944 = vst [vmem:[#allocation11 + $0x50] sm:$0xff] %v3682
    %3945 = vst [vmem:[#allocation11 + $0x58] sm:$0xff] %v3684
    %3946 = vst [vmem:[#allocation11 + $0x60] sm:$0xff] %v3723
    %3947 = vst [vmem:[#allocation11 + $0x68] sm:$0xff] %v3725
    %3948 = vst [vmem:[#allocation11 + $0x70] sm:$0xff] %v3764
    %3949 = vst [vmem:[#allocation11 + $0x78] sm:$0xff] %v3766
    %3950 = vst [vmem:[#allocation11 + $0x80] sm:$0xff] %v3805
    %3951 = vst [vmem:[#allocation11 + $0x88] sm:$0xff] %v3807
    %3952 = vst [vmem:[#allocation11 + $0x90] sm:$0xff] %v3846
    %3953 = vst [vmem:[#allocation11 + $0x98] sm:$0xff] %v3848
    %3954 = vst [vmem:[#allocation11 + $0xa0] sm:$0xff] %v3887
    %3955 = vst [vmem:[#allocation11 + $0xa8] sm:$0xff] %v3889
    %3956 = vst [vmem:[#allocation11 + $0xb0] sm:$0xff] %v3928
    %3957 = vst [vmem:[#allocation11 + $0xb8] sm:$0xff] %v3930
    // Predicated region
    $region46: #{ode_wrapper_forward.1} parent=1 // pred_check
      _
    $region47: #{ode_wrapper_forward.1} parent=1 // pred_check_branch
      %3959 = sbr.rel (0) target = $region49
    $region48: #{ode_wrapper_forward.1} parent=1 // pred_region
      %s3961 = ssub.s32 3072, 3072
      %3962 = vsyncadd [#allocation5], %s3961
      %s3964 = sshll.u32 [#allocation11], 4
      %s3965 = int_to_ptr.vmem [resolvable:$true] %s3964
      %3967 = dma.vmem_to_hbm [thread:$0]  %s3965, 3072, %s7, [#allocation5]
    $region49: #{ode_wrapper_forward.1} parent=1 // pred_fallthru
      _
    // Predicated region
    $region50: #{ode_wrapper_forward.1} parent=1 // pred_check
      _
    $region51: #{ode_wrapper_forward.1} parent=1 // pred_check_branch
      %3969 = sbr.rel (0) target = $region53
    $region52: #{ode_wrapper_forward.1} parent=1 // pred_region
      %3970 = dma.done [#allocation5], 3072
    $region53: #{ode_wrapper_forward.1} parent=1 // pred_fallthru
      _
    %3971 = vsyncpa [#allocation4], 1
    %3972 = vsyncpa [#allocation7], 1
    %3973 = vsyncpa [#allocation10], 1
    %3974 = vsyncpa [#allocation5], 1

</llo_original>
